<compile_context>
chip_gen: v6e
topology: v6e:2x2x1
jax: 0.10.0
libtpu: 0.0.40
codegen_flags: <defaults>
</compile_context>

<pallas_src>
import functools

import jax
import jax.numpy as jnp
from jax import lax
from jax.experimental import pallas as pl
from jax.experimental.pallas import tpu as pltpu

# ---------------- config (small synthetic DINOv2-like backbone + HeadLayer) ----
B = 2            # batch
C = 3            # RGB channels (pixel_values)
IMG = 16         # image height/width
PATCH = 8        # patch size
GRID = IMG // PATCH
NP = GRID * GRID             # 4 patches
S_REAL = NP + 1              # CLS + patches = 5
S = 8                        # padded sequence length (sublane aligned, power of 2)
D = 128                      # hidden size (lane aligned)
NH = 2                       # attention heads
DH = D // NH                 # head dim
MLP = 4 * D                  # backbone MLP intermediate
EXT = 4                      # HeadLayer "extend"
LAYERS = 2                   # transformer blocks
EPS_BACKBONE = 1e-6          # DINOv2 layer_norm_eps
EPS_HEAD = 1e-5              # nn.LayerNorm default eps
CPP = C * PATCH * PATCH      # unfolded patch length = 192
NEG_INF = -1e9

assert S & (S - 1) == 0
LOG2_S = S.bit_length() - 1


# ---------------- fused Pallas kernel -------------------------------------------
def _ln(x, g, b, eps):
    """Row-wise LayerNorm; g/b are (1, D) values, statistics in f32."""
    mu = jnp.mean(x, axis=-1, keepdims=True)
    xc = x - mu
    var = jnp.mean(xc * xc, axis=-1, keepdims=True)
    return xc * lax.rsqrt(var + eps) * g + b


def _fused_forward_kernel(
    pix_ref, patch_w_ref, row_bias_ref,
    ln1_g_ref, ln1_b_ref, wqkv_ref, bqkv_ref, wo_ref, bo_ref, ls1_ref,
    ln2_g_ref, ln2_b_ref, w1_ref, b1_ref, w2_ref, b2_ref, ls2_ref,
    lnf_g_ref, lnf_b_ref,
    hw1_ref, hb1_ref, hw2_ref, hb2_ref, hg_ref, hb_ref,
    out_ref,
    *, n_batch):
  f32 = jnp.float32
  bf16 = jnp.bfloat16
  bs = n_batch * S
  scale = 1.0 / float(DH) ** 0.5

  # ---- hoisted in-register constants (computed once; JAX does not CSE broadcasts)
  lane = lax.broadcasted_iota(jnp.int32, (1, D), 1)
  head_masks = [((lane >= h * DH) & (lane < (h + 1) * DH)).astype(f32)
                for h in range(NH)]
  row_i = lax.broadcasted_iota(jnp.int32, (bs, bs), 0)
  col_i = lax.broadcasted_iota(jnp.int32, (bs, bs), 1)
  same_img = (row_i >> LOG2_S) == (col_i >> LOG2_S)   # block-diagonal: no cross-batch attention
  key_ok = (col_i & (S - 1)) < S_REAL                 # mask padded key positions
  attn_bias = jnp.where(same_img & key_ok, 0.0, NEG_INF).astype(f32)

  # ---- patch embedding; CLS token / pos-emb / patch bias pre-folded into row_bias
  x = jnp.dot(pix_ref[...], patch_w_ref[...],
              preferred_element_type=f32) + row_bias_ref[...]        # (B*S, D) f32

  for l in range(LAYERS):
    # ---------------- attention ----------------
    n1 = _ln(x, ln1_g_ref[l:l + 1, :], ln1_b_ref[l:l + 1, :], EPS_BACKBONE)
    qkv = jnp.dot(n1.astype(bf16), wqkv_ref[l],
                  preferred_element_type=f32) + bqkv_ref[l:l + 1, :]  # (B*S, 3D)
    q = qkv[:, 0:D] * scale
    k = qkv[:, D:2 * D]
    v = qkv[:, 2 * D:3 * D]

    ctx = None
    for hm in head_masks:
      # (q*hm) @ k^T contracts only head-h lanes; stays 128-lane dense, no slicing/transposes.
      s = lax.dot_general(q * hm, k, (((1,), (1,)), ((), ())),
                          preferred_element_type=f32)                # (B*S, B*S)
      s = s + attn_bias
      s = s - jnp.max(s, axis=-1, keepdims=True)
      p = jnp.exp(s)
      p = p * pl.reciprocal(jnp.sum(p, axis=-1, keepdims=True), approx=True)
      c = jnp.dot(p, v * hm, preferred_element_type=f32)             # head h lanes only
      ctx = c if ctx is None else ctx + c

    o = jnp.dot(ctx.astype(bf16), wo_ref[l],
                preferred_element_type=f32) + bo_ref[l:l + 1, :]
    x = x + ls1_ref[l:l + 1, :] * o                                  # layer-scale residual

    # ---------------- MLP ----------------
    n2 = _ln(x, ln2_g_ref[l:l + 1, :], ln2_b_ref[l:l + 1, :], EPS_BACKBONE)
    m = jnp.dot(n2.astype(bf16), w1_ref[l],
                preferred_element_type=f32) + b1_ref[l:l + 1, :]
    # TODO(synk): HF DINOv2 uses exact (erf) GELU; tanh approximation kept here for Mosaic-safe lowering.
    m = jax.nn.gelu(m, approximate=True)
    m = jnp.dot(m.astype(bf16), w2_ref[l],
                preferred_element_type=f32) + b2_ref[l:l + 1, :]
    x = x + ls2_ref[l:l + 1, :] * m                                  # layer-scale residual

  # ---- final LayerNorm + HeadLayer (linear -> ReLU -> dropout(eval)=id -> linear -> LN)
  # Applied to all rows; caller extracts the CLS rows (pooler_output). Extra rows are
  # negligible compute and keep M=B*S for better MXU feed + lane-dense output.
  hf = _ln(x, lnf_g_ref[...], lnf_b_ref[...], EPS_BACKBONE)
  y = jnp.dot(hf.astype(bf16), hw1_ref[...],
              preferred_element_type=f32) + hb1_ref[...]
  y = jnp.maximum(y, 0.0)
  y = jnp.dot(y.astype(bf16), hw2_ref[...],
              preferred_element_type=f32) + hb2_ref[...]
  out_ref[...] = _ln(y, hg_ref[...], hb_ref[...], EPS_HEAD)


# ---------------- parameters (deterministic synthetic init, stacked per layer) --
def init_params(key):
  keys = iter(jax.random.split(key, 40))
  bf16 = jnp.bfloat16

  def w(shape, scale=0.02, dtype=jnp.float32):
    return (scale * jax.random.normal(next(keys), shape, jnp.float32)).astype(dtype)

  zeros = lambda s: jnp.zeros(s, jnp.float32)
  ones = lambda s: jnp.ones(s, jnp.float32)

  return {
      "patch_w": w((CPP, D)),               # f32 (one-shot, K=192)
      "patch_b": zeros((D,)),
      "cls_token": w((1, D)),
      "pos_emb": w((S_REAL, D)),
      # per-layer weights stacked on a leading LAYERS axis (big matmul weights in bf16)
      "ln1_g": ones((LAYERS, D)), "ln1_b": zeros((LAYERS, D)),
      "wqkv": w((LAYERS, D, 3 * D), dtype=bf16), "bqkv": zeros((LAYERS, 3 * D)),
      "wo": w((LAYERS, D, D), dtype=bf16), "bo": zeros((LAYERS, D)),
      "ls1": 0.1 * ones((LAYERS, D)),
      "ln2_g": ones((LAYERS, D)), "ln2_b": zeros((LAYERS, D)),
      "w1": w((LAYERS, D, MLP), dtype=bf16), "b1": zeros((LAYERS, MLP)),
      "w2": w((LAYERS, MLP, D), dtype=bf16), "b2": zeros((LAYERS, D)),
      "ls2": 0.1 * ones((LAYERS, D)),
      "lnf_g": ones((1, D)), "lnf_b": zeros((1, D)),
      # HeadLayer
      "hw1": w((D, EXT * D), dtype=bf16), "hb1": zeros((1, EXT * D)),
      "hw2": w((EXT * D, D), dtype=bf16), "hb2": zeros((1, D)),
      "hg": ones((1, D)), "hb": zeros((1, D)),
  }


# ---------------- forward -------------------------------------------------------
def dinov2_forward(x, params):
  Bx = x.shape[0]
  bs = Bx * S

  # Host-side data plumbing only (no compute): unfold patches into a padded slab
  # (zero rows at the CLS and padding positions — they pick up their values from row_bias).
  p = x.reshape(Bx, C, GRID, PATCH, GRID, PATCH)
  p = p.transpose(0, 2, 4, 1, 3, 5).reshape(Bx, NP, CPP)
  pix = jnp.concatenate(
      [jnp.zeros((Bx, 1, CPP), jnp.float32), p,
       jnp.zeros((Bx, S - S_REAL, CPP), jnp.float32)], axis=1).reshape(bs, CPP)

  # Fold CLS token + position embeddings + patch-embed bias into one per-row additive bias.
  cls_row = params["cls_token"] + params["pos_emb"][0:1]
  patch_rows = params["pos_emb"][1:] + params["patch_b"][None, :]
  pad_rows = jnp.zeros((S - S_REAL, D), jnp.float32)
  row_bias = jnp.concatenate([cls_row, patch_rows, pad_rows], axis=0)     # (S, D)
  row_bias = jnp.broadcast_to(row_bias[None], (Bx, S, D)).reshape(bs, D)

  args = (
      pix, params["patch_w"], row_bias,
      params["ln1_g"], params["ln1_b"], params["wqkv"], params["bqkv"],
      params["wo"], params["bo"], params["ls1"],
      params["ln2_g"], params["ln2_b"], params["w1"], params["b1"],
      params["w2"], params["b2"], params["ls2"],
      params["lnf_g"], params["lnf_b"],
      params["hw1"], params["hb1"], params["hw2"], params["hb2"],
      params["hg"], params["hb"],
  )
  # Whole-array VMEM blocks; total resident weights+activations << default VMEM limit.
  in_specs = [pl.BlockSpec(a.shape, lambda i, nd=a.ndim: (0,) * nd) for a in args]

  out_full = pl.pallas_call(
      functools.partial(_fused_forward_kernel, n_batch=Bx),
      grid=(1,),
      out_shape=jax.ShapeDtypeStruct((bs, D), jnp.float32),
      in_specs=in_specs,
      out_specs=pl.BlockSpec((bs, D), lambda i: (0, 0)),
      compiler_params=pltpu.CompilerParams(dimension_semantics=("arbitrary",)),
  )(*args)

  # pooler_output = CLS token (row b*S) after the final LayerNorm, then HeadLayer (done in-kernel).
  return out_full.reshape(Bx, S, D)[:, 0, :]


# ---------------- main ----------------------------------------------------------
if __name__ == "__main__":
  key = jax.random.PRNGKey(0)
  pkey, xkey = jax.random.split(key)
  params = init_params(pkey)
  x = jax.random.normal(xkey, (B, C, IMG, IMG), dtype=jnp.float32)  # NCHW pixel_values

  fwd = jax.jit(dinov2_forward)
  out = jax.block_until_ready(fwd(x, params))
  assert out.shape == (B, D), out.shape
  assert bool(jnp.all(jnp.isfinite(out)))
  print("KERNEL_OK")
</pallas_src>

<mosaic_0001>
module attributes {stable_mosaic.version = 11 : i64} {
  func.func @_fused_forward_kernel(%arg0: i32, %arg1: memref<16x192xf32, #tpu.memory_space<vmem>>, %arg2: memref<192x128xf32, #tpu.memory_space<vmem>>, %arg3: memref<16x128xf32, #tpu.memory_space<vmem>>, %arg4: memref<2x128xf32, #tpu.memory_space<vmem>>, %arg5: memref<2x128xf32, #tpu.memory_space<vmem>>, %arg6: memref<2x128x384xbf16, #tpu.memory_space<vmem>>, %arg7: memref<2x384xf32, #tpu.memory_space<vmem>>, %arg8: memref<2x128x128xbf16, #tpu.memory_space<vmem>>, %arg9: memref<2x128xf32, #tpu.memory_space<vmem>>, %arg10: memref<2x128xf32, #tpu.memory_space<vmem>>, %arg11: memref<2x128xf32, #tpu.memory_space<vmem>>, %arg12: memref<2x128xf32, #tpu.memory_space<vmem>>, %arg13: memref<2x128x512xbf16, #tpu.memory_space<vmem>>, %arg14: memref<2x512xf32, #tpu.memory_space<vmem>>, %arg15: memref<2x512x128xbf16, #tpu.memory_space<vmem>>, %arg16: memref<2x128xf32, #tpu.memory_space<vmem>>, %arg17: memref<2x128xf32, #tpu.memory_space<vmem>>, %arg18: memref<1x128xf32, #tpu.memory_space<vmem>>, %arg19: memref<1x128xf32, #tpu.memory_space<vmem>>, %arg20: memref<128x512xbf16, #tpu.memory_space<vmem>>, %arg21: memref<1x512xf32, #tpu.memory_space<vmem>>, %arg22: memref<512x128xbf16, #tpu.memory_space<vmem>>, %arg23: memref<1x128xf32, #tpu.memory_space<vmem>>, %arg24: memref<1x128xf32, #tpu.memory_space<vmem>>, %arg25: memref<1x128xf32, #tpu.memory_space<vmem>>, %arg26: memref<16x128xf32, #tpu.memory_space<vmem>>) attributes {dimension_semantics = [#tpu.dimension_semantics<arbitrary>], iteration_bounds = array<i64: 1>, scalar_prefetch = 0 : i64, scratch_operands = 0 : i64, tpu.core_type = #tpu.core_type<tc>, window_params = [{pipeline_mode = #tpu.pipeline_mode<synchronous>, transform_indices = @transform_0, window_bounds = array<i64: 16, 192>}, {pipeline_mode = #tpu.pipeline_mode<synchronous>, transform_indices = @transform_1, window_bounds = array<i64: 192, 128>}, {pipeline_mode = #tpu.pipeline_mode<synchronous>, transform_indices = @transform_2, window_bounds = array<i64: 16, 128>}, {pipeline_mode = #tpu.pipeline_mode<synchronous>, transform_indices = @transform_3, window_bounds = array<i64: 2, 128>}, {pipeline_mode = #tpu.pipeline_mode<synchronous>, transform_indices = @transform_4, window_bounds = array<i64: 2, 128>}, {pipeline_mode = #tpu.pipeline_mode<synchronous>, transform_indices = @transform_5, window_bounds = array<i64: 2, 128, 384>}, {pipeline_mode = #tpu.pipeline_mode<synchronous>, transform_indices = @transform_6, window_bounds = array<i64: 2, 384>}, {pipeline_mode = #tpu.pipeline_mode<synchronous>, transform_indices = @transform_7, window_bounds = array<i64: 2, 128, 128>}, {pipeline_mode = #tpu.pipeline_mode<synchronous>, transform_indices = @transform_8, window_bounds = array<i64: 2, 128>}, {pipeline_mode = #tpu.pipeline_mode<synchronous>, transform_indices = @transform_9, window_bounds = array<i64: 2, 128>}, {pipeline_mode = #tpu.pipeline_mode<synchronous>, transform_indices = @transform_10, window_bounds = array<i64: 2, 128>}, {pipeline_mode = #tpu.pipeline_mode<synchronous>, transform_indices = @transform_11, window_bounds = array<i64: 2, 128>}, {pipeline_mode = #tpu.pipeline_mode<synchronous>, transform_indices = @transform_12, window_bounds = array<i64: 2, 128, 512>}, {pipeline_mode = #tpu.pipeline_mode<synchronous>, transform_indices = @transform_13, window_bounds = array<i64: 2, 512>}, {pipeline_mode = #tpu.pipeline_mode<synchronous>, transform_indices = @transform_14, window_bounds = array<i64: 2, 512, 128>}, {pipeline_mode = #tpu.pipeline_mode<synchronous>, transform_indices = @transform_15, window_bounds = array<i64: 2, 128>}, {pipeline_mode = #tpu.pipeline_mode<synchronous>, transform_indices = @transform_16, window_bounds = array<i64: 2, 128>}, {pipeline_mode = #tpu.pipeline_mode<synchronous>, transform_indices = @transform_17, window_bounds = array<i64: 1, 128>}, {pipeline_mode = #tpu.pipeline_mode<synchronous>, transform_indices = @transform_18, window_bounds = array<i64: 1, 128>}, {pipeline_mode = #tpu.pipeline_mode<synchronous>, transform_indices = @transform_19, window_bounds = array<i64: 128, 512>}, {pipeline_mode = #tpu.pipeline_mode<synchronous>, transform_indices = @transform_20, window_bounds = array<i64: 1, 512>}, {pipeline_mode = #tpu.pipeline_mode<synchronous>, transform_indices = @transform_21, window_bounds = array<i64: 512, 128>}, {pipeline_mode = #tpu.pipeline_mode<synchronous>, transform_indices = @transform_22, window_bounds = array<i64: 1, 128>}, {pipeline_mode = #tpu.pipeline_mode<synchronous>, transform_indices = @transform_23, window_bounds = array<i64: 1, 128>}, {pipeline_mode = #tpu.pipeline_mode<synchronous>, transform_indices = @transform_24, window_bounds = array<i64: 1, 128>}, {pipeline_mode = #tpu.pipeline_mode<synchronous>, transform_indices = @transform_25, window_bounds = array<i64: 16, 128>}]} {
    %0 = tpu.iota {dimensions = array<i32: 1>} : vector<1x128xi32>
    %c0_i32 = arith.constant 0 : i32
    %1 = vector.broadcast %c0_i32 : i32 to vector<1x128xi32>
    %2 = arith.cmpi sge, %0, %1 : vector<1x128xi32>
    %c64_i32 = arith.constant 64 : i32
    %3 = vector.broadcast %c64_i32 : i32 to vector<1x128xi32>
    %4 = arith.cmpi slt, %0, %3 : vector<1x128xi32>
    %5 = arith.andi %2, %4 : vector<1x128xi1>
    %6 = arith.extui %5 : vector<1x128xi1> to vector<1x128xi32>
    %7 = arith.sitofp %6 : vector<1x128xi32> to vector<1x128xf32>
    %c64_i32_0 = arith.constant 64 : i32
    %8 = vector.broadcast %c64_i32_0 : i32 to vector<1x128xi32>
    %9 = arith.cmpi sge, %0, %8 : vector<1x128xi32>
    %c128_i32 = arith.constant 128 : i32
    %10 = vector.broadcast %c128_i32 : i32 to vector<1x128xi32>
    %11 = arith.cmpi slt, %0, %10 : vector<1x128xi32>
    %12 = arith.andi %9, %11 : vector<1x128xi1>
    %13 = arith.extui %12 : vector<1x128xi1> to vector<1x128xi32>
    %14 = arith.sitofp %13 : vector<1x128xi32> to vector<1x128xf32>
    %15 = tpu.iota {dimensions = array<i32: 0>} : vector<16x16xi32>
    %16 = tpu.iota {dimensions = array<i32: 1>} : vector<16x16xi32>
    %c3_i32 = arith.constant 3 : i32
    %17 = vector.broadcast %c3_i32 : i32 to vector<16x16xi32>
    %18 = arith.shrsi %15, %17 : vector<16x16xi32>
    %c3_i32_1 = arith.constant 3 : i32
    %19 = vector.broadcast %c3_i32_1 : i32 to vector<16x16xi32>
    %20 = arith.shrsi %16, %19 : vector<16x16xi32>
    %21 = arith.cmpi eq, %18, %20 : vector<16x16xi32>
    %c7_i32 = arith.constant 7 : i32
    %22 = vector.broadcast %c7_i32 : i32 to vector<16x16xi32>
    %23 = arith.andi %16, %22 : vector<16x16xi32>
    %c5_i32 = arith.constant 5 : i32
    %24 = vector.broadcast %c5_i32 : i32 to vector<16x16xi32>
    %25 = arith.cmpi slt, %23, %24 : vector<16x16xi32>
    %26 = arith.andi %21, %25 : vector<16x16xi1>
    %cst = arith.constant 0.000000e+00 : f32
    %cst_2 = arith.constant -1.000000e+09 : f32
    %27 = vector.broadcast %cst : f32 to vector<16x16xf32>
    %28 = vector.broadcast %cst_2 : f32 to vector<16x16xf32>
    %29 = arith.select %26, %27, %28 : vector<16x16xi1>, vector<16x16xf32>
    %c0 = arith.constant 0 : index
    %c0_3 = arith.constant 0 : index
    %30 = vector.load %arg1[%c0, %c0_3] : memref<16x192xf32, #tpu.memory_space<vmem>>, vector<16x192xf32>
    %c0_4 = arith.constant 0 : index
    %c0_5 = arith.constant 0 : index
    %31 = vector.load %arg2[%c0_4, %c0_5] : memref<192x128xf32, #tpu.memory_space<vmem>>, vector<192x128xf32>
    %cst_6 = arith.constant dense<0.000000e+00> : vector<16x128xf32>
    %32 = tpu.matmul %30, %31, %cst_6 {dimension_numbers = #tpu.dot_dimension_numbers<[1], [0], [0], [1], [0, 0, 1, 1], [], []>} : vector<16x192xf32>, vector<192x128xf32>, vector<16x128xf32> -> vector<16x128xf32>
    %c0_7 = arith.constant 0 : index
    %c0_8 = arith.constant 0 : index
    %33 = vector.load %arg3[%c0_7, %c0_8] : memref<16x128xf32, #tpu.memory_space<vmem>>, vector<16x128xf32>
    %34 = arith.addf %32, %33 : vector<16x128xf32>
    %c0_9 = arith.constant 0 : index
    %c0_10 = arith.constant 0 : index
    %35 = vector.load %arg4[%c0_9, %c0_10] : memref<2x128xf32, #tpu.memory_space<vmem>>, vector<1x128xf32>
    %c0_11 = arith.constant 0 : index
    %c0_12 = arith.constant 0 : index
    %36 = vector.load %arg5[%c0_11, %c0_12] : memref<2x128xf32, #tpu.memory_space<vmem>>, vector<1x128xf32>
    %cst_13 = arith.constant dense<0.000000e+00> : vector<16xf32>
    %37 = vector.multi_reduction <add>, %34, %cst_13 [1] : vector<16x128xf32> to vector<16xf32>
    %38 = vector.shape_cast %37 : vector<16xf32> to vector<16x1xf32>
    %cst_14 = arith.constant 1.280000e+02 : f32
    %39 = vector.broadcast %cst_14 : f32 to vector<16x1xf32>
    %40 = arith.divf %38, %39 : vector<16x1xf32>
    %41 = vector.broadcast %40 : vector<16x1xf32> to vector<16x128xf32>
    %42 = arith.subf %34, %41 : vector<16x128xf32>
    %43 = arith.mulf %42, %42 : vector<16x128xf32>
    %cst_15 = arith.constant dense<0.000000e+00> : vector<16xf32>
    %44 = vector.multi_reduction <add>, %43, %cst_15 [1] : vector<16x128xf32> to vector<16xf32>
    %45 = vector.shape_cast %44 : vector<16xf32> to vector<16x1xf32>
    %cst_16 = arith.constant 1.280000e+02 : f32
    %46 = vector.broadcast %cst_16 : f32 to vector<16x1xf32>
    %47 = arith.divf %45, %46 : vector<16x1xf32>
    %cst_17 = arith.constant 9.99999997E-7 : f32
    %48 = vector.broadcast %cst_17 : f32 to vector<16x1xf32>
    %49 = arith.addf %47, %48 : vector<16x1xf32>
    %50 = math.rsqrt %49 : vector<16x1xf32>
    %51 = vector.broadcast %50 : vector<16x1xf32> to vector<16x128xf32>
    %52 = arith.mulf %42, %51 : vector<16x128xf32>
    %53 = vector.broadcast %35 : vector<1x128xf32> to vector<16x128xf32>
    %54 = arith.mulf %52, %53 : vector<16x128xf32>
    %55 = vector.broadcast %36 : vector<1x128xf32> to vector<16x128xf32>
    %56 = arith.addf %54, %55 : vector<16x128xf32>
    %57 = arith.truncf %56 : vector<16x128xf32> to vector<16x128xbf16>
    %c0_18 = arith.constant 0 : index
    %c0_19 = arith.constant 0 : index
    %c0_20 = arith.constant 0 : index
    %58 = vector.load %arg6[%c0_18, %c0_19, %c0_20] : memref<2x128x384xbf16, #tpu.memory_space<vmem>>, vector<1x128x384xbf16>
    %59 = vector.shape_cast %58 : vector<1x128x384xbf16> to vector<128x384xbf16>
    %cst_21 = arith.constant dense<0.000000e+00> : vector<16x384xf32>
    %60 = tpu.matmul %57, %59, %cst_21 {dimension_numbers = #tpu.dot_dimension_numbers<[1], [0], [0], [1], [0, 0, 1, 1], [], []>} : vector<16x128xbf16>, vector<128x384xbf16>, vector<16x384xf32> -> vector<16x384xf32>
    %c0_22 = arith.constant 0 : index
    %c0_23 = arith.constant 0 : index
    %61 = vector.load %arg7[%c0_22, %c0_23] : memref<2x384xf32, #tpu.memory_space<vmem>>, vector<1x384xf32>
    %62 = vector.broadcast %61 : vector<1x384xf32> to vector<16x384xf32>
    %63 = arith.addf %60, %62 : vector<16x384xf32>
    %64 = vector.extract_strided_slice %63 {offsets = [0, 0], sizes = [16, 128], strides = [1, 1]} : vector<16x384xf32> to vector<16x128xf32>
    %cst_24 = arith.constant 1.250000e-01 : f32
    %65 = vector.broadcast %cst_24 : f32 to vector<16x128xf32>
    %66 = arith.mulf %64, %65 : vector<16x128xf32>
    %67 = vector.extract_strided_slice %63 {offsets = [0, 128], sizes = [16, 128], strides = [1, 1]} : vector<16x384xf32> to vector<16x128xf32>
    %68 = vector.extract_strided_slice %63 {offsets = [0, 256], sizes = [16, 128], strides = [1, 1]} : vector<16x384xf32> to vector<16x128xf32>
    %69 = vector.broadcast %7 : vector<1x128xf32> to vector<16x128xf32>
    %70 = arith.mulf %66, %69 : vector<16x128xf32>
    %cst_25 = arith.constant dense<0.000000e+00> : vector<16x16xf32>
    %71 = tpu.matmul %70, %67, %cst_25 {dimension_numbers = #tpu.dot_dimension_numbers<[1], [1], [0], [0], [0, 0, 1, 0], [], []>} : vector<16x128xf32>, vector<16x128xf32>, vector<16x16xf32> -> vector<16x16xf32>
    %72 = arith.addf %71, %29 : vector<16x16xf32>
    %cst_26 = arith.constant dense<0xFF800000> : vector<16xf32>
    %73 = vector.multi_reduction <maximumf>, %72, %cst_26 [1] : vector<16x16xf32> to vector<16xf32>
    %74 = vector.shape_cast %73 : vector<16xf32> to vector<16x1xf32>
    %75 = vector.broadcast %74 : vector<16x1xf32> to vector<16x16xf32>
    %76 = arith.subf %72, %75 : vector<16x16xf32>
    %77 = math.exp %76 : vector<16x16xf32>
    %cst_27 = arith.constant dense<0.000000e+00> : vector<16xf32>
    %78 = vector.multi_reduction <add>, %77, %cst_27 [1] : vector<16x16xf32> to vector<16xf32>
    %79 = vector.shape_cast %78 : vector<16xf32> to vector<16x1xf32>
    %80 = tpu.reciprocal %79 {approx = true} : vector<16x1xf32> -> vector<16x1xf32>
    %81 = vector.broadcast %80 : vector<16x1xf32> to vector<16x16xf32>
    %82 = arith.mulf %77, %81 : vector<16x16xf32>
    %83 = vector.broadcast %7 : vector<1x128xf32> to vector<16x128xf32>
    %84 = arith.mulf %68, %83 : vector<16x128xf32>
    %cst_28 = arith.constant dense<0.000000e+00> : vector<16x128xf32>
    %85 = tpu.matmul %82, %84, %cst_28 {dimension_numbers = #tpu.dot_dimension_numbers<[1], [0], [0], [1], [0, 0, 1, 1], [], []>} : vector<16x16xf32>, vector<16x128xf32>, vector<16x128xf32> -> vector<16x128xf32>
    %86 = vector.broadcast %14 : vector<1x128xf32> to vector<16x128xf32>
    %87 = arith.mulf %66, %86 : vector<16x128xf32>
    %cst_29 = arith.constant dense<0.000000e+00> : vector<16x16xf32>
    %88 = tpu.matmul %87, %67, %cst_29 {dimension_numbers = #tpu.dot_dimension_numbers<[1], [1], [0], [0], [0, 0, 1, 0], [], []>} : vector<16x128xf32>, vector<16x128xf32>, vector<16x16xf32> -> vector<16x16xf32>
    %89 = arith.addf %88, %29 : vector<16x16xf32>
    %cst_30 = arith.constant dense<0xFF800000> : vector<16xf32>
    %90 = vector.multi_reduction <maximumf>, %89, %cst_30 [1] : vector<16x16xf32> to vector<16xf32>
    %91 = vector.shape_cast %90 : vector<16xf32> to vector<16x1xf32>
    %92 = vector.broadcast %91 : vector<16x1xf32> to vector<16x16xf32>
    %93 = arith.subf %89, %92 : vector<16x16xf32>
    %94 = math.exp %93 : vector<16x16xf32>
    %cst_31 = arith.constant dense<0.000000e+00> : vector<16xf32>
    %95 = vector.multi_reduction <add>, %94, %cst_31 [1] : vector<16x16xf32> to vector<16xf32>
    %96 = vector.shape_cast %95 : vector<16xf32> to vector<16x1xf32>
    %97 = tpu.reciprocal %96 {approx = true} : vector<16x1xf32> -> vector<16x1xf32>
    %98 = vector.broadcast %97 : vector<16x1xf32> to vector<16x16xf32>
    %99 = arith.mulf %94, %98 : vector<16x16xf32>
    %100 = vector.broadcast %14 : vector<1x128xf32> to vector<16x128xf32>
    %101 = arith.mulf %68, %100 : vector<16x128xf32>
    %cst_32 = arith.constant dense<0.000000e+00> : vector<16x128xf32>
    %102 = tpu.matmul %99, %101, %cst_32 {dimension_numbers = #tpu.dot_dimension_numbers<[1], [0], [0], [1], [0, 0, 1, 1], [], []>} : vector<16x16xf32>, vector<16x128xf32>, vector<16x128xf32> -> vector<16x128xf32>
    %103 = arith.addf %85, %102 : vector<16x128xf32>
    %104 = arith.truncf %103 : vector<16x128xf32> to vector<16x128xbf16>
    %c0_33 = arith.constant 0 : index
    %c0_34 = arith.constant 0 : index
    %c0_35 = arith.constant 0 : index
    %105 = vector.load %arg8[%c0_33, %c0_34, %c0_35] : memref<2x128x128xbf16, #tpu.memory_space<vmem>>, vector<1x128x128xbf16>
    %106 = vector.shape_cast %105 : vector<1x128x128xbf16> to vector<128x128xbf16>
    %cst_36 = arith.constant dense<0.000000e+00> : vector<16x128xf32>
    %107 = tpu.matmul %104, %106, %cst_36 {dimension_numbers = #tpu.dot_dimension_numbers<[1], [0], [0], [1], [0, 0, 1, 1], [], []>} : vector<16x128xbf16>, vector<128x128xbf16>, vector<16x128xf32> -> vector<16x128xf32>
    %c0_37 = arith.constant 0 : index
    %c0_38 = arith.constant 0 : index
    %108 = vector.load %arg9[%c0_37, %c0_38] : memref<2x128xf32, #tpu.memory_space<vmem>>, vector<1x128xf32>
    %109 = vector.broadcast %108 : vector<1x128xf32> to vector<16x128xf32>
    %110 = arith.addf %107, %109 : vector<16x128xf32>
    %c0_39 = arith.constant 0 : index
    %c0_40 = arith.constant 0 : index
    %111 = vector.load %arg10[%c0_39, %c0_40] : memref<2x128xf32, #tpu.memory_space<vmem>>, vector<1x128xf32>
    %112 = vector.broadcast %111 : vector<1x128xf32> to vector<16x128xf32>
    %113 = arith.mulf %112, %110 : vector<16x128xf32>
    %114 = arith.addf %34, %113 : vector<16x128xf32>
    %c0_41 = arith.constant 0 : index
    %c0_42 = arith.constant 0 : index
    %115 = vector.load %arg11[%c0_41, %c0_42] : memref<2x128xf32, #tpu.memory_space<vmem>>, vector<1x128xf32>
    %c0_43 = arith.constant 0 : index
    %c0_44 = arith.constant 0 : index
    %116 = vector.load %arg12[%c0_43, %c0_44] : memref<2x128xf32, #tpu.memory_space<vmem>>, vector<1x128xf32>
    %cst_45 = arith.constant dense<0.000000e+00> : vector<16xf32>
    %117 = vector.multi_reduction <add>, %114, %cst_45 [1] : vector<16x128xf32> to vector<16xf32>
    %118 = vector.shape_cast %117 : vector<16xf32> to vector<16x1xf32>
    %cst_46 = arith.constant 1.280000e+02 : f32
    %119 = vector.broadcast %cst_46 : f32 to vector<16x1xf32>
    %120 = arith.divf %118, %119 : vector<16x1xf32>
    %121 = vector.broadcast %120 : vector<16x1xf32> to vector<16x128xf32>
    %122 = arith.subf %114, %121 : vector<16x128xf32>
    %123 = arith.mulf %122, %122 : vector<16x128xf32>
    %cst_47 = arith.constant dense<0.000000e+00> : vector<16xf32>
    %124 = vector.multi_reduction <add>, %123, %cst_47 [1] : vector<16x128xf32> to vector<16xf32>
    %125 = vector.shape_cast %124 : vector<16xf32> to vector<16x1xf32>
    %cst_48 = arith.constant 1.280000e+02 : f32
    %126 = vector.broadcast %cst_48 : f32 to vector<16x1xf32>
    %127 = arith.divf %125, %126 : vector<16x1xf32>
    %cst_49 = arith.constant 9.99999997E-7 : f32
    %128 = vector.broadcast %cst_49 : f32 to vector<16x1xf32>
    %129 = arith.addf %127, %128 : vector<16x1xf32>
    %130 = math.rsqrt %129 : vector<16x1xf32>
    %131 = vector.broadcast %130 : vector<16x1xf32> to vector<16x128xf32>
    %132 = arith.mulf %122, %131 : vector<16x128xf32>
    %133 = vector.broadcast %115 : vector<1x128xf32> to vector<16x128xf32>
    %134 = arith.mulf %132, %133 : vector<16x128xf32>
    %135 = vector.broadcast %116 : vector<1x128xf32> to vector<16x128xf32>
    %136 = arith.addf %134, %135 : vector<16x128xf32>
    %137 = arith.truncf %136 : vector<16x128xf32> to vector<16x128xbf16>
    %c0_50 = arith.constant 0 : index
    %c0_51 = arith.constant 0 : index
    %c0_52 = arith.constant 0 : index
    %138 = vector.load %arg13[%c0_50, %c0_51, %c0_52] : memref<2x128x512xbf16, #tpu.memory_space<vmem>>, vector<1x128x512xbf16>
    %139 = vector.shape_cast %138 : vector<1x128x512xbf16> to vector<128x512xbf16>
    %cst_53 = arith.constant dense<0.000000e+00> : vector<16x512xf32>
    %140 = tpu.matmul %137, %139, %cst_53 {dimension_numbers = #tpu.dot_dimension_numbers<[1], [0], [0], [1], [0, 0, 1, 1], [], []>} : vector<16x128xbf16>, vector<128x512xbf16>, vector<16x512xf32> -> vector<16x512xf32>
    %c0_54 = arith.constant 0 : index
    %c0_55 = arith.constant 0 : index
    %141 = vector.load %arg14[%c0_54, %c0_55] : memref<2x512xf32, #tpu.memory_space<vmem>>, vector<1x512xf32>
    %142 = vector.broadcast %141 : vector<1x512xf32> to vector<16x512xf32>
    %143 = arith.addf %140, %142 : vector<16x512xf32>
    %144 = arith.mulf %143, %143 : vector<16x512xf32>
    %145 = arith.mulf %143, %144 : vector<16x512xf32>
    %cst_56 = arith.constant 4.471500e-02 : f32
    %146 = vector.broadcast %cst_56 : f32 to vector<16x512xf32>
    %147 = arith.mulf %146, %145 : vector<16x512xf32>
    %148 = arith.addf %143, %147 : vector<16x512xf32>
    %cst_57 = arith.constant 0.797884583 : f32
    %149 = vector.broadcast %cst_57 : f32 to vector<16x512xf32>
    %150 = arith.mulf %149, %148 : vector<16x512xf32>
    %151 = math.tanh %150 : vector<16x512xf32>
    %cst_58 = arith.constant 1.000000e+00 : f32
    %152 = vector.broadcast %cst_58 : f32 to vector<16x512xf32>
    %153 = arith.addf %152, %151 : vector<16x512xf32>
    %cst_59 = arith.constant 5.000000e-01 : f32
    %154 = vector.broadcast %cst_59 : f32 to vector<16x512xf32>
    %155 = arith.mulf %154, %153 : vector<16x512xf32>
    %156 = arith.mulf %143, %155 : vector<16x512xf32>
    %157 = arith.truncf %156 : vector<16x512xf32> to vector<16x512xbf16>
    %c0_60 = arith.constant 0 : index
    %c0_61 = arith.constant 0 : index
    %c0_62 = arith.constant 0 : index
    %158 = vector.load %arg15[%c0_60, %c0_61, %c0_62] : memref<2x512x128xbf16, #tpu.memory_space<vmem>>, vector<1x512x128xbf16>
    %159 = vector.shape_cast %158 : vector<1x512x128xbf16> to vector<512x128xbf16>
    %cst_63 = arith.constant dense<0.000000e+00> : vector<16x128xf32>
    %160 = tpu.matmul %157, %159, %cst_63 {dimension_numbers = #tpu.dot_dimension_numbers<[1], [0], [0], [1], [0, 0, 1, 1], [], []>} : vector<16x512xbf16>, vector<512x128xbf16>, vector<16x128xf32> -> vector<16x128xf32>
    %c0_64 = arith.constant 0 : index
    %c0_65 = arith.constant 0 : index
    %161 = vector.load %arg16[%c0_64, %c0_65] : memref<2x128xf32, #tpu.memory_space<vmem>>, vector<1x128xf32>
    %162 = vector.broadcast %161 : vector<1x128xf32> to vector<16x128xf32>
    %163 = arith.addf %160, %162 : vector<16x128xf32>
    %c0_66 = arith.constant 0 : index
    %c0_67 = arith.constant 0 : index
    %164 = vector.load %arg17[%c0_66, %c0_67] : memref<2x128xf32, #tpu.memory_space<vmem>>, vector<1x128xf32>
    %165 = vector.broadcast %164 : vector<1x128xf32> to vector<16x128xf32>
    %166 = arith.mulf %165, %163 : vector<16x128xf32>
    %167 = arith.addf %114, %166 : vector<16x128xf32>
    %c1 = arith.constant 1 : index
    %c0_68 = arith.constant 0 : index
    %168 = vector.load %arg4[%c1, %c0_68] : memref<2x128xf32, #tpu.memory_space<vmem>>, vector<1x128xf32>
    %c1_69 = arith.constant 1 : index
    %c0_70 = arith.constant 0 : index
    %169 = vector.load %arg5[%c1_69, %c0_70] : memref<2x128xf32, #tpu.memory_space<vmem>>, vector<1x128xf32>
    %cst_71 = arith.constant dense<0.000000e+00> : vector<16xf32>
    %170 = vector.multi_reduction <add>, %167, %cst_71 [1] : vector<16x128xf32> to vector<16xf32>
    %171 = vector.shape_cast %170 : vector<16xf32> to vector<16x1xf32>
    %cst_72 = arith.constant 1.280000e+02 : f32
    %172 = vector.broadcast %cst_72 : f32 to vector<16x1xf32>
    %173 = arith.divf %171, %172 : vector<16x1xf32>
    %174 = vector.broadcast %173 : vector<16x1xf32> to vector<16x128xf32>
    %175 = arith.subf %167, %174 : vector<16x128xf32>
    %176 = arith.mulf %175, %175 : vector<16x128xf32>
    %cst_73 = arith.constant dense<0.000000e+00> : vector<16xf32>
    %177 = vector.multi_reduction <add>, %176, %cst_73 [1] : vector<16x128xf32> to vector<16xf32>
    %178 = vector.shape_cast %177 : vector<16xf32> to vector<16x1xf32>
    %cst_74 = arith.constant 1.280000e+02 : f32
    %179 = vector.broadcast %cst_74 : f32 to vector<16x1xf32>
    %180 = arith.divf %178, %179 : vector<16x1xf32>
    %cst_75 = arith.constant 9.99999997E-7 : f32
    %181 = vector.broadcast %cst_75 : f32 to vector<16x1xf32>
    %182 = arith.addf %180, %181 : vector<16x1xf32>
    %183 = math.rsqrt %182 : vector<16x1xf32>
    %184 = vector.broadcast %183 : vector<16x1xf32> to vector<16x128xf32>
    %185 = arith.mulf %175, %184 : vector<16x128xf32>
    %186 = vector.broadcast %168 : vector<1x128xf32> to vector<16x128xf32>
    %187 = arith.mulf %185, %186 : vector<16x128xf32>
    %188 = vector.broadcast %169 : vector<1x128xf32> to vector<16x128xf32>
    %189 = arith.addf %187, %188 : vector<16x128xf32>
    %190 = arith.truncf %189 : vector<16x128xf32> to vector<16x128xbf16>
    %c1_76 = arith.constant 1 : index
    %c0_77 = arith.constant 0 : index
    %c0_78 = arith.constant 0 : index
    %191 = vector.load %arg6[%c1_76, %c0_77, %c0_78] : memref<2x128x384xbf16, #tpu.memory_space<vmem>>, vector<1x128x384xbf16>
    %192 = vector.shape_cast %191 : vector<1x128x384xbf16> to vector<128x384xbf16>
    %cst_79 = arith.constant dense<0.000000e+00> : vector<16x384xf32>
    %193 = tpu.matmul %190, %192, %cst_79 {dimension_numbers = #tpu.dot_dimension_numbers<[1], [0], [0], [1], [0, 0, 1, 1], [], []>} : vector<16x128xbf16>, vector<128x384xbf16>, vector<16x384xf32> -> vector<16x384xf32>
    %c1_80 = arith.constant 1 : index
    %c0_81 = arith.constant 0 : index
    %194 = vector.load %arg7[%c1_80, %c0_81] : memref<2x384xf32, #tpu.memory_space<vmem>>, vector<1x384xf32>
    %195 = vector.broadcast %194 : vector<1x384xf32> to vector<16x384xf32>
    %196 = arith.addf %193, %195 : vector<16x384xf32>
    %197 = vector.extract_strided_slice %196 {offsets = [0, 0], sizes = [16, 128], strides = [1, 1]} : vector<16x384xf32> to vector<16x128xf32>
    %cst_82 = arith.constant 1.250000e-01 : f32
    %198 = vector.broadcast %cst_82 : f32 to vector<16x128xf32>
    %199 = arith.mulf %197, %198 : vector<16x128xf32>
    %200 = vector.extract_strided_slice %196 {offsets = [0, 128], sizes = [16, 128], strides = [1, 1]} : vector<16x384xf32> to vector<16x128xf32>
    %201 = vector.extract_strided_slice %196 {offsets = [0, 256], sizes = [16, 128], strides = [1, 1]} : vector<16x384xf32> to vector<16x128xf32>
    %202 = vector.broadcast %7 : vector<1x128xf32> to vector<16x128xf32>
    %203 = arith.mulf %199, %202 : vector<16x128xf32>
    %cst_83 = arith.constant dense<0.000000e+00> : vector<16x16xf32>
    %204 = tpu.matmul %203, %200, %cst_83 {dimension_numbers = #tpu.dot_dimension_numbers<[1], [1], [0], [0], [0, 0, 1, 0], [], []>} : vector<16x128xf32>, vector<16x128xf32>, vector<16x16xf32> -> vector<16x16xf32>
    %205 = arith.addf %204, %29 : vector<16x16xf32>
    %cst_84 = arith.constant dense<0xFF800000> : vector<16xf32>
    %206 = vector.multi_reduction <maximumf>, %205, %cst_84 [1] : vector<16x16xf32> to vector<16xf32>
    %207 = vector.shape_cast %206 : vector<16xf32> to vector<16x1xf32>
    %208 = vector.broadcast %207 : vector<16x1xf32> to vector<16x16xf32>
    %209 = arith.subf %205, %208 : vector<16x16xf32>
    %210 = math.exp %209 : vector<16x16xf32>
    %cst_85 = arith.constant dense<0.000000e+00> : vector<16xf32>
    %211 = vector.multi_reduction <add>, %210, %cst_85 [1] : vector<16x16xf32> to vector<16xf32>
    %212 = vector.shape_cast %211 : vector<16xf32> to vector<16x1xf32>
    %213 = tpu.reciprocal %212 {approx = true} : vector<16x1xf32> -> vector<16x1xf32>
    %214 = vector.broadcast %213 : vector<16x1xf32> to vector<16x16xf32>
    %215 = arith.mulf %210, %214 : vector<16x16xf32>
    %216 = vector.broadcast %7 : vector<1x128xf32> to vector<16x128xf32>
    %217 = arith.mulf %201, %216 : vector<16x128xf32>
    %cst_86 = arith.constant dense<0.000000e+00> : vector<16x128xf32>
    %218 = tpu.matmul %215, %217, %cst_86 {dimension_numbers = #tpu.dot_dimension_numbers<[1], [0], [0], [1], [0, 0, 1, 1], [], []>} : vector<16x16xf32>, vector<16x128xf32>, vector<16x128xf32> -> vector<16x128xf32>
    %219 = vector.broadcast %14 : vector<1x128xf32> to vector<16x128xf32>
    %220 = arith.mulf %199, %219 : vector<16x128xf32>
    %cst_87 = arith.constant dense<0.000000e+00> : vector<16x16xf32>
    %221 = tpu.matmul %220, %200, %cst_87 {dimension_numbers = #tpu.dot_dimension_numbers<[1], [1], [0], [0], [0, 0, 1, 0], [], []>} : vector<16x128xf32>, vector<16x128xf32>, vector<16x16xf32> -> vector<16x16xf32>
    %222 = arith.addf %221, %29 : vector<16x16xf32>
    %cst_88 = arith.constant dense<0xFF800000> : vector<16xf32>
    %223 = vector.multi_reduction <maximumf>, %222, %cst_88 [1] : vector<16x16xf32> to vector<16xf32>
    %224 = vector.shape_cast %223 : vector<16xf32> to vector<16x1xf32>
    %225 = vector.broadcast %224 : vector<16x1xf32> to vector<16x16xf32>
    %226 = arith.subf %222, %225 : vector<16x16xf32>
    %227 = math.exp %226 : vector<16x16xf32>
    %cst_89 = arith.constant dense<0.000000e+00> : vector<16xf32>
    %228 = vector.multi_reduction <add>, %227, %cst_89 [1] : vector<16x16xf32> to vector<16xf32>
    %229 = vector.shape_cast %228 : vector<16xf32> to vector<16x1xf32>
    %230 = tpu.reciprocal %229 {approx = true} : vector<16x1xf32> -> vector<16x1xf32>
    %231 = vector.broadcast %230 : vector<16x1xf32> to vector<16x16xf32>
    %232 = arith.mulf %227, %231 : vector<16x16xf32>
    %233 = vector.broadcast %14 : vector<1x128xf32> to vector<16x128xf32>
    %234 = arith.mulf %201, %233 : vector<16x128xf32>
    %cst_90 = arith.constant dense<0.000000e+00> : vector<16x128xf32>
    %235 = tpu.matmul %232, %234, %cst_90 {dimension_numbers = #tpu.dot_dimension_numbers<[1], [0], [0], [1], [0, 0, 1, 1], [], []>} : vector<16x16xf32>, vector<16x128xf32>, vector<16x128xf32> -> vector<16x128xf32>
    %236 = arith.addf %218, %235 : vector<16x128xf32>
    %237 = arith.truncf %236 : vector<16x128xf32> to vector<16x128xbf16>
    %c1_91 = arith.constant 1 : index
    %c0_92 = arith.constant 0 : index
    %c0_93 = arith.constant 0 : index
    %238 = vector.load %arg8[%c1_91, %c0_92, %c0_93] : memref<2x128x128xbf16, #tpu.memory_space<vmem>>, vector<1x128x128xbf16>
    %239 = vector.shape_cast %238 : vector<1x128x128xbf16> to vector<128x128xbf16>
    %cst_94 = arith.constant dense<0.000000e+00> : vector<16x128xf32>
    %240 = tpu.matmul %237, %239, %cst_94 {dimension_numbers = #tpu.dot_dimension_numbers<[1], [0], [0], [1], [0, 0, 1, 1], [], []>} : vector<16x128xbf16>, vector<128x128xbf16>, vector<16x128xf32> -> vector<16x128xf32>
    %c1_95 = arith.constant 1 : index
    %c0_96 = arith.constant 0 : index
    %241 = vector.load %arg9[%c1_95, %c0_96] : memref<2x128xf32, #tpu.memory_space<vmem>>, vector<1x128xf32>
    %242 = vector.broadcast %241 : vector<1x128xf32> to vector<16x128xf32>
    %243 = arith.addf %240, %242 : vector<16x128xf32>
    %c1_97 = arith.constant 1 : index
    %c0_98 = arith.constant 0 : index
    %244 = vector.load %arg10[%c1_97, %c0_98] : memref<2x128xf32, #tpu.memory_space<vmem>>, vector<1x128xf32>
    %245 = vector.broadcast %244 : vector<1x128xf32> to vector<16x128xf32>
    %246 = arith.mulf %245, %243 : vector<16x128xf32>
    %247 = arith.addf %167, %246 : vector<16x128xf32>
    %c1_99 = arith.constant 1 : index
    %c0_100 = arith.constant 0 : index
    %248 = vector.load %arg11[%c1_99, %c0_100] : memref<2x128xf32, #tpu.memory_space<vmem>>, vector<1x128xf32>
    %c1_101 = arith.constant 1 : index
    %c0_102 = arith.constant 0 : index
    %249 = vector.load %arg12[%c1_101, %c0_102] : memref<2x128xf32, #tpu.memory_space<vmem>>, vector<1x128xf32>
    %cst_103 = arith.constant dense<0.000000e+00> : vector<16xf32>
    %250 = vector.multi_reduction <add>, %247, %cst_103 [1] : vector<16x128xf32> to vector<16xf32>
    %251 = vector.shape_cast %250 : vector<16xf32> to vector<16x1xf32>
    %cst_104 = arith.constant 1.280000e+02 : f32
    %252 = vector.broadcast %cst_104 : f32 to vector<16x1xf32>
    %253 = arith.divf %251, %252 : vector<16x1xf32>
    %254 = vector.broadcast %253 : vector<16x1xf32> to vector<16x128xf32>
    %255 = arith.subf %247, %254 : vector<16x128xf32>
    %256 = arith.mulf %255, %255 : vector<16x128xf32>
    %cst_105 = arith.constant dense<0.000000e+00> : vector<16xf32>
    %257 = vector.multi_reduction <add>, %256, %cst_105 [1] : vector<16x128xf32> to vector<16xf32>
    %258 = vector.shape_cast %257 : vector<16xf32> to vector<16x1xf32>
    %cst_106 = arith.constant 1.280000e+02 : f32
    %259 = vector.broadcast %cst_106 : f32 to vector<16x1xf32>
    %260 = arith.divf %258, %259 : vector<16x1xf32>
    %cst_107 = arith.constant 9.99999997E-7 : f32
    %261 = vector.broadcast %cst_107 : f32 to vector<16x1xf32>
    %262 = arith.addf %260, %261 : vector<16x1xf32>
    %263 = math.rsqrt %262 : vector<16x1xf32>
    %264 = vector.broadcast %263 : vector<16x1xf32> to vector<16x128xf32>
    %265 = arith.mulf %255, %264 : vector<16x128xf32>
    %266 = vector.broadcast %248 : vector<1x128xf32> to vector<16x128xf32>
    %267 = arith.mulf %265, %266 : vector<16x128xf32>
    %268 = vector.broadcast %249 : vector<1x128xf32> to vector<16x128xf32>
    %269 = arith.addf %267, %268 : vector<16x128xf32>
    %270 = arith.truncf %269 : vector<16x128xf32> to vector<16x128xbf16>
    %c1_108 = arith.constant 1 : index
    %c0_109 = arith.constant 0 : index
    %c0_110 = arith.constant 0 : index
    %271 = vector.load %arg13[%c1_108, %c0_109, %c0_110] : memref<2x128x512xbf16, #tpu.memory_space<vmem>>, vector<1x128x512xbf16>
    %272 = vector.shape_cast %271 : vector<1x128x512xbf16> to vector<128x512xbf16>
    %cst_111 = arith.constant dense<0.000000e+00> : vector<16x512xf32>
    %273 = tpu.matmul %270, %272, %cst_111 {dimension_numbers = #tpu.dot_dimension_numbers<[1], [0], [0], [1], [0, 0, 1, 1], [], []>} : vector<16x128xbf16>, vector<128x512xbf16>, vector<16x512xf32> -> vector<16x512xf32>
    %c1_112 = arith.constant 1 : index
    %c0_113 = arith.constant 0 : index
    %274 = vector.load %arg14[%c1_112, %c0_113] : memref<2x512xf32, #tpu.memory_space<vmem>>, vector<1x512xf32>
    %275 = vector.broadcast %274 : vector<1x512xf32> to vector<16x512xf32>
    %276 = arith.addf %273, %275 : vector<16x512xf32>
    %277 = arith.mulf %276, %276 : vector<16x512xf32>
    %278 = arith.mulf %276, %277 : vector<16x512xf32>
    %cst_114 = arith.constant 4.471500e-02 : f32
    %279 = vector.broadcast %cst_114 : f32 to vector<16x512xf32>
    %280 = arith.mulf %279, %278 : vector<16x512xf32>
    %281 = arith.addf %276, %280 : vector<16x512xf32>
    %cst_115 = arith.constant 0.797884583 : f32
    %282 = vector.broadcast %cst_115 : f32 to vector<16x512xf32>
    %283 = arith.mulf %282, %281 : vector<16x512xf32>
    %284 = math.tanh %283 : vector<16x512xf32>
    %cst_116 = arith.constant 1.000000e+00 : f32
    %285 = vector.broadcast %cst_116 : f32 to vector<16x512xf32>
    %286 = arith.addf %285, %284 : vector<16x512xf32>
    %cst_117 = arith.constant 5.000000e-01 : f32
    %287 = vector.broadcast %cst_117 : f32 to vector<16x512xf32>
    %288 = arith.mulf %287, %286 : vector<16x512xf32>
    %289 = arith.mulf %276, %288 : vector<16x512xf32>
    %290 = arith.truncf %289 : vector<16x512xf32> to vector<16x512xbf16>
    %c1_118 = arith.constant 1 : index
    %c0_119 = arith.constant 0 : index
    %c0_120 = arith.constant 0 : index
    %291 = vector.load %arg15[%c1_118, %c0_119, %c0_120] : memref<2x512x128xbf16, #tpu.memory_space<vmem>>, vector<1x512x128xbf16>
    %292 = vector.shape_cast %291 : vector<1x512x128xbf16> to vector<512x128xbf16>
    %cst_121 = arith.constant dense<0.000000e+00> : vector<16x128xf32>
    %293 = tpu.matmul %290, %292, %cst_121 {dimension_numbers = #tpu.dot_dimension_numbers<[1], [0], [0], [1], [0, 0, 1, 1], [], []>} : vector<16x512xbf16>, vector<512x128xbf16>, vector<16x128xf32> -> vector<16x128xf32>
    %c1_122 = arith.constant 1 : index
    %c0_123 = arith.constant 0 : index
    %294 = vector.load %arg16[%c1_122, %c0_123] : memref<2x128xf32, #tpu.memory_space<vmem>>, vector<1x128xf32>
    %295 = vector.broadcast %294 : vector<1x128xf32> to vector<16x128xf32>
    %296 = arith.addf %293, %295 : vector<16x128xf32>
    %c1_124 = arith.constant 1 : index
    %c0_125 = arith.constant 0 : index
    %297 = vector.load %arg17[%c1_124, %c0_125] : memref<2x128xf32, #tpu.memory_space<vmem>>, vector<1x128xf32>
    %298 = vector.broadcast %297 : vector<1x128xf32> to vector<16x128xf32>
    %299 = arith.mulf %298, %296 : vector<16x128xf32>
    %300 = arith.addf %247, %299 : vector<16x128xf32>
    %c0_126 = arith.constant 0 : index
    %c0_127 = arith.constant 0 : index
    %301 = vector.load %arg18[%c0_126, %c0_127] : memref<1x128xf32, #tpu.memory_space<vmem>>, vector<1x128xf32>
    %c0_128 = arith.constant 0 : index
    %c0_129 = arith.constant 0 : index
    %302 = vector.load %arg19[%c0_128, %c0_129] : memref<1x128xf32, #tpu.memory_space<vmem>>, vector<1x128xf32>
    %cst_130 = arith.constant dense<0.000000e+00> : vector<16xf32>
    %303 = vector.multi_reduction <add>, %300, %cst_130 [1] : vector<16x128xf32> to vector<16xf32>
    %304 = vector.shape_cast %303 : vector<16xf32> to vector<16x1xf32>
    %cst_131 = arith.constant 1.280000e+02 : f32
    %305 = vector.broadcast %cst_131 : f32 to vector<16x1xf32>
    %306 = arith.divf %304, %305 : vector<16x1xf32>
    %307 = vector.broadcast %306 : vector<16x1xf32> to vector<16x128xf32>
    %308 = arith.subf %300, %307 : vector<16x128xf32>
    %309 = arith.mulf %308, %308 : vector<16x128xf32>
    %cst_132 = arith.constant dense<0.000000e+00> : vector<16xf32>
    %310 = vector.multi_reduction <add>, %309, %cst_132 [1] : vector<16x128xf32> to vector<16xf32>
    %311 = vector.shape_cast %310 : vector<16xf32> to vector<16x1xf32>
    %cst_133 = arith.constant 1.280000e+02 : f32
    %312 = vector.broadcast %cst_133 : f32 to vector<16x1xf32>
    %313 = arith.divf %311, %312 : vector<16x1xf32>
    %cst_134 = arith.constant 9.99999997E-7 : f32
    %314 = vector.broadcast %cst_134 : f32 to vector<16x1xf32>
    %315 = arith.addf %313, %314 : vector<16x1xf32>
    %316 = math.rsqrt %315 : vector<16x1xf32>
    %317 = vector.broadcast %316 : vector<16x1xf32> to vector<16x128xf32>
    %318 = arith.mulf %308, %317 : vector<16x128xf32>
    %319 = vector.broadcast %301 : vector<1x128xf32> to vector<16x128xf32>
    %320 = arith.mulf %318, %319 : vector<16x128xf32>
    %321 = vector.broadcast %302 : vector<1x128xf32> to vector<16x128xf32>
    %322 = arith.addf %320, %321 : vector<16x128xf32>
    %323 = arith.truncf %322 : vector<16x128xf32> to vector<16x128xbf16>
    %c0_135 = arith.constant 0 : index
    %c0_136 = arith.constant 0 : index
    %324 = vector.load %arg20[%c0_135, %c0_136] : memref<128x512xbf16, #tpu.memory_space<vmem>>, vector<128x512xbf16>
    %cst_137 = arith.constant dense<0.000000e+00> : vector<16x512xf32>
    %325 = tpu.matmul %323, %324, %cst_137 {dimension_numbers = #tpu.dot_dimension_numbers<[1], [0], [0], [1], [0, 0, 1, 1], [], []>} : vector<16x128xbf16>, vector<128x512xbf16>, vector<16x512xf32> -> vector<16x512xf32>
    %c0_138 = arith.constant 0 : index
    %c0_139 = arith.constant 0 : index
    %326 = vector.load %arg21[%c0_138, %c0_139] : memref<1x512xf32, #tpu.memory_space<vmem>>, vector<1x512xf32>
    %327 = vector.broadcast %326 : vector<1x512xf32> to vector<16x512xf32>
    %328 = arith.addf %325, %327 : vector<16x512xf32>
    %cst_140 = arith.constant 0.000000e+00 : f32
    %329 = vector.broadcast %cst_140 : f32 to vector<16x512xf32>
    %330 = arith.maximumf %328, %329 : vector<16x512xf32>
    %331 = arith.truncf %330 : vector<16x512xf32> to vector<16x512xbf16>
    %c0_141 = arith.constant 0 : index
    %c0_142 = arith.constant 0 : index
    %332 = vector.load %arg22[%c0_141, %c0_142] : memref<512x128xbf16, #tpu.memory_space<vmem>>, vector<512x128xbf16>
    %cst_143 = arith.constant dense<0.000000e+00> : vector<16x128xf32>
    %333 = tpu.matmul %331, %332, %cst_143 {dimension_numbers = #tpu.dot_dimension_numbers<[1], [0], [0], [1], [0, 0, 1, 1], [], []>} : vector<16x512xbf16>, vector<512x128xbf16>, vector<16x128xf32> -> vector<16x128xf32>
    %c0_144 = arith.constant 0 : index
    %c0_145 = arith.constant 0 : index
    %334 = vector.load %arg23[%c0_144, %c0_145] : memref<1x128xf32, #tpu.memory_space<vmem>>, vector<1x128xf32>
    %335 = vector.broadcast %334 : vector<1x128xf32> to vector<16x128xf32>
    %336 = arith.addf %333, %335 : vector<16x128xf32>
    %c0_146 = arith.constant 0 : index
    %c0_147 = arith.constant 0 : index
    %337 = vector.load %arg24[%c0_146, %c0_147] : memref<1x128xf32, #tpu.memory_space<vmem>>, vector<1x128xf32>
    %c0_148 = arith.constant 0 : index
    %c0_149 = arith.constant 0 : index
    %338 = vector.load %arg25[%c0_148, %c0_149] : memref<1x128xf32, #tpu.memory_space<vmem>>, vector<1x128xf32>
    %cst_150 = arith.constant dense<0.000000e+00> : vector<16xf32>
    %339 = vector.multi_reduction <add>, %336, %cst_150 [1] : vector<16x128xf32> to vector<16xf32>
    %340 = vector.shape_cast %339 : vector<16xf32> to vector<16x1xf32>
    %cst_151 = arith.constant 1.280000e+02 : f32
    %341 = vector.broadcast %cst_151 : f32 to vector<16x1xf32>
    %342 = arith.divf %340, %341 : vector<16x1xf32>
    %343 = vector.broadcast %342 : vector<16x1xf32> to vector<16x128xf32>
    %344 = arith.subf %336, %343 : vector<16x128xf32>
    %345 = arith.mulf %344, %344 : vector<16x128xf32>
    %cst_152 = arith.constant dense<0.000000e+00> : vector<16xf32>
    %346 = vector.multi_reduction <add>, %345, %cst_152 [1] : vector<16x128xf32> to vector<16xf32>
    %347 = vector.shape_cast %346 : vector<16xf32> to vector<16x1xf32>
    %cst_153 = arith.constant 1.280000e+02 : f32
    %348 = vector.broadcast %cst_153 : f32 to vector<16x1xf32>
    %349 = arith.divf %347, %348 : vector<16x1xf32>
    %cst_154 = arith.constant 9.99999974E-6 : f32
    %350 = vector.broadcast %cst_154 : f32 to vector<16x1xf32>
    %351 = arith.addf %349, %350 : vector<16x1xf32>
    %352 = math.rsqrt %351 : vector<16x1xf32>
    %353 = vector.broadcast %352 : vector<16x1xf32> to vector<16x128xf32>
    %354 = arith.mulf %344, %353 : vector<16x128xf32>
    %355 = vector.broadcast %337 : vector<1x128xf32> to vector<16x128xf32>
    %356 = arith.mulf %354, %355 : vector<16x128xf32>
    %357 = vector.broadcast %338 : vector<1x128xf32> to vector<16x128xf32>
    %358 = arith.addf %356, %357 : vector<16x128xf32>
    %c0_155 = arith.constant 0 : index
    %c0_156 = arith.constant 0 : index
    %359 = vector.load %arg26[%c0_155, %c0_156] : memref<16x128xf32, #tpu.memory_space<vmem>>, vector<16x128xf32>
    tpu.vector_store %arg26[%c0_155, %c0_156], %358 {strides = array<i32>} : memref<16x128xf32, #tpu.memory_space<vmem>>, vector<16x128xf32>,
    return
  }
  func.func @transform_0(%arg0: i32) -> (i32, i32) {
    %c0_i32 = arith.constant 0 : i32
    %c0_i32_0 = arith.constant 0 : i32
    %c0_i32_1 = arith.constant 0 : i32
    return %c0_i32, %c0_i32_0 : i32, i32
  }
  func.func @transform_1(%arg0: i32) -> (i32, i32) {
    %c0_i32 = arith.constant 0 : i32
    %c0_i32_0 = arith.constant 0 : i32
    %c0_i32_1 = arith.constant 0 : i32
    return %c0_i32, %c0_i32_0 : i32, i32
  }
  func.func @transform_2(%arg0: i32) -> (i32, i32) {
    %c0_i32 = arith.constant 0 : i32
    %c0_i32_0 = arith.constant 0 : i32
    %c0_i32_1 = arith.constant 0 : i32
    return %c0_i32, %c0_i32_0 : i32, i32
  }
  func.func @transform_3(%arg0: i32) -> (i32, i32) {
    %c0_i32 = arith.constant 0 : i32
    %c0_i32_0 = arith.constant 0 : i32
    %c0_i32_1 = arith.constant 0 : i32
    return %c0_i32, %c0_i32_0 : i32, i32
  }
  func.func @transform_4(%arg0: i32) -> (i32, i32) {
    %c0_i32 = arith.constant 0 : i32
    %c0_i32_0 = arith.constant 0 : i32
    %c0_i32_1 = arith.constant 0 : i32
    return %c0_i32, %c0_i32_0 : i32, i32
  }
  func.func @transform_5(%arg0: i32) -> (i32, i32, i32) {
    %c0_i32 = arith.constant 0 : i32
    %c0_i32_0 = arith.constant 0 : i32
    %c0_i32_1 = arith.constant 0 : i32
    %c0_i32_2 = arith.constant 0 : i32
    return %c0_i32, %c0_i32_0, %c0_i32_1 : i32, i32, i32
  }
  func.func @transform_6(%arg0: i32) -> (i32, i32) {
    %c0_i32 = arith.constant 0 : i32
    %c0_i32_0 = arith.constant 0 : i32
    %c0_i32_1 = arith.constant 0 : i32
    return %c0_i32, %c0_i32_0 : i32, i32
  }
  func.func @transform_7(%arg0: i32) -> (i32, i32, i32) {
    %c0_i32 = arith.constant 0 : i32
    %c0_i32_0 = arith.constant 0 : i32
    %c0_i32_1 = arith.constant 0 : i32
    %c0_i32_2 = arith.constant 0 : i32
    return %c0_i32, %c0_i32_0, %c0_i32_1 : i32, i32, i32
  }
  func.func @transform_8(%arg0: i32) -> (i32, i32) {
    %c0_i32 = arith.constant 0 : i32
    %c0_i32_0 = arith.constant 0 : i32
    %c0_i32_1 = arith.constant 0 : i32
    return %c0_i32, %c0_i32_0 : i32, i32
  }
  func.func @transform_9(%arg0: i32) -> (i32, i32) {
    %c0_i32 = arith.constant 0 : i32
    %c0_i32_0 = arith.constant 0 : i32
    %c0_i32_1 = arith.constant 0 : i32
    return %c0_i32, %c0_i32_0 : i32, i32
  }
  func.func @transform_10(%arg0: i32) -> (i32, i32) {
    %c0_i32 = arith.constant 0 : i32
    %c0_i32_0 = arith.constant 0 : i32
    %c0_i32_1 = arith.constant 0 : i32
    return %c0_i32, %c0_i32_0 : i32, i32
  }
  func.func @transform_11(%arg0: i32) -> (i32, i32) {
    %c0_i32 = arith.constant 0 : i32
    %c0_i32_0 = arith.constant 0 : i32
    %c0_i32_1 = arith.constant 0 : i32
    return %c0_i32, %c0_i32_0 : i32, i32
  }
  func.func @transform_12(%arg0: i32) -> (i32, i32, i32) {
    %c0_i32 = arith.constant 0 : i32
    %c0_i32_0 = arith.constant 0 : i32
    %c0_i32_1 = arith.constant 0 : i32
    %c0_i32_2 = arith.constant 0 : i32
    return %c0_i32, %c0_i32_0, %c0_i32_1 : i32, i32, i32
  }
  func.func @transform_13(%arg0: i32) -> (i32, i32) {
    %c0_i32 = arith.constant 0 : i32
    %c0_i32_0 = arith.constant 0 : i32
    %c0_i32_1 = arith.constant 0 : i32
    return %c0_i32, %c0_i32_0 : i32, i32
  }
  func.func @transform_14(%arg0: i32) -> (i32, i32, i32) {
    %c0_i32 = arith.constant 0 : i32
    %c0_i32_0 = arith.constant 0 : i32
    %c0_i32_1 = arith.constant 0 : i32
    %c0_i32_2 = arith.constant 0 : i32
    return %c0_i32, %c0_i32_0, %c0_i32_1 : i32, i32, i32
  }
  func.func @transform_15(%arg0: i32) -> (i32, i32) {
    %c0_i32 = arith.constant 0 : i32
    %c0_i32_0 = arith.constant 0 : i32
    %c0_i32_1 = arith.constant 0 : i32
    return %c0_i32, %c0_i32_0 : i32, i32
  }
  func.func @transform_16(%arg0: i32) -> (i32, i32) {
    %c0_i32 = arith.constant 0 : i32
    %c0_i32_0 = arith.constant 0 : i32
    %c0_i32_1 = arith.constant 0 : i32
    return %c0_i32, %c0_i32_0 : i32, i32
  }
  func.func @transform_17(%arg0: i32) -> (i32, i32) {
    %c0_i32 = arith.constant 0 : i32
    %c0_i32_0 = arith.constant 0 : i32
    %c0_i32_1 = arith.constant 0 : i32
    return %c0_i32, %c0_i32_0 : i32, i32
  }
  func.func @transform_18(%arg0: i32) -> (i32, i32) {
    %c0_i32 = arith.constant 0 : i32
    %c0_i32_0 = arith.constant 0 : i32
    %c0_i32_1 = arith.constant 0 : i32
    return %c0_i32, %c0_i32_0 : i32, i32
  }
  func.func @transform_19(%arg0: i32) -> (i32, i32) {
    %c0_i32 = arith.constant 0 : i32
    %c0_i32_0 = arith.constant 0 : i32
    %c0_i32_1 = arith.constant 0 : i32
    return %c0_i32, %c0_i32_0 : i32, i32
  }
  func.func @transform_20(%arg0: i32) -> (i32, i32) {
    %c0_i32 = arith.constant 0 : i32
    %c0_i32_0 = arith.constant 0 : i32
    %c0_i32_1 = arith.constant 0 : i32
    return %c0_i32, %c0_i32_0 : i32, i32
  }
  func.func @transform_21(%arg0: i32) -> (i32, i32) {
    %c0_i32 = arith.constant 0 : i32
    %c0_i32_0 = arith.constant 0 : i32
    %c0_i32_1 = arith.constant 0 : i32
    return %c0_i32, %c0_i32_0 : i32, i32
  }
  func.func @transform_22(%arg0: i32) -> (i32, i32) {
    %c0_i32 = arith.constant 0 : i32
    %c0_i32_0 = arith.constant 0 : i32
    %c0_i32_1 = arith.constant 0 : i32
    return %c0_i32, %c0_i32_0 : i32, i32
  }
  func.func @transform_23(%arg0: i32) -> (i32, i32) {
    %c0_i32 = arith.constant 0 : i32
    %c0_i32_0 = arith.constant 0 : i32
    %c0_i32_1 = arith.constant 0 : i32
    return %c0_i32, %c0_i32_0 : i32, i32
  }
  func.func @transform_24(%arg0: i32) -> (i32, i32) {
    %c0_i32 = arith.constant 0 : i32
    %c0_i32_0 = arith.constant 0 : i32
    %c0_i32_1 = arith.constant 0 : i32
    return %c0_i32, %c0_i32_0 : i32, i32
  }
  func.func @transform_25(%arg0: i32) -> (i32, i32) {
    %c0_i32 = arith.constant 0 : i32
    %c0_i32_0 = arith.constant 0 : i32
    %c0_i32_1 = arith.constant 0 : i32
    return %c0_i32, %c0_i32_0 : i32, i32
  }
}

</mosaic_0001>

<llo_original>
// kernel: dinov2_forward.1
$region0: #{dinov2_forward.1}
  #allocation0 [shape = 'u32[]', space=smem, size = 0x4, offset = 0x4, fixed_abs, tag = 'smem constant byte address 0x4 - core index']
  #allocation1 [shape = 'u32[144,128]{1,0:T(1,128)}', space=vmem, size = 0x12000, scoped, tag = 'internal scratch']
  %s0 = inlined_call_operand.vmem [shape: f32[16,192], index: 0, kind: input, shape index: {}]
  %s1 = inlined_call_operand.hbm [shape: f32[192,128], index: 1, kind: input, shape index: {}]
  %s2 = inlined_call_operand.vmem [shape: f32[16,128], index: 2, kind: input, shape index: {}]
  %s3 = inlined_call_operand.vmem [shape: f32[2,128], index: 3, kind: input, shape index: {}]
  %s4 = inlined_call_operand.vmem [shape: f32[2,128], index: 4, kind: input, shape index: {}]
  %s5 = inlined_call_operand.vmem [shape: bf16[2,128,384], index: 5, kind: input, shape index: {}]
  %s6 = inlined_call_operand.vmem [shape: f32[2,384], index: 6, kind: input, shape index: {}]
  %s7 = inlined_call_operand.hbm [shape: bf16[2,128,128], index: 7, kind: input, shape index: {}]
  %s8 = inlined_call_operand.vmem [shape: f32[2,128], index: 8, kind: input, shape index: {}]
  %s9 = inlined_call_operand.vmem [shape: f32[2,128], index: 9, kind: input, shape index: {}]
  %s10 = inlined_call_operand.vmem [shape: f32[2,128], index: 10, kind: input, shape index: {}]
  %s11 = inlined_call_operand.vmem [shape: f32[2,128], index: 11, kind: input, shape index: {}]
  %s12 = inlined_call_operand.vmem [shape: bf16[2,128,512], index: 12, kind: input, shape index: {}]
  %s13 = inlined_call_operand.vmem [shape: f32[2,512], index: 13, kind: input, shape index: {}]
  %s14 = inlined_call_operand.hbm [shape: bf16[2,512,128], index: 14, kind: input, shape index: {}]
  %s15 = inlined_call_operand.vmem [shape: f32[2,128], index: 15, kind: input, shape index: {}]
  %s16 = inlined_call_operand.vmem [shape: f32[2,128], index: 16, kind: input, shape index: {}]
  %s17 = inlined_call_operand.vmem [shape: f32[1,128], index: 17, kind: input, shape index: {}]
  %s18 = inlined_call_operand.vmem [shape: f32[1,128], index: 18, kind: input, shape index: {}]
  %s19 = inlined_call_operand.hbm [shape: bf16[128,512], index: 19, kind: input, shape index: {}]
  %s20 = inlined_call_operand.vmem [shape: f32[1,512], index: 20, kind: input, shape index: {}]
  %s21 = inlined_call_operand.hbm [shape: bf16[512,128], index: 21, kind: input, shape index: {}]
  %s22 = inlined_call_operand.vmem [shape: f32[1,128], index: 22, kind: input, shape index: {}]
  %s23 = inlined_call_operand.vmem [shape: f32[1,128], index: 23, kind: input, shape index: {}]
  %s24 = inlined_call_operand.vmem [shape: f32[1,128], index: 24, kind: input, shape index: {}]
  %s25 = inlined_call_operand.vmem [shape: f32[16,128], index: 25, kind: output, shape index: {}]
  %s26 = sld [smem:[#allocation0]]
  $region130: #{dinov2_forward.1} parent=0
    _
  %s28 = ssub.s32 1, %s26
  %s29 = scalar_select 0, %s28, %s26
  $region1: #{dinov2_forward.1} parent=0
    #allocation2 [shape = 'u8[98304]{0}', space=vmem, size = 0x18000, scoped, tag = 'input window, operand 1, single buffered']
    #allocation3 [shape = 's32[1]{0}', space=sflag, size = 0x4, scoped, tag = 'scoped memory for dinov2_forward.1']
    #allocation4 [shape = 'u8[65536]{0}', space=vmem, size = 0x10000, scoped, tag = 'input window, operand 7, single buffered']
    #allocation5 [shape = 's32[1]{0}', space=sflag, size = 0x4, scoped, tag = 'scoped memory for dinov2_forward.1']
    #allocation6 [shape = 'u8[262144]{0}', space=vmem, size = 0x40000, scoped, tag = 'input window, operand 14, single buffered']
    #allocation7 [shape = 'u8[131072]{0}', space=vmem, size = 0x20000, scoped, tag = 'input window, operand 19, single buffered']
    #allocation8 [shape = 's32[1]{0}', space=sflag, size = 0x4, scoped, tag = 'scoped memory for dinov2_forward.1']
    #allocation9 [shape = 'u8[131072]{0}', space=vmem, size = 0x20000, scoped, tag = 'input window, operand 21, single buffered']
    %30 = vsyncpa [#allocation3], 0
    %31 = vsyncpa [#allocation5], 0
    %32 = vsyncpa [#allocation8], 0
    // Predicated region
    $region2: #{dinov2_forward.1} parent=1 // pred_check
      _
    $region3: #{dinov2_forward.1} parent=1 // pred_check_branch
      %34 = sbr.rel (0) target = $region5
    $region4: #{dinov2_forward.1} parent=1 // pred_region
      _
    $region5: #{dinov2_forward.1} parent=1 // pred_fallthru
      _
    // Predicated region
    $region6: #{dinov2_forward.1} parent=1 // pred_check
      _
    $region7: #{dinov2_forward.1} parent=1 // pred_check_branch
      %36 = sbr.rel (0) target = $region9
    $region8: #{dinov2_forward.1} parent=1 // pred_region
      %s38 = ssub.s32 3072, 3072
      %39 = vsyncadd [#allocation3], %s38
      %s40 = sshll.u32 [#allocation2], 4
      %s41 = int_to_ptr.vmem [resolvable:$true] %s40
      %46 = dma.hbm_to_vmem [thread:$0]  %s1, 3072, %s41, [#allocation3], 128, 128, 8
    $region9: #{dinov2_forward.1} parent=1 // pred_fallthru
      _
    // Predicated region
    $region10: #{dinov2_forward.1} parent=1 // pred_check
      _
    $region11: #{dinov2_forward.1} parent=1 // pred_check_branch
      %48 = sbr.rel (0) target = $region13
    $region12: #{dinov2_forward.1} parent=1 // pred_region
      _
    $region13: #{dinov2_forward.1} parent=1 // pred_fallthru
      _
    // Predicated region
    $region14: #{dinov2_forward.1} parent=1 // pred_check
      _
    $region15: #{dinov2_forward.1} parent=1 // pred_check_branch
      %50 = sbr.rel (0) target = $region17
    $region16: #{dinov2_forward.1} parent=1 // pred_region
      _
    $region17: #{dinov2_forward.1} parent=1 // pred_fallthru
      _
    // Predicated region
    $region18: #{dinov2_forward.1} parent=1 // pred_check
      _
    $region19: #{dinov2_forward.1} parent=1 // pred_check_branch
      %52 = sbr.rel (0) target = $region21
    $region20: #{dinov2_forward.1} parent=1 // pred_region
      _
    $region21: #{dinov2_forward.1} parent=1 // pred_fallthru
      _
    // Predicated region
    $region22: #{dinov2_forward.1} parent=1 // pred_check
      _
    $region23: #{dinov2_forward.1} parent=1 // pred_check_branch
      %54 = sbr.rel (0) target = $region25
    $region24: #{dinov2_forward.1} parent=1 // pred_region
      _
    $region25: #{dinov2_forward.1} parent=1 // pred_fallthru
      _
    // Predicated region
    $region26: #{dinov2_forward.1} parent=1 // pred_check
      _
    $region27: #{dinov2_forward.1} parent=1 // pred_check_branch
      %56 = sbr.rel (0) target = $region29
    $region28: #{dinov2_forward.1} parent=1 // pred_region
      _
    $region29: #{dinov2_forward.1} parent=1 // pred_fallthru
      _
    // Predicated region
    $region30: #{dinov2_forward.1} parent=1 // pred_check
      _
    $region31: #{dinov2_forward.1} parent=1 // pred_check_branch
      %58 = sbr.rel (0) target = $region33
    $region32: #{dinov2_forward.1} parent=1 // pred_region
      %s60 = ssub.s32 2048, 2048
      %61 = vsyncadd [#allocation5], %s60
      %s62 = sshll.u32 [#allocation4], 4
      %s63 = int_to_ptr.vmem [resolvable:$true] %s62
      %68 = dma.hbm_to_vmem [thread:$0]  %s7, 2048, %s63, [#allocation5], 64, 64, 4
    $region33: #{dinov2_forward.1} parent=1 // pred_fallthru
      _
    // Predicated region
    $region34: #{dinov2_forward.1} parent=1 // pred_check
      _
    $region35: #{dinov2_forward.1} parent=1 // pred_check_branch
      %70 = sbr.rel (0) target = $region37
    $region36: #{dinov2_forward.1} parent=1 // pred_region
      _
    $region37: #{dinov2_forward.1} parent=1 // pred_fallthru
      _
    // Predicated region
    $region38: #{dinov2_forward.1} parent=1 // pred_check
      _
    $region39: #{dinov2_forward.1} parent=1 // pred_check_branch
      %72 = sbr.rel (0) target = $region41
    $region40: #{dinov2_forward.1} parent=1 // pred_region
      _
    $region41: #{dinov2_forward.1} parent=1 // pred_fallthru
      _
    // Predicated region
    $region42: #{dinov2_forward.1} parent=1 // pred_check
      _
    $region43: #{dinov2_forward.1} parent=1 // pred_check_branch
      %74 = sbr.rel (0) target = $region45
    $region44: #{dinov2_forward.1} parent=1 // pred_region
      _
    $region45: #{dinov2_forward.1} parent=1 // pred_fallthru
      _
    // Predicated region
    $region46: #{dinov2_forward.1} parent=1 // pred_check
      _
    $region47: #{dinov2_forward.1} parent=1 // pred_check_branch
      %76 = sbr.rel (0) target = $region49
    $region48: #{dinov2_forward.1} parent=1 // pred_region
      _
    $region49: #{dinov2_forward.1} parent=1 // pred_fallthru
      _
    // Predicated region
    $region50: #{dinov2_forward.1} parent=1 // pred_check
      _
    $region51: #{dinov2_forward.1} parent=1 // pred_check_branch
      %78 = sbr.rel (0) target = $region53
    $region52: #{dinov2_forward.1} parent=1 // pred_region
      _
    $region53: #{dinov2_forward.1} parent=1 // pred_fallthru
      _
    // Predicated region
    $region54: #{dinov2_forward.1} parent=1 // pred_check
      _
    $region55: #{dinov2_forward.1} parent=1 // pred_check_branch
      %80 = sbr.rel (0) target = $region57
    $region56: #{dinov2_forward.1} parent=1 // pred_region
      _
    $region57: #{dinov2_forward.1} parent=1 // pred_fallthru
      _
    // Predicated region
    $region58: #{dinov2_forward.1} parent=1 // pred_check
      _
    $region59: #{dinov2_forward.1} parent=1 // pred_check_branch
      %82 = sbr.rel (0) target = $region61
    $region60: #{dinov2_forward.1} parent=1 // pred_region
      %s84 = ssub.s32 8192, 8192
      %85 = vsyncadd [#allocation5], %s84
      %s86 = sshll.u32 [#allocation6], 4
      %s87 = int_to_ptr.vmem [resolvable:$true] %s86
      %92 = dma.hbm_to_vmem [thread:$0]  %s14, 8192, %s87, [#allocation5], 64, 64, 4
    $region61: #{dinov2_forward.1} parent=1 // pred_fallthru
      _
    // Predicated region
    $region62: #{dinov2_forward.1} parent=1 // pred_check
      _
    $region63: #{dinov2_forward.1} parent=1 // pred_check_branch
      %94 = sbr.rel (0) target = $region65
    $region64: #{dinov2_forward.1} parent=1 // pred_region
      _
    $region65: #{dinov2_forward.1} parent=1 // pred_fallthru
      _
    // Predicated region
    $region66: #{dinov2_forward.1} parent=1 // pred_check
      _
    $region67: #{dinov2_forward.1} parent=1 // pred_check_branch
      %96 = sbr.rel (0) target = $region69
    $region68: #{dinov2_forward.1} parent=1 // pred_region
      _
    $region69: #{dinov2_forward.1} parent=1 // pred_fallthru
      _
    // Predicated region
    $region70: #{dinov2_forward.1} parent=1 // pred_check
      _
    $region71: #{dinov2_forward.1} parent=1 // pred_check_branch
      %98 = sbr.rel (0) target = $region73
    $region72: #{dinov2_forward.1} parent=1 // pred_region
      _
    $region73: #{dinov2_forward.1} parent=1 // pred_fallthru
      _
    // Predicated region
    $region74: #{dinov2_forward.1} parent=1 // pred_check
      _
    $region75: #{dinov2_forward.1} parent=1 // pred_check_branch
      %100 = sbr.rel (0) target = $region77
    $region76: #{dinov2_forward.1} parent=1 // pred_region
      _
    $region77: #{dinov2_forward.1} parent=1 // pred_fallthru
      _
    // Predicated region
    $region78: #{dinov2_forward.1} parent=1 // pred_check
      _
    $region79: #{dinov2_forward.1} parent=1 // pred_check_branch
      %102 = sbr.rel (0) target = $region81
    $region80: #{dinov2_forward.1} parent=1 // pred_region
      %s104 = ssub.s32 4096, 4096
      %105 = vsyncadd [#allocation8], %s104
      %s106 = sshll.u32 [#allocation7], 4
      %s107 = int_to_ptr.vmem [resolvable:$true] %s106
      %112 = dma.hbm_to_vmem [thread:$0]  %s19, 4096, %s107, [#allocation8], 256, 256, 16
    $region81: #{dinov2_forward.1} parent=1 // pred_fallthru
      _
    // Predicated region
    $region82: #{dinov2_forward.1} parent=1 // pred_check
      _
    $region83: #{dinov2_forward.1} parent=1 // pred_check_branch
      %114 = sbr.rel (0) target = $region85
    $region84: #{dinov2_forward.1} parent=1 // pred_region
      _
    $region85: #{dinov2_forward.1} parent=1 // pred_fallthru
      _
    // Predicated region
    $region86: #{dinov2_forward.1} parent=1 // pred_check
      _
    $region87: #{dinov2_forward.1} parent=1 // pred_check_branch
      %116 = sbr.rel (0) target = $region89
    $region88: #{dinov2_forward.1} parent=1 // pred_region
      %s118 = ssub.s32 4096, 4096
      %119 = vsyncadd [#allocation8], %s118
      %s120 = sshll.u32 [#allocation9], 4
      %s121 = int_to_ptr.vmem [resolvable:$true] %s120
      %126 = dma.hbm_to_vmem [thread:$0]  %s21, 4096, %s121, [#allocation8], 64, 64, 4
    $region89: #{dinov2_forward.1} parent=1 // pred_fallthru
      _
    // Predicated region
    $region90: #{dinov2_forward.1} parent=1 // pred_check
      _
    $region91: #{dinov2_forward.1} parent=1 // pred_check_branch
      %128 = sbr.rel (0) target = $region93
    $region92: #{dinov2_forward.1} parent=1 // pred_region
      _
    $region93: #{dinov2_forward.1} parent=1 // pred_fallthru
      _
    // Predicated region
    $region94: #{dinov2_forward.1} parent=1 // pred_check
      _
    $region95: #{dinov2_forward.1} parent=1 // pred_check_branch
      %130 = sbr.rel (0) target = $region97
    $region96: #{dinov2_forward.1} parent=1 // pred_region
      _
    $region97: #{dinov2_forward.1} parent=1 // pred_fallthru
      _
    // Predicated region
    $region98: #{dinov2_forward.1} parent=1 // pred_check
      _
    $region99: #{dinov2_forward.1} parent=1 // pred_check_branch
      %132 = sbr.rel (0) target = $region101
    $region100: #{dinov2_forward.1} parent=1 // pred_region
      _
    $region101: #{dinov2_forward.1} parent=1 // pred_fallthru
      _
    // Predicated region
    $region102: #{dinov2_forward.1} parent=1 // pred_check
      _
    $region103: #{dinov2_forward.1} parent=1 // pred_check_branch
      %134 = sbr.rel (0) target = $region105
    $region104: #{dinov2_forward.1} parent=1 // pred_region
      %135 = dma.done [#allocation3], 3072
    $region105: #{dinov2_forward.1} parent=1 // pred_fallthru
      _
    // Predicated region
    $region106: #{dinov2_forward.1} parent=1 // pred_check
      _
    $region107: #{dinov2_forward.1} parent=1 // pred_check_branch
      %137 = sbr.rel (0) target = $region109
    $region108: #{dinov2_forward.1} parent=1 // pred_region
      %138 = dma.done [#allocation5], 2048
    $region109: #{dinov2_forward.1} parent=1 // pred_fallthru
      _
    // Predicated region
    $region110: #{dinov2_forward.1} parent=1 // pred_check
      _
    $region111: #{dinov2_forward.1} parent=1 // pred_check_branch
      %140 = sbr.rel (0) target = $region113
    $region112: #{dinov2_forward.1} parent=1 // pred_region
      %141 = dma.done [#allocation5], 8192
    $region113: #{dinov2_forward.1} parent=1 // pred_fallthru
      _
    // Predicated region
    $region114: #{dinov2_forward.1} parent=1 // pred_check
      _
    $region115: #{dinov2_forward.1} parent=1 // pred_check_branch
      %143 = sbr.rel (0) target = $region117
    $region116: #{dinov2_forward.1} parent=1 // pred_region
      %144 = dma.done [#allocation8], 4096
    $region117: #{dinov2_forward.1} parent=1 // pred_fallthru
      _
    // Predicated region
    $region118: #{dinov2_forward.1} parent=1 // pred_check
      _
    $region119: #{dinov2_forward.1} parent=1 // pred_check_branch
      %146 = sbr.rel (0) target = $region121
    $region120: #{dinov2_forward.1} parent=1 // pred_region
      %147 = dma.done [#allocation8], 4096
    $region121: #{dinov2_forward.1} parent=1 // pred_fallthru
      _
    %v149 = vlaneseq
    %v150 = vand.u32 %v149, 127
    %vm151 = vcmp.ge.s32.totalorder %v150, 0
    %vm152 = vcmp.lt.s32.totalorder %v150, 64
    %vm153 = vmand %vm151, %vm152
    %v154 = vsel %vm153, 1, 0
    %v155 = vcvt.s32.f32 %v154
    %vm156 = vcmp.ge.s32.totalorder %v150, 64
    %vm157 = vcmp.lt.s32.totalorder %v150, 128
    %vm158 = vmand %vm156, %vm157
    %v159 = vsel %vm158, 1, 0
    %v160 = vcvt.s32.f32 %v159
    %v161 = vlaneseq
    %v162 = vshrl.u32 %v161, 7
    %v163 = vadd.s32 %v162, 8
    %v164 = vshra.s32 %v162, 3
    %v165 = vshra.s32 %v163, 3
    %v166 = vshra.s32 %v150, 3
    %vm167 = vcmp.eq.s32.totalorder %v164, %v166
    %vm168 = vcmp.eq.s32.totalorder %v165, %v166
    %v169 = vand.u32 %v150, 7
    %vm170 = vcmp.lt.s32.totalorder %v169, 5
    %vm171 = vmand %vm167, %vm170
    %vm172 = vmand %vm168, %vm170
    %v173 = vsel %vm171, 0.0, -1e+09
    %v174 = vsel %vm172, 0.0, -1e+09
    %v175 = vld [vmem:[%s0] sm:$0xff]
    %v176 = vld [vmem:[%s0 + $0x8] sm:$0xff]
    %v177 = vld [vmem:[%s0 + $0x10] sm:$0xff]
    %v178 = vld [vmem:[%s0 + $0x18] sm:$0xff]
    %v179 = vld [vmem:[#allocation2] sm:$0xff]
    %v180 = vld [vmem:[#allocation2 + $0x8] sm:$0xff]
    %v181 = vld [vmem:[#allocation2 + $0x10] sm:$0xff]
    %v182 = vld [vmem:[#allocation2 + $0x18] sm:$0xff]
    %v183 = vld [vmem:[#allocation2 + $0x20] sm:$0xff]
    %v184 = vld [vmem:[#allocation2 + $0x28] sm:$0xff]
    %v185 = vld [vmem:[#allocation2 + $0x30] sm:$0xff]
    %v186 = vld [vmem:[#allocation2 + $0x38] sm:$0xff]
    %v187 = vld [vmem:[#allocation2 + $0x40] sm:$0xff]
    %v188 = vld [vmem:[#allocation2 + $0x48] sm:$0xff]
    %v189 = vld [vmem:[#allocation2 + $0x50] sm:$0xff]
    %v190 = vld [vmem:[#allocation2 + $0x58] sm:$0xff]
    %v191 = vld [vmem:[#allocation2 + $0x60] sm:$0xff]
    %v192 = vld [vmem:[#allocation2 + $0x68] sm:$0xff]
    %v193 = vld [vmem:[#allocation2 + $0x70] sm:$0xff]
    %v194 = vld [vmem:[#allocation2 + $0x78] sm:$0xff]
    %v195 = vld [vmem:[#allocation2 + $0x80] sm:$0xff]
    %v196 = vld [vmem:[#allocation2 + $0x88] sm:$0xff]
    %v197 = vld [vmem:[#allocation2 + $0x90] sm:$0xff]
    %v198 = vld [vmem:[#allocation2 + $0x98] sm:$0xff]
    %v199 = vld [vmem:[#allocation2 + $0xa0] sm:$0xff]
    %v200 = vld [vmem:[#allocation2 + $0xa8] sm:$0xff]
    %v201 = vld [vmem:[#allocation2 + $0xb0] sm:$0xff]
    %v202 = vld [vmem:[#allocation2 + $0xb8] sm:$0xff]
    %v203 = vld [vmem:[%s2] sm:$0xff]
    %v204 = vld [vmem:[%s2 + $0x8] sm:$0xff]
    %vm205 = vcmask 523264
    %v207 = vsel %vm205, %v176, 0
    %v210 = vsel %vm205, %v178, 0
    %212 = vmatprep.subr.mxu0 0.0
    %213 = vmatpush1.msra.mxu0 %v194
    %214 = vmatprep.subr.mxu0 0.0
    %215 = vmatpush1.msra.mxu0 %v193
    %216 = vmatprep.subr.mxu0 0.0
    %217 = vmatpush1.msra.mxu0 %v192
    %218 = vmatprep.subr.mxu0 0.0
    %219 = vmatpush1.msra.mxu0 %v191
    %220 = vmatprep.subr.mxu0 0.0
    %221 = vmatpush1.msra.mxu0 %v190
    %222 = vmatprep.subr.mxu0 0.0
    %223 = vmatpush1.msra.mxu0 %v189
    %224 = vmatprep.subr.mxu0 0.0
    %225 = vmatpush1.msra.mxu0 %v188
    %226 = vmatprep.subr.mxu0 0.0
    %227 = vmatpush1.msra.mxu0 %v187
    %228 = vmatprep.subr.mxu0 0.0
    %229 = vmatpush1.msra.mxu0 %v186
    %230 = vmatprep.subr.mxu0 0.0
    %231 = vmatpush1.msra.mxu0 %v185
    %232 = vmatprep.subr.mxu0 0.0
    %233 = vmatpush1.msra.mxu0 %v184
    %234 = vmatprep.subr.mxu0 0.0
    %235 = vmatpush1.msra.mxu0 %v183
    %236 = vmatprep.subr.mxu0 0.0
    %237 = vmatpush1.msra.mxu0 %v182
    %238 = vmatprep.subr.mxu0 0.0
    %239 = vmatpush1.msra.mxu0 %v181
    %240 = vmatprep.subr.mxu0 0.0
    %241 = vmatpush1.msra.mxu0 %v180
    %242 = vmatprep.subr.mxu0 0.0
    %243 = vmatpush1.msra.mxu0 %v179
    %244 = vmatprep.subr.mxu0 0.0
    %245 = vmatpush2.msra.mxu0 0.0
    %246 = vmatprep.subr.mxu0 0.0
    %247 = vmatpush2.msra.mxu0 0.0
    %248 = vmatprep.subr.mxu0 0.0
    %249 = vmatpush2.msra.mxu0 0.0
    %250 = vmatprep.subr.mxu0 0.0
    %251 = vmatpush2.msra.mxu0 0.0
    %252 = vmatprep.subr.mxu0 0.0
    %253 = vmatpush2.msra.mxu0 0.0
    %254 = vmatprep.subr.mxu0 0.0
    %255 = vmatpush2.msra.mxu0 0.0
    %256 = vmatprep.subr.mxu0 0.0
    %257 = vmatpush2.msra.mxu0 0.0
    %258 = vmatprep.subr.mxu0 0.0
    %259 = vmatpush2.msra.mxu0 0.0
    %260 = vmatprep.subr.mxu0 0.0
    %261 = vmatpush2.msra.mxu0 %v202
    %262 = vmatprep.subr.mxu0 0.0
    %263 = vmatpush2.msra.mxu0 %v201
    %264 = vmatprep.subr.mxu0 0.0
    %265 = vmatpush2.msra.mxu0 %v200
    %266 = vmatprep.subr.mxu0 0.0
    %267 = vmatpush2.msra.mxu0 %v199
    %268 = vmatprep.subr.mxu0 0.0
    %269 = vmatpush2.msra.mxu0 %v198
    %270 = vmatprep.subr.mxu0 0.0
    %271 = vmatpush2.msra.mxu0 %v197
    %272 = vmatprep.subr.mxu0 0.0
    %273 = vmatpush2.msra.mxu0 %v196
    %274 = vmatprep.subr.mxu0 0.0
    %275 = vmatpush2.msra.mxu0 %v195
    %276 = vmatprep.mubr.f32.mxu0 %v207
    %277 = vmatmul.mubr.f32.gmra.mxu0 %v175
    %v278 = vpop.f32.mrf.mxu0
    %v279 = vadd.f32 %v203, %v278
    %v280 = vpop.f32.mrf.mxu0
    %281 = vmatprep.mubr.f32.mxu0 %v210
    %282 = vmatmul.mubr.f32.gmra.mxu0 %v177
    %v283 = vpop.f32.mrf.mxu0
    %v284 = vadd.f32 %v204, %v283
    %v285 = vpop.f32.mrf.mxu0
    %286 = vdwg.mxu0
    %v287 = vld [vmem:[%s3] sm:$0x1]
    %v288 = vld [vmem:[%s4] sm:$0x1]
    %289 = vadd.xlane.f32.xlu0 %v279
    %v290 = vpop.xlane.xlu0 %289
    %291 = vadd.xlane.f32.xlu0 %v284
    %v292 = vpop.xlane.xlu0 %291
    %v293 = vrcp.pop 128.0
    %v294 = vmul.f32 %v290, %v293
    %v295 = vmul.f32 %v292, %v293
    %v296 = vsub.f32 %v279, %v294
    %v297 = vsub.f32 %v284, %v295
    %v298 = vmul.f32 %v296, %v296
    %v299 = vmul.f32 %v297, %v297
    %300 = vadd.xlane.f32.xlu0 %v298
    %v301 = vpop.xlane.xlu0 %300
    %302 = vadd.xlane.f32.xlu0 %v299
    %v303 = vpop.xlane.xlu0 %302
    %v304 = vmul.f32 %v301, %v293
    %v305 = vmul.f32 %v303, %v293
    %v306 = vadd.f32 %v304, 1e-06
    %v307 = vadd.f32 %v305, 1e-06
    %v308 = vrsqrt.pop %v306
    %v309 = vrsqrt.pop %v307
    %v310 = vmul.f32 %v296, %v308
    %v311 = vmul.f32 %v297, %v309
    %v312 = vlaneseq
    %v313 = vshrl.u32 %v312, 7
    %v314 = vsub.s32 0, %v313
    %v315 = vrot.slane %v287, %v314
    %v316 = vmul.f32 %v310, %v315
    %v317 = vmul.f32 %v311, %v315
    %v318 = vlaneseq
    %v319 = vshrl.u32 %v318, 7
    %v320 = vsub.s32 0, %v319
    %v321 = vrot.slane %v288, %v320
    %v322 = vadd.f32 %v316, %v321
    %v323 = vadd.f32 %v317, %v321
    %v324 = vpack.c.bf16 %v323, %v322
    %v325 = vld [vmem:[%s5] sm:$0xff]
    %v326 = vld [vmem:[%s5 + $0x8] sm:$0xf]
    %v327 = vld [vmem:[%s5 + $0xc] sm:$0xff]
    %v328 = vld [vmem:[%s5 + $0x14] sm:$0xf]
    %v329 = vld [vmem:[%s5 + $0x18] sm:$0xff]
    %v330 = vld [vmem:[%s5 + $0x20] sm:$0xf]
    %v331 = vld [vmem:[%s5 + $0x24] sm:$0xff]
    %v332 = vld [vmem:[%s5 + $0x2c] sm:$0xf]
    %v333 = vld [vmem:[%s5 + $0x30] sm:$0xff]
    %v334 = vld [vmem:[%s5 + $0x38] sm:$0xf]
    %v335 = vld [vmem:[%s5 + $0x3c] sm:$0xff]
    %v336 = vld [vmem:[%s5 + $0x44] sm:$0xf]
    %v337 = vld [vmem:[%s5 + $0x48] sm:$0xff]
    %v338 = vld [vmem:[%s5 + $0x50] sm:$0xf]
    %v339 = vld [vmem:[%s5 + $0x54] sm:$0xff]
    %v340 = vld [vmem:[%s5 + $0x5c] sm:$0xf]
    %v341 = vld [vmem:[%s5 + $0x60] sm:$0xff]
    %v342 = vld [vmem:[%s5 + $0x68] sm:$0xf]
    %v343 = vld [vmem:[%s5 + $0x6c] sm:$0xff]
    %v344 = vld [vmem:[%s5 + $0x74] sm:$0xf]
    %v345 = vld [vmem:[%s5 + $0x78] sm:$0xff]
    %v346 = vld [vmem:[%s5 + $0x80] sm:$0xf]
    %v347 = vld [vmem:[%s5 + $0x84] sm:$0xff]
    %v348 = vld [vmem:[%s5 + $0x8c] sm:$0xf]
    %v349 = vld [vmem:[%s5 + $0x90] sm:$0xff]
    %v350 = vld [vmem:[%s5 + $0x98] sm:$0xf]
    %v351 = vld [vmem:[%s5 + $0x9c] sm:$0xff]
    %v352 = vld [vmem:[%s5 + $0xa4] sm:$0xf]
    %v353 = vld [vmem:[%s5 + $0xa8] sm:$0xff]
    %v354 = vld [vmem:[%s5 + $0xb0] sm:$0xf]
    %v355 = vld [vmem:[%s5 + $0xb4] sm:$0xff]
    %v356 = vld [vmem:[%s5 + $0xbc] sm:$0xf]
    %v357 = vld [vmem:[%s6] ss:$2 sm:$0x7]
    %v359 = vlaneseq
    %v360 = vshrl.u32 %v359, 7
    %v361 = vsub.s32 0, %v360
    %v362 = vrot.slane %v357, %v361
    %v363 = vlaneseq
    %v364 = vshrl.u32 %v363, 7
    %v365 = vsub.s32 1, %v364
    %v366 = vrot.slane %v357, %v365
    %v367 = vlaneseq
    %v368 = vshrl.u32 %v367, 7
    %v369 = vsub.s32 2, %v368
    %v370 = vrot.slane %v357, %v369
    %v406 = vunpack.c.l.b16 %v325
    %v407 = vunpack.c.h.b16 %v325
    %v408 = vunpack.c.l.b16 %v326
    %v409 = vunpack.c.l.b16 %v327
    %v410 = vunpack.c.h.b16 %v327
    %v411 = vunpack.c.l.b16 %v328
    %v412 = vunpack.c.l.b16 %v329
    %v413 = vunpack.c.h.b16 %v329
    %v414 = vunpack.c.l.b16 %v330
    %v415 = vunpack.c.l.b16 %v331
    %v416 = vunpack.c.h.b16 %v331
    %v417 = vunpack.c.l.b16 %v332
    %v418 = vunpack.c.l.b16 %v333
    %v419 = vunpack.c.h.b16 %v333
    %v420 = vunpack.c.l.b16 %v334
    %v421 = vunpack.c.l.b16 %v335
    %v422 = vunpack.c.h.b16 %v335
    %v423 = vunpack.c.l.b16 %v336
    %v424 = vunpack.c.l.b16 %v337
    %v425 = vunpack.c.h.b16 %v337
    %v426 = vunpack.c.l.b16 %v338
    %v427 = vunpack.c.l.b16 %v339
    %v428 = vunpack.c.h.b16 %v339
    %v429 = vunpack.c.l.b16 %v340
    %v430 = vunpack.c.l.b16 %v341
    %v431 = vunpack.c.h.b16 %v341
    %v432 = vunpack.c.l.b16 %v342
    %v433 = vunpack.c.l.b16 %v343
    %v434 = vunpack.c.h.b16 %v343
    %v435 = vunpack.c.l.b16 %v344
    %v436 = vunpack.c.l.b16 %v345
    %v437 = vunpack.c.h.b16 %v345
    %v438 = vunpack.c.l.b16 %v346
    %v439 = vunpack.c.l.b16 %v347
    %v440 = vunpack.c.h.b16 %v347
    %v441 = vunpack.c.l.b16 %v348
    %v442 = vunpack.c.l.b16 %v349
    %v443 = vunpack.c.h.b16 %v349
    %v444 = vunpack.c.l.b16 %v350
    %v445 = vunpack.c.l.b16 %v351
    %v446 = vunpack.c.h.b16 %v351
    %v447 = vunpack.c.l.b16 %v352
    %v448 = vunpack.c.l.b16 %v353
    %v449 = vunpack.c.h.b16 %v353
    %v450 = vunpack.c.l.b16 %v354
    %v451 = vunpack.c.l.b16 %v355
    %v452 = vunpack.c.h.b16 %v355
    %v453 = vunpack.c.l.b16 %v356
    %v454 = vpack.c.b16 %v409, %v406
    %v455 = vpack.c.b16 %v410, %v407
    %v456 = vpack.c.b16 %v411, %v408
    %v457 = vpack.c.b16 %v415, %v412
    %v458 = vpack.c.b16 %v416, %v413
    %v459 = vpack.c.b16 %v417, %v414
    %v460 = vpack.c.b16 %v421, %v418
    %v461 = vpack.c.b16 %v422, %v419
    %v462 = vpack.c.b16 %v423, %v420
    %v463 = vpack.c.b16 %v427, %v424
    %v464 = vpack.c.b16 %v428, %v425
    %v465 = vpack.c.b16 %v429, %v426
    %v466 = vpack.c.b16 %v433, %v430
    %v467 = vpack.c.b16 %v434, %v431
    %v468 = vpack.c.b16 %v435, %v432
    %v469 = vpack.c.b16 %v439, %v436
    %v470 = vpack.c.b16 %v440, %v437
    %v471 = vpack.c.b16 %v441, %v438
    %v472 = vpack.c.b16 %v445, %v442
    %v473 = vpack.c.b16 %v446, %v443
    %v474 = vpack.c.b16 %v447, %v444
    %v475 = vpack.c.b16 %v451, %v448
    %v476 = vpack.c.b16 %v452, %v449
    %v477 = vpack.c.b16 %v453, %v450
    %502 = vmatprep.subr.bf16.mxu0 %v476
    %503 = vmatpush1.bf16.msra.mxu0 %v475
    %504 = vmatprep.subr.bf16.mxu0 %v473
    %505 = vmatpush1.bf16.msra.mxu0 %v472
    %506 = vmatprep.subr.bf16.mxu0 %v470
    %507 = vmatpush1.bf16.msra.mxu0 %v469
    %508 = vmatprep.subr.bf16.mxu0 %v467
    %509 = vmatpush1.bf16.msra.mxu0 %v466
    %510 = vmatprep.subr.bf16.mxu0 %v464
    %511 = vmatpush1.bf16.msra.mxu0 %v463
    %512 = vmatprep.subr.bf16.mxu0 %v461
    %513 = vmatpush1.bf16.msra.mxu0 %v460
    %514 = vmatprep.subr.bf16.mxu0 %v458
    %515 = vmatpush1.bf16.msra.mxu0 %v457
    %516 = vmatprep.subr.bf16.mxu0 %v455
    %517 = vmatpush1.bf16.msra.mxu0 %v454
    %518 = vmatprep.subr.bf16.mxu0 0
    %519 = vmatpush2.bf16.msra.mxu0 0
    %520 = vmatprep.subr.bf16.mxu0 0
    %521 = vmatpush2.bf16.msra.mxu0 0
    %522 = vmatprep.subr.bf16.mxu0 0
    %523 = vmatpush2.bf16.msra.mxu0 0
    %524 = vmatprep.subr.bf16.mxu0 0
    %525 = vmatpush2.bf16.msra.mxu0 0
    %526 = vmatprep.subr.bf16.mxu0 0
    %527 = vmatpush2.bf16.msra.mxu0 0
    %528 = vmatprep.subr.bf16.mxu0 0
    %529 = vmatpush2.bf16.msra.mxu0 0
    %530 = vmatprep.subr.bf16.mxu0 0
    %531 = vmatpush2.bf16.msra.mxu0 0
    %532 = vmatprep.subr.bf16.mxu0 0
    %533 = vmatpush2.bf16.msra.mxu0 0
    %534 = vmatprep.mubr.bf16.mxu0 0
    %535 = vmatmul.mubr.bf16.gmra.mxu0 %v324
    %v536 = vpop.f32.mrf.mxu0
    %v537 = vadd.f32 %v362, %v536
    %v538 = vpop.f32.mrf.mxu0
    %v539 = vadd.f32 %v366, %v538
    %v540 = vpop.f32.mrf.mxu0
    %v541 = vadd.f32 %v362, %v540
    %v542 = vpop.f32.mrf.mxu0
    %v543 = vadd.f32 %v366, %v542
    %544 = vdwg.mxu0
    %545 = vmatprep.subr.bf16.mxu0 0
    %546 = vmatpush1.bf16.msra.mxu0 %v477
    %547 = vmatprep.subr.bf16.mxu0 0
    %548 = vmatpush1.bf16.msra.mxu0 %v474
    %549 = vmatprep.subr.bf16.mxu0 0
    %550 = vmatpush1.bf16.msra.mxu0 %v471
    %551 = vmatprep.subr.bf16.mxu0 0
    %552 = vmatpush1.bf16.msra.mxu0 %v468
    %553 = vmatprep.subr.bf16.mxu0 0
    %554 = vmatpush1.bf16.msra.mxu0 %v465
    %555 = vmatprep.subr.bf16.mxu0 0
    %556 = vmatpush1.bf16.msra.mxu0 %v462
    %557 = vmatprep.subr.bf16.mxu0 0
    %558 = vmatpush1.bf16.msra.mxu0 %v459
    %559 = vmatprep.subr.bf16.mxu0 0
    %560 = vmatpush1.bf16.msra.mxu0 %v456
    %561 = vmatprep.subr.bf16.mxu0 0
    %562 = vmatpush2.bf16.msra.mxu0 0
    %563 = vmatprep.subr.bf16.mxu0 0
    %564 = vmatpush2.bf16.msra.mxu0 0
    %565 = vmatprep.subr.bf16.mxu0 0
    %566 = vmatpush2.bf16.msra.mxu0 0
    %567 = vmatprep.subr.bf16.mxu0 0
    %568 = vmatpush2.bf16.msra.mxu0 0
    %569 = vmatprep.subr.bf16.mxu0 0
    %570 = vmatpush2.bf16.msra.mxu0 0
    %571 = vmatprep.subr.bf16.mxu0 0
    %572 = vmatpush2.bf16.msra.mxu0 0
    %573 = vmatprep.subr.bf16.mxu0 0
    %574 = vmatpush2.bf16.msra.mxu0 0
    %575 = vmatprep.subr.bf16.mxu0 0
    %576 = vmatpush2.bf16.msra.mxu0 0
    %577 = vmatprep.mubr.bf16.mxu0 0
    %578 = vmatmul.mubr.bf16.gmra.mxu0 %v324
    %v579 = vpop.f32.mrf.mxu0
    %v580 = vadd.f32 %v370, %v579
    %v581 = vpop.f32.mrf.mxu0
    %v582 = vpop.f32.mrf.mxu0
    %v583 = vadd.f32 %v370, %v582
    %v584 = vpop.f32.mrf.mxu0
    %585 = vdwg.mxu0
    %v586 = vmul.f32 %v537, 0.125
    %v587 = vmul.f32 %v541, 0.125
    %v588 = vmul.f32 %v586, %v155
    %v589 = vmul.f32 %v587, %v155
    %590 = vmatprep.subr.mxu0 0.0
    %591 = vmatpush1.xpose.msra.mxu0 0.0
    %592 = vmatprep.subr.mxu0 0.0
    %593 = vmatpush1.xpose.msra.mxu0 0.0
    %594 = vmatprep.subr.mxu0 0.0
    %595 = vmatpush1.xpose.msra.mxu0 0.0
    %596 = vmatprep.subr.mxu0 0.0
    %597 = vmatpush1.xpose.msra.mxu0 0.0
    %598 = vmatprep.subr.mxu0 0.0
    %599 = vmatpush1.xpose.msra.mxu0 0.0
    %600 = vmatprep.subr.mxu0 0.0
    %601 = vmatpush1.xpose.msra.mxu0 0.0
    %602 = vmatprep.subr.mxu0 0.0
    %603 = vmatpush1.xpose.msra.mxu0 0.0
    %604 = vmatprep.subr.mxu0 0.0
    %605 = vmatpush1.xpose.msra.mxu0 0.0
    %606 = vmatprep.subr.mxu0 0.0
    %607 = vmatpush1.xpose.msra.mxu0 0.0
    %608 = vmatprep.subr.mxu0 0.0
    %609 = vmatpush1.xpose.msra.mxu0 0.0
    %610 = vmatprep.subr.mxu0 0.0
    %611 = vmatpush1.xpose.msra.mxu0 0.0
    %612 = vmatprep.subr.mxu0 0.0
    %613 = vmatpush1.xpose.msra.mxu0 0.0
    %614 = vmatprep.subr.mxu0 0.0
    %615 = vmatpush1.xpose.msra.mxu0 0.0
    %616 = vmatprep.subr.mxu0 0.0
    %617 = vmatpush1.xpose.msra.mxu0 0.0
    %618 = vmatprep.subr.mxu0 0.0
    %619 = vmatpush1.xpose.msra.mxu0 %v543
    %620 = vmatprep.subr.mxu0 0.0
    %621 = vmatpush1.xpose.msra.mxu0 %v539
    %622 = vmatprep.subr.mxu0 0.0
    %623 = vmatpush2.xpose.msra.mxu0 0.0
    %624 = vmatprep.subr.mxu0 0.0
    %625 = vmatpush2.xpose.msra.mxu0 0.0
    %626 = vmatprep.subr.mxu0 0.0
    %627 = vmatpush2.xpose.msra.mxu0 0.0
    %628 = vmatprep.subr.mxu0 0.0
    %629 = vmatpush2.xpose.msra.mxu0 0.0
    %630 = vmatprep.subr.mxu0 0.0
    %631 = vmatpush2.xpose.msra.mxu0 0.0
    %632 = vmatprep.subr.mxu0 0.0
    %633 = vmatpush2.xpose.msra.mxu0 0.0
    %634 = vmatprep.subr.mxu0 0.0
    %635 = vmatpush2.xpose.msra.mxu0 0.0
    %636 = vmatprep.subr.mxu0 0.0
    %637 = vmatpush2.xpose.msra.mxu0 0.0
    %638 = vmatprep.subr.mxu0 0.0
    %639 = vmatpush2.xpose.msra.mxu0 0.0
    %640 = vmatprep.subr.mxu0 0.0
    %641 = vmatpush2.xpose.msra.mxu0 0.0
    %642 = vmatprep.subr.mxu0 0.0
    %643 = vmatpush2.xpose.msra.mxu0 0.0
    %644 = vmatprep.subr.mxu0 0.0
    %645 = vmatpush2.xpose.msra.mxu0 0.0
    %646 = vmatprep.subr.mxu0 0.0
    %647 = vmatpush2.xpose.msra.mxu0 0.0
    %648 = vmatprep.subr.mxu0 0.0
    %649 = vmatpush2.xpose.msra.mxu0 0.0
    %650 = vmatprep.subr.mxu0 0.0
    %651 = vmatpush2.xpose.msra.mxu0 0.0
    %652 = vmatprep.subr.mxu0 0.0
    %653 = vmatpush2.xpose.msra.mxu0 0.0
    %654 = vmatprep.mubr.f32.mxu0 0.0
    %655 = vmatmul.mubr.f32.gmra.mxu0 %v588
    %v656 = vpop.f32.mrf.mxu0
    %v657 = vadd.f32 %v173, %v656
    %v658 = vpop.f32.mrf.mxu0
    %659 = vmatprep.mubr.f32.mxu0 0.0
    %660 = vmatmul.mubr.f32.gmra.mxu0 %v589
    %v661 = vpop.f32.mrf.mxu0
    %v662 = vadd.f32 %v174, %v661
    %v663 = vpop.f32.mrf.mxu0
    %664 = vdwg.mxu0
    %vm665 = vcmask 130048
    %v666 = vsel %vm665, %v657, -inf
    %667 = vmax.xlane.f32.xlu0 %v666
    %v668 = vpop.xlane.xlu0 %667
    %v669 = vsel %vm665, %v662, -inf
    %670 = vmax.xlane.f32.xlu0 %v669
    %v671 = vpop.xlane.xlu0 %670
    %v672 = vsub.f32 %v657, %v668
    %v673 = vsub.f32 %v662, %v671
    %v674 = vmul.f32 %v672, 1.442695
    %v675 = vpow.pop %v674
    %v676 = vmul.f32 %v673, 1.442695
    %v677 = vpow.pop %v676
    %v678 = vsel %vm665, %v675, 0.0
    %679 = vadd.xlane.f32.xlu0 %v678
    %v680 = vpop.xlane.xlu0 %679
    %v681 = vsel %vm665, %v677, 0.0
    %682 = vadd.xlane.f32.xlu0 %v681
    %v683 = vpop.xlane.xlu0 %682
    %v684 = vrcp.pop %v680
    %v685 = vrcp.pop %v683
    %v686 = vmul.f32 %v675, %v684
    %v687 = vmul.f32 %v677, %v685
    %v688 = vmul.f32 %v580, %v155
    %v689 = vmul.f32 %v583, %v155
    %v690 = vmul.f32 %v586, %v160
    %v691 = vmul.f32 %v587, %v160
    %692 = vmatprep.subr.mxu0 0.0
    %693 = vmatpush1.xpose.msra.mxu0 0.0
    %694 = vmatprep.subr.mxu0 0.0
    %695 = vmatpush1.xpose.msra.mxu0 0.0
    %696 = vmatprep.subr.mxu0 0.0
    %697 = vmatpush1.xpose.msra.mxu0 0.0
    %698 = vmatprep.subr.mxu0 0.0
    %699 = vmatpush1.xpose.msra.mxu0 0.0
    %700 = vmatprep.subr.mxu0 0.0
    %701 = vmatpush1.xpose.msra.mxu0 0.0
    %702 = vmatprep.subr.mxu0 0.0
    %703 = vmatpush1.xpose.msra.mxu0 0.0
    %704 = vmatprep.subr.mxu0 0.0
    %705 = vmatpush1.xpose.msra.mxu0 0.0
    %706 = vmatprep.subr.mxu0 0.0
    %707 = vmatpush1.xpose.msra.mxu0 0.0
    %708 = vmatprep.subr.mxu0 0.0
    %709 = vmatpush1.xpose.msra.mxu0 0.0
    %710 = vmatprep.subr.mxu0 0.0
    %711 = vmatpush1.xpose.msra.mxu0 0.0
    %712 = vmatprep.subr.mxu0 0.0
    %713 = vmatpush1.xpose.msra.mxu0 0.0
    %714 = vmatprep.subr.mxu0 0.0
    %715 = vmatpush1.xpose.msra.mxu0 0.0
    %716 = vmatprep.subr.mxu0 0.0
    %717 = vmatpush1.xpose.msra.mxu0 0.0
    %718 = vmatprep.subr.mxu0 0.0
    %719 = vmatpush1.xpose.msra.mxu0 0.0
    %720 = vmatprep.subr.mxu0 0.0
    %721 = vmatpush1.xpose.msra.mxu0 %v543
    %722 = vmatprep.subr.mxu0 0.0
    %723 = vmatpush1.xpose.msra.mxu0 %v539
    %724 = vmatprep.subr.mxu0 0.0
    %725 = vmatpush2.xpose.msra.mxu0 0.0
    %726 = vmatprep.subr.mxu0 0.0
    %727 = vmatpush2.xpose.msra.mxu0 0.0
    %728 = vmatprep.subr.mxu0 0.0
    %729 = vmatpush2.xpose.msra.mxu0 0.0
    %730 = vmatprep.subr.mxu0 0.0
    %731 = vmatpush2.xpose.msra.mxu0 0.0
    %732 = vmatprep.subr.mxu0 0.0
    %733 = vmatpush2.xpose.msra.mxu0 0.0
    %734 = vmatprep.subr.mxu0 0.0
    %735 = vmatpush2.xpose.msra.mxu0 0.0
    %736 = vmatprep.subr.mxu0 0.0
    %737 = vmatpush2.xpose.msra.mxu0 0.0
    %738 = vmatprep.subr.mxu0 0.0
    %739 = vmatpush2.xpose.msra.mxu0 0.0
    %740 = vmatprep.subr.mxu0 0.0
    %741 = vmatpush2.xpose.msra.mxu0 0.0
    %742 = vmatprep.subr.mxu0 0.0
    %743 = vmatpush2.xpose.msra.mxu0 0.0
    %744 = vmatprep.subr.mxu0 0.0
    %745 = vmatpush2.xpose.msra.mxu0 0.0
    %746 = vmatprep.subr.mxu0 0.0
    %747 = vmatpush2.xpose.msra.mxu0 0.0
    %748 = vmatprep.subr.mxu0 0.0
    %749 = vmatpush2.xpose.msra.mxu0 0.0
    %750 = vmatprep.subr.mxu0 0.0
    %751 = vmatpush2.xpose.msra.mxu0 0.0
    %752 = vmatprep.subr.mxu0 0.0
    %753 = vmatpush2.xpose.msra.mxu0 0.0
    %754 = vmatprep.subr.mxu0 0.0
    %755 = vmatpush2.xpose.msra.mxu0 0.0
    %756 = vmatprep.mubr.f32.mxu0 0.0
    %757 = vmatmul.mubr.f32.gmra.mxu0 %v690
    %v758 = vpop.f32.mrf.mxu0
    %v759 = vadd.f32 %v173, %v758
    %v760 = vpop.f32.mrf.mxu0
    %761 = vmatprep.mubr.f32.mxu0 0.0
    %762 = vmatmul.mubr.f32.gmra.mxu0 %v691
    %v763 = vpop.f32.mrf.mxu0
    %v764 = vadd.f32 %v174, %v763
    %v765 = vpop.f32.mrf.mxu0
    %766 = vdwg.mxu0
    %v767 = vsel %vm665, %v759, -inf
    %768 = vmax.xlane.f32.xlu0 %v767
    %v769 = vpop.xlane.xlu0 %768
    %v770 = vsel %vm665, %v764, -inf
    %771 = vmax.xlane.f32.xlu0 %v770
    %v772 = vpop.xlane.xlu0 %771
    %v773 = vsub.f32 %v759, %v769
    %v774 = vsub.f32 %v764, %v772
    %v775 = vmul.f32 %v773, 1.442695
    %v776 = vpow.pop %v775
    %v777 = vmul.f32 %v774, 1.442695
    %v778 = vpow.pop %v777
    %v779 = vsel %vm665, %v776, 0.0
    %780 = vadd.xlane.f32.xlu0 %v779
    %v781 = vpop.xlane.xlu0 %780
    %v782 = vsel %vm665, %v778, 0.0
    %783 = vadd.xlane.f32.xlu0 %v782
    %v784 = vpop.xlane.xlu0 %783
    %v785 = vrcp.pop %v781
    %v786 = vrcp.pop %v784
    %v787 = vmul.f32 %v776, %v785
    %v788 = vmul.f32 %v778, %v786
    %v789 = vmul.f32 %v580, %v160
    %v790 = vmul.f32 %v583, %v160
    %v792 = vsel %vm665, %v787, 0
    %v795 = vsel %vm665, %v788, 0
    %797 = vmatprep.subr.mxu0 0.0
    %798 = vmatpush1.msra.mxu0 0.0
    %799 = vmatprep.subr.mxu0 0.0
    %800 = vmatpush1.msra.mxu0 0.0
    %801 = vmatprep.subr.mxu0 0.0
    %802 = vmatpush1.msra.mxu0 0.0
    %803 = vmatprep.subr.mxu0 0.0
    %804 = vmatpush1.msra.mxu0 0.0
    %805 = vmatprep.subr.mxu0 0.0
    %806 = vmatpush1.msra.mxu0 0.0
    %807 = vmatprep.subr.mxu0 0.0
    %808 = vmatpush1.msra.mxu0 0.0
    %809 = vmatprep.subr.mxu0 0.0
    %810 = vmatpush1.msra.mxu0 0.0
    %811 = vmatprep.subr.mxu0 0.0
    %812 = vmatpush1.msra.mxu0 0.0
    %813 = vmatprep.subr.mxu0 0.0
    %814 = vmatpush1.msra.mxu0 0.0
    %815 = vmatprep.subr.mxu0 0.0
    %816 = vmatpush1.msra.mxu0 0.0
    %817 = vmatprep.subr.mxu0 0.0
    %818 = vmatpush1.msra.mxu0 0.0
    %819 = vmatprep.subr.mxu0 0.0
    %820 = vmatpush1.msra.mxu0 0.0
    %821 = vmatprep.subr.mxu0 0.0
    %822 = vmatpush1.msra.mxu0 0.0
    %823 = vmatprep.subr.mxu0 0.0
    %824 = vmatpush1.msra.mxu0 0.0
    %825 = vmatprep.subr.mxu0 0.0
    %826 = vmatpush1.msra.mxu0 %v790
    %827 = vmatprep.subr.mxu0 0.0
    %828 = vmatpush1.msra.mxu0 %v789
    %829 = vmatprep.subr.mxu0 0.0
    %830 = vmatpush2.msra.mxu0 0.0
    %831 = vmatprep.subr.mxu0 0.0
    %832 = vmatpush2.msra.mxu0 0.0
    %833 = vmatprep.subr.mxu0 0.0
    %834 = vmatpush2.msra.mxu0 0.0
    %835 = vmatprep.subr.mxu0 0.0
    %836 = vmatpush2.msra.mxu0 0.0
    %837 = vmatprep.subr.mxu0 0.0
    %838 = vmatpush2.msra.mxu0 0.0
    %839 = vmatprep.subr.mxu0 0.0
    %840 = vmatpush2.msra.mxu0 0.0
    %841 = vmatprep.subr.mxu0 0.0
    %842 = vmatpush2.msra.mxu0 0.0
    %843 = vmatprep.subr.mxu0 0.0
    %844 = vmatpush2.msra.mxu0 0.0
    %845 = vmatprep.subr.mxu0 0.0
    %846 = vmatpush2.msra.mxu0 0.0
    %847 = vmatprep.subr.mxu0 0.0
    %848 = vmatpush2.msra.mxu0 0.0
    %849 = vmatprep.subr.mxu0 0.0
    %850 = vmatpush2.msra.mxu0 0.0
    %851 = vmatprep.subr.mxu0 0.0
    %852 = vmatpush2.msra.mxu0 0.0
    %853 = vmatprep.subr.mxu0 0.0
    %854 = vmatpush2.msra.mxu0 0.0
    %855 = vmatprep.subr.mxu0 0.0
    %856 = vmatpush2.msra.mxu0 0.0
    %857 = vmatprep.subr.mxu0 0.0
    %858 = vmatpush2.msra.mxu0 0.0
    %859 = vmatprep.subr.mxu0 0.0
    %860 = vmatpush2.msra.mxu0 0.0
    %861 = vmatprep.mubr.f32.mxu0 0.0
    %862 = vmatmul.mubr.f32.gmra.mxu0 %v792
    %v863 = vpop.f32.mrf.mxu0
    %v864 = vadd.f32 0.0, %v863
    %v865 = vpop.f32.mrf.mxu0
    %866 = vmatprep.mubr.f32.mxu0 0.0
    %867 = vmatmul.mubr.f32.gmra.mxu0 %v795
    %v868 = vpop.f32.mrf.mxu0
    %v869 = vadd.f32 0.0, %v868
    %v870 = vpop.f32.mrf.mxu0
    %871 = vdwg.mxu0
    %v873 = vsel %vm665, %v686, 0
    %v876 = vsel %vm665, %v687, 0
    %878 = vmatprep.subr.mxu0 0.0
    %879 = vmatpush1.msra.mxu0 0.0
    %880 = vmatprep.subr.mxu0 0.0
    %881 = vmatpush1.msra.mxu0 0.0
    %882 = vmatprep.subr.mxu0 0.0
    %883 = vmatpush1.msra.mxu0 0.0
    %884 = vmatprep.subr.mxu0 0.0
    %885 = vmatpush1.msra.mxu0 0.0
    %886 = vmatprep.subr.mxu0 0.0
    %887 = vmatpush1.msra.mxu0 0.0
    %888 = vmatprep.subr.mxu0 0.0
    %889 = vmatpush1.msra.mxu0 0.0
    %890 = vmatprep.subr.mxu0 0.0
    %891 = vmatpush1.msra.mxu0 0.0
    %892 = vmatprep.subr.mxu0 0.0
    %893 = vmatpush1.msra.mxu0 0.0
    %894 = vmatprep.subr.mxu0 0.0
    %895 = vmatpush1.msra.mxu0 0.0
    %896 = vmatprep.subr.mxu0 0.0
    %897 = vmatpush1.msra.mxu0 0.0
    %898 = vmatprep.subr.mxu0 0.0
    %899 = vmatpush1.msra.mxu0 0.0
    %900 = vmatprep.subr.mxu0 0.0
    %901 = vmatpush1.msra.mxu0 0.0
    %902 = vmatprep.subr.mxu0 0.0
    %903 = vmatpush1.msra.mxu0 0.0
    %904 = vmatprep.subr.mxu0 0.0
    %905 = vmatpush1.msra.mxu0 0.0
    %906 = vmatprep.subr.mxu0 0.0
    %907 = vmatpush1.msra.mxu0 %v689
    %908 = vmatprep.subr.mxu0 0.0
    %909 = vmatpush1.msra.mxu0 %v688
    %910 = vmatprep.subr.mxu0 0.0
    %911 = vmatpush2.msra.mxu0 0.0
    %912 = vmatprep.subr.mxu0 0.0
    %913 = vmatpush2.msra.mxu0 0.0
    %914 = vmatprep.subr.mxu0 0.0
    %915 = vmatpush2.msra.mxu0 0.0
    %916 = vmatprep.subr.mxu0 0.0
    %917 = vmatpush2.msra.mxu0 0.0
    %918 = vmatprep.subr.mxu0 0.0
    %919 = vmatpush2.msra.mxu0 0.0
    %920 = vmatprep.subr.mxu0 0.0
    %921 = vmatpush2.msra.mxu0 0.0
    %922 = vmatprep.subr.mxu0 0.0
    %923 = vmatpush2.msra.mxu0 0.0
    %924 = vmatprep.subr.mxu0 0.0
    %925 = vmatpush2.msra.mxu0 0.0
    %926 = vmatprep.subr.mxu0 0.0
    %927 = vmatpush2.msra.mxu0 0.0
    %928 = vmatprep.subr.mxu0 0.0
    %929 = vmatpush2.msra.mxu0 0.0
    %930 = vmatprep.subr.mxu0 0.0
    %931 = vmatpush2.msra.mxu0 0.0
    %932 = vmatprep.subr.mxu0 0.0
    %933 = vmatpush2.msra.mxu0 0.0
    %934 = vmatprep.subr.mxu0 0.0
    %935 = vmatpush2.msra.mxu0 0.0
    %936 = vmatprep.subr.mxu0 0.0
    %937 = vmatpush2.msra.mxu0 0.0
    %938 = vmatprep.subr.mxu0 0.0
    %939 = vmatpush2.msra.mxu0 0.0
    %940 = vmatprep.subr.mxu0 0.0
    %941 = vmatpush2.msra.mxu0 0.0
    %942 = vmatprep.mubr.f32.mxu0 0.0
    %943 = vmatmul.mubr.f32.gmra.mxu0 %v873
    %v944 = vpop.f32.mrf.mxu0
    %v945 = vadd.f32 %v864, %v944
    %v946 = vpop.f32.mrf.mxu0
    %947 = vmatprep.mubr.f32.mxu0 0.0
    %948 = vmatmul.mubr.f32.gmra.mxu0 %v876
    %v949 = vpop.f32.mrf.mxu0
    %v950 = vadd.f32 %v869, %v949
    %v951 = vpop.f32.mrf.mxu0
    %952 = vdwg.mxu0
    %v953 = vpack.c.bf16 %v950, %v945
    %v954 = vld [vmem:[#allocation4] sm:$0xf]
    %v955 = vld [vmem:[#allocation4 + $0x4] sm:$0xf]
    %v956 = vld [vmem:[#allocation4 + $0x8] sm:$0xf]
    %v957 = vld [vmem:[#allocation4 + $0xc] sm:$0xf]
    %v958 = vld [vmem:[#allocation4 + $0x10] sm:$0xf]
    %v959 = vld [vmem:[#allocation4 + $0x14] sm:$0xf]
    %v960 = vld [vmem:[#allocation4 + $0x18] sm:$0xf]
    %v961 = vld [vmem:[#allocation4 + $0x1c] sm:$0xf]
    %v962 = vld [vmem:[#allocation4 + $0x20] sm:$0xf]
    %v963 = vld [vmem:[#allocation4 + $0x24] sm:$0xf]
    %v964 = vld [vmem:[#allocation4 + $0x28] sm:$0xf]
    %v965 = vld [vmem:[#allocation4 + $0x2c] sm:$0xf]
    %v966 = vld [vmem:[#allocation4 + $0x30] sm:$0xf]
    %v967 = vld [vmem:[#allocation4 + $0x34] sm:$0xf]
    %v968 = vld [vmem:[#allocation4 + $0x38] sm:$0xf]
    %v969 = vld [vmem:[#allocation4 + $0x3c] sm:$0xf]
    %v970 = vld [vmem:[%s8] sm:$0x1]
    %v971 = vlaneseq
    %v972 = vshrl.u32 %v971, 7
    %v973 = vsub.s32 0, %v972
    %v974 = vrot.slane %v970, %v973
    %v991 = vunpack.c.l.b16 %v954
    %v992 = vunpack.c.l.b16 %v955
    %v993 = vunpack.c.l.b16 %v956
    %v994 = vunpack.c.l.b16 %v957
    %v995 = vunpack.c.l.b16 %v958
    %v996 = vunpack.c.l.b16 %v959
    %v997 = vunpack.c.l.b16 %v960
    %v998 = vunpack.c.l.b16 %v961
    %v999 = vunpack.c.l.b16 %v962
    %v1000 = vunpack.c.l.b16 %v963
    %v1001 = vunpack.c.l.b16 %v964
    %v1002 = vunpack.c.l.b16 %v965
    %v1003 = vunpack.c.l.b16 %v966
    %v1004 = vunpack.c.l.b16 %v967
    %v1005 = vunpack.c.l.b16 %v968
    %v1006 = vunpack.c.l.b16 %v969
    %v1007 = vpack.c.b16 %v992, %v991
    %v1008 = vpack.c.b16 %v994, %v993
    %v1009 = vpack.c.b16 %v996, %v995
    %v1010 = vpack.c.b16 %v998, %v997
    %v1011 = vpack.c.b16 %v1000, %v999
    %v1012 = vpack.c.b16 %v1002, %v1001
    %v1013 = vpack.c.b16 %v1004, %v1003
    %v1014 = vpack.c.b16 %v1006, %v1005
    %1023 = vmatprep.subr.bf16.mxu0 0
    %1024 = vmatpush1.bf16.msra.mxu0 %v1014
    %1025 = vmatprep.subr.bf16.mxu0 0
    %1026 = vmatpush1.bf16.msra.mxu0 %v1013
    %1027 = vmatprep.subr.bf16.mxu0 0
    %1028 = vmatpush1.bf16.msra.mxu0 %v1012
    %1029 = vmatprep.subr.bf16.mxu0 0
    %1030 = vmatpush1.bf16.msra.mxu0 %v1011
    %1031 = vmatprep.subr.bf16.mxu0 0
    %1032 = vmatpush1.bf16.msra.mxu0 %v1010
    %1033 = vmatprep.subr.bf16.mxu0 0
    %1034 = vmatpush1.bf16.msra.mxu0 %v1009
    %1035 = vmatprep.subr.bf16.mxu0 0
    %1036 = vmatpush1.bf16.msra.mxu0 %v1008
    %1037 = vmatprep.subr.bf16.mxu0 0
    %1038 = vmatpush1.bf16.msra.mxu0 %v1007
    %1039 = vmatprep.subr.bf16.mxu0 0
    %1040 = vmatpush2.bf16.msra.mxu0 0
    %1041 = vmatprep.subr.bf16.mxu0 0
    %1042 = vmatpush2.bf16.msra.mxu0 0
    %1043 = vmatprep.subr.bf16.mxu0 0
    %1044 = vmatpush2.bf16.msra.mxu0 0
    %1045 = vmatprep.subr.bf16.mxu0 0
    %1046 = vmatpush2.bf16.msra.mxu0 0
    %1047 = vmatprep.subr.bf16.mxu0 0
    %1048 = vmatpush2.bf16.msra.mxu0 0
    %1049 = vmatprep.subr.bf16.mxu0 0
    %1050 = vmatpush2.bf16.msra.mxu0 0
    %1051 = vmatprep.subr.bf16.mxu0 0
    %1052 = vmatpush2.bf16.msra.mxu0 0
    %1053 = vmatprep.subr.bf16.mxu0 0
    %1054 = vmatpush2.bf16.msra.mxu0 0
    %1055 = vmatprep.mubr.bf16.mxu0 0
    %1056 = vmatmul.mubr.bf16.gmra.mxu0 %v953
    %v1057 = vpop.f32.mrf.mxu0
    %v1058 = vadd.f32 %v974, %v1057
    %v1059 = vpop.f32.mrf.mxu0
    %v1060 = vpop.f32.mrf.mxu0
    %v1061 = vadd.f32 %v974, %v1060
    %v1062 = vpop.f32.mrf.mxu0
    %1063 = vdwg.mxu0
    %v1064 = vld [vmem:[%s9] sm:$0x1]
    %v1065 = vlaneseq
    %v1066 = vshrl.u32 %v1065, 7
    %v1067 = vsub.s32 0, %v1066
    %v1068 = vrot.slane %v1064, %v1067
    %v1069 = vmul.f32 %v1068, %v1058
    %v1070 = vmul.f32 %v1068, %v1061
    %v1071 = vadd.f32 %v279, %v1069
    %v1072 = vadd.f32 %v284, %v1070
    %v1073 = vld [vmem:[%s10] sm:$0x1]
    %v1074 = vld [vmem:[%s11] sm:$0x1]
    %1075 = vadd.xlane.f32.xlu0 %v1071
    %v1076 = vpop.xlane.xlu0 %1075
    %1077 = vadd.xlane.f32.xlu0 %v1072
    %v1078 = vpop.xlane.xlu0 %1077
    %v1079 = vmul.f32 %v1076, %v293
    %v1080 = vmul.f32 %v1078, %v293
    %v1081 = vsub.f32 %v1071, %v1079
    %v1082 = vsub.f32 %v1072, %v1080
    %v1083 = vmul.f32 %v1081, %v1081
    %v1084 = vmul.f32 %v1082, %v1082
    %1085 = vadd.xlane.f32.xlu0 %v1083
    %v1086 = vpop.xlane.xlu0 %1085
    %1087 = vadd.xlane.f32.xlu0 %v1084
    %v1088 = vpop.xlane.xlu0 %1087
    %v1089 = vmul.f32 %v1086, %v293
    %v1090 = vmul.f32 %v1088, %v293
    %v1091 = vadd.f32 %v1089, 1e-06
    %v1092 = vadd.f32 %v1090, 1e-06
    %v1093 = vrsqrt.pop %v1091
    %v1094 = vrsqrt.pop %v1092
    %v1095 = vmul.f32 %v1081, %v1093
    %v1096 = vmul.f32 %v1082, %v1094
    %v1097 = vlaneseq
    %v1098 = vshrl.u32 %v1097, 7
    %v1099 = vsub.s32 0, %v1098
    %v1100 = vrot.slane %v1073, %v1099
    %v1101 = vmul.f32 %v1095, %v1100
    %v1102 = vmul.f32 %v1096, %v1100
    %v1103 = vlaneseq
    %v1104 = vshrl.u32 %v1103, 7
    %v1105 = vsub.s32 0, %v1104
    %v1106 = vrot.slane %v1074, %v1105
    %v1107 = vadd.f32 %v1101, %v1106
    %v1108 = vadd.f32 %v1102, %v1106
    %v1109 = vpack.c.bf16 %v1108, %v1107
    %v1110 = vld [vmem:[%s12] sm:$0xff]
    %v1111 = vld [vmem:[%s12 + $0x8] sm:$0xff]
    %v1112 = vld [vmem:[%s12 + $0x10] sm:$0xff]
    %v1113 = vld [vmem:[%s12 + $0x18] sm:$0xff]
    %v1114 = vld [vmem:[%s12 + $0x20] sm:$0xff]
    %v1115 = vld [vmem:[%s12 + $0x28] sm:$0xff]
    %v1116 = vld [vmem:[%s12 + $0x30] sm:$0xff]
    %v1117 = vld [vmem:[%s12 + $0x38] sm:$0xff]
    %v1118 = vld [vmem:[%s12 + $0x40] sm:$0xff]
    %v1119 = vld [vmem:[%s12 + $0x48] sm:$0xff]
    %v1120 = vld [vmem:[%s12 + $0x50] sm:$0xff]
    %v1121 = vld [vmem:[%s12 + $0x58] sm:$0xff]
    %v1122 = vld [vmem:[%s12 + $0x60] sm:$0xff]
    %v1123 = vld [vmem:[%s12 + $0x68] sm:$0xff]
    %v1124 = vld [vmem:[%s12 + $0x70] sm:$0xff]
    %v1125 = vld [vmem:[%s12 + $0x78] sm:$0xff]
    %v1126 = vld [vmem:[%s12 + $0x80] sm:$0xff]
    %v1127 = vld [vmem:[%s12 + $0x88] sm:$0xff]
    %v1128 = vld [vmem:[%s12 + $0x90] sm:$0xff]
    %v1129 = vld [vmem:[%s12 + $0x98] sm:$0xff]
    %v1130 = vld [vmem:[%s12 + $0xa0] sm:$0xff]
    %v1131 = vld [vmem:[%s12 + $0xa8] sm:$0xff]
    %v1132 = vld [vmem:[%s12 + $0xb0] sm:$0xff]
    %v1133 = vld [vmem:[%s12 + $0xb8] sm:$0xff]
    %v1134 = vld [vmem:[%s12 + $0xc0] sm:$0xff]
    %v1135 = vld [vmem:[%s12 + $0xc8] sm:$0xff]
    %v1136 = vld [vmem:[%s12 + $0xd0] sm:$0xff]
    %v1137 = vld [vmem:[%s12 + $0xd8] sm:$0xff]
    %v1138 = vld [vmem:[%s12 + $0xe0] sm:$0xff]
    %v1139 = vld [vmem:[%s12 + $0xe8] sm:$0xff]
    %v1140 = vld [vmem:[%s12 + $0xf0] sm:$0xff]
    %v1141 = vld [vmem:[%s12 + $0xf8] sm:$0xff]
    %v1142 = vld [vmem:[%s13] ss:$2 sm:$0xf]
    %v1144 = vlaneseq
    %v1145 = vshrl.u32 %v1144, 7
    %v1146 = vsub.s32 0, %v1145
    %v1147 = vrot.slane %v1142, %v1146
    %v1148 = vlaneseq
    %v1149 = vshrl.u32 %v1148, 7
    %v1150 = vsub.s32 1, %v1149
    %v1151 = vrot.slane %v1142, %v1150
    %v1152 = vlaneseq
    %v1153 = vshrl.u32 %v1152, 7
    %v1154 = vsub.s32 2, %v1153
    %v1155 = vrot.slane %v1142, %v1154
    %v1156 = vlaneseq
    %v1157 = vshrl.u32 %v1156, 7
    %v1158 = vsub.s32 3, %v1157
    %v1159 = vrot.slane %v1142, %v1158
    %v1196 = vunpack.c.l.b16 %v1110
    %v1197 = vunpack.c.h.b16 %v1110
    %v1198 = vunpack.c.l.b16 %v1111
    %v1199 = vunpack.c.h.b16 %v1111
    %v1200 = vunpack.c.l.b16 %v1112
    %v1201 = vunpack.c.h.b16 %v1112
    %v1202 = vunpack.c.l.b16 %v1113
    %v1203 = vunpack.c.h.b16 %v1113
    %v1204 = vunpack.c.l.b16 %v1114
    %v1205 = vunpack.c.h.b16 %v1114
    %v1206 = vunpack.c.l.b16 %v1115
    %v1207 = vunpack.c.h.b16 %v1115
    %v1208 = vunpack.c.l.b16 %v1116
    %v1209 = vunpack.c.h.b16 %v1116
    %v1210 = vunpack.c.l.b16 %v1117
    %v1211 = vunpack.c.h.b16 %v1117
    %v1212 = vunpack.c.l.b16 %v1118
    %v1213 = vunpack.c.h.b16 %v1118
    %v1214 = vunpack.c.l.b16 %v1119
    %v1215 = vunpack.c.h.b16 %v1119
    %v1216 = vunpack.c.l.b16 %v1120
    %v1217 = vunpack.c.h.b16 %v1120
    %v1218 = vunpack.c.l.b16 %v1121
    %v1219 = vunpack.c.h.b16 %v1121
    %v1220 = vunpack.c.l.b16 %v1122
    %v1221 = vunpack.c.h.b16 %v1122
    %v1222 = vunpack.c.l.b16 %v1123
    %v1223 = vunpack.c.h.b16 %v1123
    %v1224 = vunpack.c.l.b16 %v1124
    %v1225 = vunpack.c.h.b16 %v1124
    %v1226 = vunpack.c.l.b16 %v1125
    %v1227 = vunpack.c.h.b16 %v1125
    %v1228 = vunpack.c.l.b16 %v1126
    %v1229 = vunpack.c.h.b16 %v1126
    %v1230 = vunpack.c.l.b16 %v1127
    %v1231 = vunpack.c.h.b16 %v1127
    %v1232 = vunpack.c.l.b16 %v1128
    %v1233 = vunpack.c.h.b16 %v1128
    %v1234 = vunpack.c.l.b16 %v1129
    %v1235 = vunpack.c.h.b16 %v1129
    %v1236 = vunpack.c.l.b16 %v1130
    %v1237 = vunpack.c.h.b16 %v1130
    %v1238 = vunpack.c.l.b16 %v1131
    %v1239 = vunpack.c.h.b16 %v1131
    %v1240 = vunpack.c.l.b16 %v1132
    %v1241 = vunpack.c.h.b16 %v1132
    %v1242 = vunpack.c.l.b16 %v1133
    %v1243 = vunpack.c.h.b16 %v1133
    %v1244 = vunpack.c.l.b16 %v1134
    %v1245 = vunpack.c.h.b16 %v1134
    %v1246 = vunpack.c.l.b16 %v1135
    %v1247 = vunpack.c.h.b16 %v1135
    %v1248 = vunpack.c.l.b16 %v1136
    %v1249 = vunpack.c.h.b16 %v1136
    %v1250 = vunpack.c.l.b16 %v1137
    %v1251 = vunpack.c.h.b16 %v1137
    %v1252 = vunpack.c.l.b16 %v1138
    %v1253 = vunpack.c.h.b16 %v1138
    %v1254 = vunpack.c.l.b16 %v1139
    %v1255 = vunpack.c.h.b16 %v1139
    %v1256 = vunpack.c.l.b16 %v1140
    %v1257 = vunpack.c.h.b16 %v1140
    %v1258 = vunpack.c.l.b16 %v1141
    %v1259 = vunpack.c.h.b16 %v1141
    %v1260 = vpack.c.b16 %v1200, %v1196
    %v1261 = vpack.c.b16 %v1201, %v1197
    %v1262 = vpack.c.b16 %v1202, %v1198
    %v1263 = vpack.c.b16 %v1203, %v1199
    %v1264 = vpack.c.b16 %v1208, %v1204
    %v1265 = vpack.c.b16 %v1209, %v1205
    %v1266 = vpack.c.b16 %v1210, %v1206
    %v1267 = vpack.c.b16 %v1211, %v1207
    %v1268 = vpack.c.b16 %v1216, %v1212
    %v1269 = vpack.c.b16 %v1217, %v1213
    %v1270 = vpack.c.b16 %v1218, %v1214
    %v1271 = vpack.c.b16 %v1219, %v1215
    %v1272 = vpack.c.b16 %v1224, %v1220
    %v1273 = vpack.c.b16 %v1225, %v1221
    %v1274 = vpack.c.b16 %v1226, %v1222
    %v1275 = vpack.c.b16 %v1227, %v1223
    %v1276 = vpack.c.b16 %v1232, %v1228
    %v1277 = vpack.c.b16 %v1233, %v1229
    %v1278 = vpack.c.b16 %v1234, %v1230
    %v1279 = vpack.c.b16 %v1235, %v1231
    %v1280 = vpack.c.b16 %v1240, %v1236
    %v1281 = vpack.c.b16 %v1241, %v1237
    %v1282 = vpack.c.b16 %v1242, %v1238
    %v1283 = vpack.c.b16 %v1243, %v1239
    %v1284 = vpack.c.b16 %v1248, %v1244
    %v1285 = vpack.c.b16 %v1249, %v1245
    %v1286 = vpack.c.b16 %v1250, %v1246
    %v1287 = vpack.c.b16 %v1251, %v1247
    %v1288 = vpack.c.b16 %v1256, %v1252
    %v1289 = vpack.c.b16 %v1257, %v1253
    %v1290 = vpack.c.b16 %v1258, %v1254
    %v1291 = vpack.c.b16 %v1259, %v1255
    %1324 = vmatprep.subr.bf16.mxu0 %v1289
    %1325 = vmatpush1.bf16.msra.mxu0 %v1288
    %1326 = vmatprep.subr.bf16.mxu0 %v1285
    %1327 = vmatpush1.bf16.msra.mxu0 %v1284
    %1328 = vmatprep.subr.bf16.mxu0 %v1281
    %1329 = vmatpush1.bf16.msra.mxu0 %v1280
    %1330 = vmatprep.subr.bf16.mxu0 %v1277
    %1331 = vmatpush1.bf16.msra.mxu0 %v1276
    %1332 = vmatprep.subr.bf16.mxu0 %v1273
    %1333 = vmatpush1.bf16.msra.mxu0 %v1272
    %1334 = vmatprep.subr.bf16.mxu0 %v1269
    %1335 = vmatpush1.bf16.msra.mxu0 %v1268
    %1336 = vmatprep.subr.bf16.mxu0 %v1265
    %1337 = vmatpush1.bf16.msra.mxu0 %v1264
    %1338 = vmatprep.subr.bf16.mxu0 %v1261
    %1339 = vmatpush1.bf16.msra.mxu0 %v1260
    %1340 = vmatprep.subr.bf16.mxu0 0
    %1341 = vmatpush2.bf16.msra.mxu0 0
    %1342 = vmatprep.subr.bf16.mxu0 0
    %1343 = vmatpush2.bf16.msra.mxu0 0
    %1344 = vmatprep.subr.bf16.mxu0 0
    %1345 = vmatpush2.bf16.msra.mxu0 0
    %1346 = vmatprep.subr.bf16.mxu0 0
    %1347 = vmatpush2.bf16.msra.mxu0 0
    %1348 = vmatprep.subr.bf16.mxu0 0
    %1349 = vmatpush2.bf16.msra.mxu0 0
    %1350 = vmatprep.subr.bf16.mxu0 0
    %1351 = vmatpush2.bf16.msra.mxu0 0
    %1352 = vmatprep.subr.bf16.mxu0 0
    %1353 = vmatpush2.bf16.msra.mxu0 0
    %1354 = vmatprep.subr.bf16.mxu0 0
    %1355 = vmatpush2.bf16.msra.mxu0 0
    %1356 = vmatprep.mubr.bf16.mxu0 0
    %1357 = vmatmul.mubr.bf16.gmra.mxu0 %v1109
    %v1358 = vpop.f32.mrf.mxu0
    %v1359 = vadd.f32 %v1147, %v1358
    %v1360 = vpop.f32.mrf.mxu0
    %v1361 = vadd.f32 %v1151, %v1360
    %v1362 = vpop.f32.mrf.mxu0
    %v1363 = vadd.f32 %v1147, %v1362
    %v1364 = vpop.f32.mrf.mxu0
    %v1365 = vadd.f32 %v1151, %v1364
    %1366 = vdwg.mxu0
    %1367 = vmatprep.subr.bf16.mxu0 %v1291
    %1368 = vmatpush1.bf16.msra.mxu0 %v1290
    %1369 = vmatprep.subr.bf16.mxu0 %v1287
    %1370 = vmatpush1.bf16.msra.mxu0 %v1286
    %1371 = vmatprep.subr.bf16.mxu0 %v1283
    %1372 = vmatpush1.bf16.msra.mxu0 %v1282
    %1373 = vmatprep.subr.bf16.mxu0 %v1279
    %1374 = vmatpush1.bf16.msra.mxu0 %v1278
    %1375 = vmatprep.subr.bf16.mxu0 %v1275
    %1376 = vmatpush1.bf16.msra.mxu0 %v1274
    %1377 = vmatprep.subr.bf16.mxu0 %v1271
    %1378 = vmatpush1.bf16.msra.mxu0 %v1270
    %1379 = vmatprep.subr.bf16.mxu0 %v1267
    %1380 = vmatpush1.bf16.msra.mxu0 %v1266
    %1381 = vmatprep.subr.bf16.mxu0 %v1263
    %1382 = vmatpush1.bf16.msra.mxu0 %v1262
    %1383 = vmatprep.subr.bf16.mxu0 0
    %1384 = vmatpush2.bf16.msra.mxu0 0
    %1385 = vmatprep.subr.bf16.mxu0 0
    %1386 = vmatpush2.bf16.msra.mxu0 0
    %1387 = vmatprep.subr.bf16.mxu0 0
    %1388 = vmatpush2.bf16.msra.mxu0 0
    %1389 = vmatprep.subr.bf16.mxu0 0
    %1390 = vmatpush2.bf16.msra.mxu0 0
    %1391 = vmatprep.subr.bf16.mxu0 0
    %1392 = vmatpush2.bf16.msra.mxu0 0
    %1393 = vmatprep.subr.bf16.mxu0 0
    %1394 = vmatpush2.bf16.msra.mxu0 0
    %1395 = vmatprep.subr.bf16.mxu0 0
    %1396 = vmatpush2.bf16.msra.mxu0 0
    %1397 = vmatprep.subr.bf16.mxu0 0
    %1398 = vmatpush2.bf16.msra.mxu0 0
    %1399 = vmatprep.mubr.bf16.mxu0 0
    %1400 = vmatmul.mubr.bf16.gmra.mxu0 %v1109
    %v1401 = vpop.f32.mrf.mxu0
    %v1402 = vadd.f32 %v1155, %v1401
    %v1403 = vpop.f32.mrf.mxu0
    %v1404 = vadd.f32 %v1159, %v1403
    %v1405 = vpop.f32.mrf.mxu0
    %v1406 = vadd.f32 %v1155, %v1405
    %v1407 = vpop.f32.mrf.mxu0
    %v1408 = vadd.f32 %v1159, %v1407
    %1409 = vdwg.mxu0
    %v1410 = vmul.f32 %v1359, %v1359
    %v1411 = vmul.f32 %v1361, %v1361
    %v1412 = vmul.f32 %v1402, %v1402
    %v1413 = vmul.f32 %v1404, %v1404
    %v1414 = vmul.f32 %v1363, %v1363
    %v1415 = vmul.f32 %v1365, %v1365
    %v1416 = vmul.f32 %v1406, %v1406
    %v1417 = vmul.f32 %v1408, %v1408
    %v1418 = vmul.f32 %v1359, %v1410
    %v1419 = vmul.f32 %v1361, %v1411
    %v1420 = vmul.f32 %v1402, %v1412
    %v1421 = vmul.f32 %v1404, %v1413
    %v1422 = vmul.f32 %v1363, %v1414
    %v1423 = vmul.f32 %v1365, %v1415
    %v1424 = vmul.f32 %v1406, %v1416
    %v1425 = vmul.f32 %v1408, %v1417
    %v1426 = vmul.f32 %v1418, 0.044715
    %v1427 = vmul.f32 %v1419, 0.044715
    %v1428 = vmul.f32 %v1420, 0.044715
    %v1429 = vmul.f32 %v1421, 0.044715
    %v1430 = vmul.f32 %v1422, 0.044715
    %v1431 = vmul.f32 %v1423, 0.044715
    %v1432 = vmul.f32 %v1424, 0.044715
    %v1433 = vmul.f32 %v1425, 0.044715
    %v1434 = vadd.f32 %v1359, %v1426
    %v1435 = vadd.f32 %v1361, %v1427
    %v1436 = vadd.f32 %v1402, %v1428
    %v1437 = vadd.f32 %v1404, %v1429
    %v1438 = vadd.f32 %v1363, %v1430
    %v1439 = vadd.f32 %v1365, %v1431
    %v1440 = vadd.f32 %v1406, %v1432
    %v1441 = vadd.f32 %v1408, %v1433
    %v1442 = vmul.f32 %v1434, 0.7978846
    %v1443 = vmul.f32 %v1435, 0.7978846
    %v1444 = vmul.f32 %v1436, 0.7978846
    %v1445 = vmul.f32 %v1437, 0.7978846
    %v1446 = vmul.f32 %v1438, 0.7978846
    %v1447 = vmul.f32 %v1439, 0.7978846
    %v1448 = vmul.f32 %v1440, 0.7978846
    %v1449 = vmul.f32 %v1441, 0.7978846
    %v1450 = vtanh.pop %v1442
    %v1451 = vtanh.pop %v1443
    %v1452 = vtanh.pop %v1444
    %v1453 = vtanh.pop %v1445
    %v1454 = vtanh.pop %v1446
    %v1455 = vtanh.pop %v1447
    %v1456 = vtanh.pop %v1448
    %v1457 = vtanh.pop %v1449
    %v1458 = vadd.f32 %v1450, 1.0
    %v1459 = vadd.f32 %v1451, 1.0
    %v1460 = vadd.f32 %v1452, 1.0
    %v1461 = vadd.f32 %v1453, 1.0
    %v1462 = vadd.f32 %v1454, 1.0
    %v1463 = vadd.f32 %v1455, 1.0
    %v1464 = vadd.f32 %v1456, 1.0
    %v1465 = vadd.f32 %v1457, 1.0
    %v1466 = vmul.f32 %v1458, 0.5
    %v1467 = vmul.f32 %v1459, 0.5
    %v1468 = vmul.f32 %v1460, 0.5
    %v1469 = vmul.f32 %v1461, 0.5
    %v1470 = vmul.f32 %v1462, 0.5
    %v1471 = vmul.f32 %v1463, 0.5
    %v1472 = vmul.f32 %v1464, 0.5
    %v1473 = vmul.f32 %v1465, 0.5
    %v1474 = vmul.f32 %v1359, %v1466
    %v1475 = vmul.f32 %v1361, %v1467
    %v1476 = vmul.f32 %v1402, %v1468
    %v1477 = vmul.f32 %v1404, %v1469
    %v1478 = vmul.f32 %v1363, %v1470
    %v1479 = vmul.f32 %v1365, %v1471
    %v1480 = vmul.f32 %v1406, %v1472
    %v1481 = vmul.f32 %v1408, %v1473
    %v1482 = vpack.c.bf16 %v1478, %v1474
    %v1483 = vpack.c.bf16 %v1479, %v1475
    %v1484 = vpack.c.bf16 %v1480, %v1476
    %v1485 = vpack.c.bf16 %v1481, %v1477
    %v1486 = vld [vmem:[#allocation6] sm:$0xf]
    %v1487 = vld [vmem:[#allocation6 + $0x4] sm:$0xf]
    %v1488 = vld [vmem:[#allocation6 + $0x8] sm:$0xf]
    %v1489 = vld [vmem:[#allocation6 + $0xc] sm:$0xf]
    %v1490 = vld [vmem:[#allocation6 + $0x10] sm:$0xf]
    %v1491 = vld [vmem:[#allocation6 + $0x14] sm:$0xf]
    %v1492 = vld [vmem:[#allocation6 + $0x18] sm:$0xf]
    %v1493 = vld [vmem:[#allocation6 + $0x1c] sm:$0xf]
    %v1494 = vld [vmem:[#allocation6 + $0x20] sm:$0xf]
    %v1495 = vld [vmem:[#allocation6 + $0x24] sm:$0xf]
    %v1496 = vld [vmem:[#allocation6 + $0x28] sm:$0xf]
    %v1497 = vld [vmem:[#allocation6 + $0x2c] sm:$0xf]
    %v1498 = vld [vmem:[#allocation6 + $0x30] sm:$0xf]
    %v1499 = vld [vmem:[#allocation6 + $0x34] sm:$0xf]
    %v1500 = vld [vmem:[#allocation6 + $0x38] sm:$0xf]
    %v1501 = vld [vmem:[#allocation6 + $0x3c] sm:$0xf]
    %v1502 = vld [vmem:[#allocation6 + $0x40] sm:$0xf]
    %v1503 = vld [vmem:[#allocation6 + $0x44] sm:$0xf]
    %v1504 = vld [vmem:[#allocation6 + $0x48] sm:$0xf]
    %v1505 = vld [vmem:[#allocation6 + $0x4c] sm:$0xf]
    %v1506 = vld [vmem:[#allocation6 + $0x50] sm:$0xf]
    %v1507 = vld [vmem:[#allocation6 + $0x54] sm:$0xf]
    %v1508 = vld [vmem:[#allocation6 + $0x58] sm:$0xf]
    %v1509 = vld [vmem:[#allocation6 + $0x5c] sm:$0xf]
    %v1510 = vld [vmem:[#allocation6 + $0x60] sm:$0xf]
    %v1511 = vld [vmem:[#allocation6 + $0x64] sm:$0xf]
    %v1512 = vld [vmem:[#allocation6 + $0x68] sm:$0xf]
    %v1513 = vld [vmem:[#allocation6 + $0x6c] sm:$0xf]
    %v1514 = vld [vmem:[#allocation6 + $0x70] sm:$0xf]
    %v1515 = vld [vmem:[#allocation6 + $0x74] sm:$0xf]
    %v1516 = vld [vmem:[#allocation6 + $0x78] sm:$0xf]
    %v1517 = vld [vmem:[#allocation6 + $0x7c] sm:$0xf]
    %v1518 = vld [vmem:[#allocation6 + $0x80] sm:$0xf]
    %v1519 = vld [vmem:[#allocation6 + $0x84] sm:$0xf]
    %v1520 = vld [vmem:[#allocation6 + $0x88] sm:$0xf]
    %v1521 = vld [vmem:[#allocation6 + $0x8c] sm:$0xf]
    %v1522 = vld [vmem:[#allocation6 + $0x90] sm:$0xf]
    %v1523 = vld [vmem:[#allocation6 + $0x94] sm:$0xf]
    %v1524 = vld [vmem:[#allocation6 + $0x98] sm:$0xf]
    %v1525 = vld [vmem:[#allocation6 + $0x9c] sm:$0xf]
    %v1526 = vld [vmem:[#allocation6 + $0xa0] sm:$0xf]
    %v1527 = vld [vmem:[#allocation6 + $0xa4] sm:$0xf]
    %v1528 = vld [vmem:[#allocation6 + $0xa8] sm:$0xf]
    %v1529 = vld [vmem:[#allocation6 + $0xac] sm:$0xf]
    %v1530 = vld [vmem:[#allocation6 + $0xb0] sm:$0xf]
    %v1531 = vld [vmem:[#allocation6 + $0xb4] sm:$0xf]
    %v1532 = vld [vmem:[#allocation6 + $0xb8] sm:$0xf]
    %v1533 = vld [vmem:[#allocation6 + $0xbc] sm:$0xf]
    %v1534 = vld [vmem:[#allocation6 + $0xc0] sm:$0xf]
    %v1535 = vld [vmem:[#allocation6 + $0xc4] sm:$0xf]
    %v1536 = vld [vmem:[#allocation6 + $0xc8] sm:$0xf]
    %v1537 = vld [vmem:[#allocation6 + $0xcc] sm:$0xf]
    %v1538 = vld [vmem:[#allocation6 + $0xd0] sm:$0xf]
    %v1539 = vld [vmem:[#allocation6 + $0xd4] sm:$0xf]
    %v1540 = vld [vmem:[#allocation6 + $0xd8] sm:$0xf]
    %v1541 = vld [vmem:[#allocation6 + $0xdc] sm:$0xf]
    %v1542 = vld [vmem:[#allocation6 + $0xe0] sm:$0xf]
    %v1543 = vld [vmem:[#allocation6 + $0xe4] sm:$0xf]
    %v1544 = vld [vmem:[#allocation6 + $0xe8] sm:$0xf]
    %v1545 = vld [vmem:[#allocation6 + $0xec] sm:$0xf]
    %v1546 = vld [vmem:[#allocation6 + $0xf0] sm:$0xf]
    %v1547 = vld [vmem:[#allocation6 + $0xf4] sm:$0xf]
    %v1548 = vld [vmem:[#allocation6 + $0xf8] sm:$0xf]
    %v1549 = vld [vmem:[#allocation6 + $0xfc] sm:$0xf]
    %v1550 = vld [vmem:[%s15] sm:$0x1]
    %v1551 = vlaneseq
    %v1552 = vshrl.u32 %v1551, 7
    %v1553 = vsub.s32 0, %v1552
    %v1554 = vrot.slane %v1550, %v1553
    %v1619 = vunpack.c.l.b16 %v1486
    %v1620 = vunpack.c.l.b16 %v1487
    %v1621 = vunpack.c.l.b16 %v1488
    %v1622 = vunpack.c.l.b16 %v1489
    %v1623 = vunpack.c.l.b16 %v1490
    %v1624 = vunpack.c.l.b16 %v1491
    %v1625 = vunpack.c.l.b16 %v1492
    %v1626 = vunpack.c.l.b16 %v1493
    %v1627 = vunpack.c.l.b16 %v1494
    %v1628 = vunpack.c.l.b16 %v1495
    %v1629 = vunpack.c.l.b16 %v1496
    %v1630 = vunpack.c.l.b16 %v1497
    %v1631 = vunpack.c.l.b16 %v1498
    %v1632 = vunpack.c.l.b16 %v1499
    %v1633 = vunpack.c.l.b16 %v1500
    %v1634 = vunpack.c.l.b16 %v1501
    %v1635 = vunpack.c.l.b16 %v1502
    %v1636 = vunpack.c.l.b16 %v1503
    %v1637 = vunpack.c.l.b16 %v1504
    %v1638 = vunpack.c.l.b16 %v1505
    %v1639 = vunpack.c.l.b16 %v1506
    %v1640 = vunpack.c.l.b16 %v1507
    %v1641 = vunpack.c.l.b16 %v1508
    %v1642 = vunpack.c.l.b16 %v1509
    %v1643 = vunpack.c.l.b16 %v1510
    %v1644 = vunpack.c.l.b16 %v1511
    %v1645 = vunpack.c.l.b16 %v1512
    %v1646 = vunpack.c.l.b16 %v1513
    %v1647 = vunpack.c.l.b16 %v1514
    %v1648 = vunpack.c.l.b16 %v1515
    %v1649 = vunpack.c.l.b16 %v1516
    %v1650 = vunpack.c.l.b16 %v1517
    %v1651 = vunpack.c.l.b16 %v1518
    %v1652 = vunpack.c.l.b16 %v1519
    %v1653 = vunpack.c.l.b16 %v1520
    %v1654 = vunpack.c.l.b16 %v1521
    %v1655 = vunpack.c.l.b16 %v1522
    %v1656 = vunpack.c.l.b16 %v1523
    %v1657 = vunpack.c.l.b16 %v1524
    %v1658 = vunpack.c.l.b16 %v1525
    %v1659 = vunpack.c.l.b16 %v1526
    %v1660 = vunpack.c.l.b16 %v1527
    %v1661 = vunpack.c.l.b16 %v1528
    %v1662 = vunpack.c.l.b16 %v1529
    %v1663 = vunpack.c.l.b16 %v1530
    %v1664 = vunpack.c.l.b16 %v1531
    %v1665 = vunpack.c.l.b16 %v1532
    %v1666 = vunpack.c.l.b16 %v1533
    %v1667 = vunpack.c.l.b16 %v1534
    %v1668 = vunpack.c.l.b16 %v1535
    %v1669 = vunpack.c.l.b16 %v1536
    %v1670 = vunpack.c.l.b16 %v1537
    %v1671 = vunpack.c.l.b16 %v1538
    %v1672 = vunpack.c.l.b16 %v1539
    %v1673 = vunpack.c.l.b16 %v1540
    %v1674 = vunpack.c.l.b16 %v1541
    %v1675 = vunpack.c.l.b16 %v1542
    %v1676 = vunpack.c.l.b16 %v1543
    %v1677 = vunpack.c.l.b16 %v1544
    %v1678 = vunpack.c.l.b16 %v1545
    %v1679 = vunpack.c.l.b16 %v1546
    %v1680 = vunpack.c.l.b16 %v1547
    %v1681 = vunpack.c.l.b16 %v1548
    %v1682 = vunpack.c.l.b16 %v1549
    %v1683 = vpack.c.b16 %v1620, %v1619
    %v1684 = vpack.c.b16 %v1622, %v1621
    %v1685 = vpack.c.b16 %v1624, %v1623
    %v1686 = vpack.c.b16 %v1626, %v1625
    %v1687 = vpack.c.b16 %v1628, %v1627
    %v1688 = vpack.c.b16 %v1630, %v1629
    %v1689 = vpack.c.b16 %v1632, %v1631
    %v1690 = vpack.c.b16 %v1634, %v1633
    %v1691 = vpack.c.b16 %v1636, %v1635
    %v1692 = vpack.c.b16 %v1638, %v1637
    %v1693 = vpack.c.b16 %v1640, %v1639
    %v1694 = vpack.c.b16 %v1642, %v1641
    %v1695 = vpack.c.b16 %v1644, %v1643
    %v1696 = vpack.c.b16 %v1646, %v1645
    %v1697 = vpack.c.b16 %v1648, %v1647
    %v1698 = vpack.c.b16 %v1650, %v1649
    %v1699 = vpack.c.b16 %v1652, %v1651
    %v1700 = vpack.c.b16 %v1654, %v1653
    %v1701 = vpack.c.b16 %v1656, %v1655
    %v1702 = vpack.c.b16 %v1658, %v1657
    %v1703 = vpack.c.b16 %v1660, %v1659
    %v1704 = vpack.c.b16 %v1662, %v1661
    %v1705 = vpack.c.b16 %v1664, %v1663
    %v1706 = vpack.c.b16 %v1666, %v1665
    %v1707 = vpack.c.b16 %v1668, %v1667
    %v1708 = vpack.c.b16 %v1670, %v1669
    %v1709 = vpack.c.b16 %v1672, %v1671
    %v1710 = vpack.c.b16 %v1674, %v1673
    %v1711 = vpack.c.b16 %v1676, %v1675
    %v1712 = vpack.c.b16 %v1678, %v1677
    %v1713 = vpack.c.b16 %v1680, %v1679
    %v1714 = vpack.c.b16 %v1682, %v1681
    %1747 = vmatprep.subr.bf16.mxu0 0
    %1748 = vmatpush1.bf16.msra.mxu0 %v1690
    %1749 = vmatprep.subr.bf16.mxu0 0
    %1750 = vmatpush1.bf16.msra.mxu0 %v1689
    %1751 = vmatprep.subr.bf16.mxu0 0
    %1752 = vmatpush1.bf16.msra.mxu0 %v1688
    %1753 = vmatprep.subr.bf16.mxu0 0
    %1754 = vmatpush1.bf16.msra.mxu0 %v1687
    %1755 = vmatprep.subr.bf16.mxu0 0
    %1756 = vmatpush1.bf16.msra.mxu0 %v1686
    %1757 = vmatprep.subr.bf16.mxu0 0
    %1758 = vmatpush1.bf16.msra.mxu0 %v1685
    %1759 = vmatprep.subr.bf16.mxu0 0
    %1760 = vmatpush1.bf16.msra.mxu0 %v1684
    %1761 = vmatprep.subr.bf16.mxu0 0
    %1762 = vmatpush1.bf16.msra.mxu0 %v1683
    %1763 = vmatprep.subr.bf16.mxu0 0
    %1764 = vmatpush2.bf16.msra.mxu0 %v1698
    %1765 = vmatprep.subr.bf16.mxu0 0
    %1766 = vmatpush2.bf16.msra.mxu0 %v1697
    %1767 = vmatprep.subr.bf16.mxu0 0
    %1768 = vmatpush2.bf16.msra.mxu0 %v1696
    %1769 = vmatprep.subr.bf16.mxu0 0
    %1770 = vmatpush2.bf16.msra.mxu0 %v1695
    %1771 = vmatprep.subr.bf16.mxu0 0
    %1772 = vmatpush2.bf16.msra.mxu0 %v1694
    %1773 = vmatprep.subr.bf16.mxu0 0
    %1774 = vmatpush2.bf16.msra.mxu0 %v1693
    %1775 = vmatprep.subr.bf16.mxu0 0
    %1776 = vmatpush2.bf16.msra.mxu0 %v1692
    %1777 = vmatprep.subr.bf16.mxu0 0
    %1778 = vmatpush2.bf16.msra.mxu0 %v1691
    %1779 = vmatprep.mubr.bf16.mxu0 %v1483
    %1780 = vmatmul.mubr.bf16.gmra.mxu0 %v1482
    %v1781 = vpop.f32.mrf.mxu0
    %v1782 = vadd.f32 %v1554, %v1781
    %v1783 = vpop.f32.mrf.mxu0
    %v1784 = vpop.f32.mrf.mxu0
    %v1785 = vadd.f32 %v1554, %v1784
    %v1786 = vpop.f32.mrf.mxu0
    %1787 = vdwg.mxu0
    %1788 = vmatprep.subr.bf16.mxu0 0
    %1789 = vmatpush1.bf16.msra.mxu0 %v1706
    %1790 = vmatprep.subr.bf16.mxu0 0
    %1791 = vmatpush1.bf16.msra.mxu0 %v1705
    %1792 = vmatprep.subr.bf16.mxu0 0
    %1793 = vmatpush1.bf16.msra.mxu0 %v1704
    %1794 = vmatprep.subr.bf16.mxu0 0
    %1795 = vmatpush1.bf16.msra.mxu0 %v1703
    %1796 = vmatprep.subr.bf16.mxu0 0
    %1797 = vmatpush1.bf16.msra.mxu0 %v1702
    %1798 = vmatprep.subr.bf16.mxu0 0
    %1799 = vmatpush1.bf16.msra.mxu0 %v1701
    %1800 = vmatprep.subr.bf16.mxu0 0
    %1801 = vmatpush1.bf16.msra.mxu0 %v1700
    %1802 = vmatprep.subr.bf16.mxu0 0
    %1803 = vmatpush1.bf16.msra.mxu0 %v1699
    %1804 = vmatprep.subr.bf16.mxu0 0
    %1805 = vmatpush2.bf16.msra.mxu0 %v1714
    %1806 = vmatprep.subr.bf16.mxu0 0
    %1807 = vmatpush2.bf16.msra.mxu0 %v1713
    %1808 = vmatprep.subr.bf16.mxu0 0
    %1809 = vmatpush2.bf16.msra.mxu0 %v1712
    %1810 = vmatprep.subr.bf16.mxu0 0
    %1811 = vmatpush2.bf16.msra.mxu0 %v1711
    %1812 = vmatprep.subr.bf16.mxu0 0
    %1813 = vmatpush2.bf16.msra.mxu0 %v1710
    %1814 = vmatprep.subr.bf16.mxu0 0
    %1815 = vmatpush2.bf16.msra.mxu0 %v1709
    %1816 = vmatprep.subr.bf16.mxu0 0
    %1817 = vmatpush2.bf16.msra.mxu0 %v1708
    %1818 = vmatprep.subr.bf16.mxu0 0
    %1819 = vmatpush2.bf16.msra.mxu0 %v1707
    %1820 = vmatprep.mubr.bf16.mxu0 %v1485
    %1821 = vmatmul.mubr.bf16.gmra.mxu0 %v1484
    %v1822 = vpop.f32.mrf.mxu0
    %v1823 = vadd.f32 %v1782, %v1822
    %v1824 = vpop.f32.mrf.mxu0
    %v1825 = vpop.f32.mrf.mxu0
    %v1826 = vadd.f32 %v1785, %v1825
    %v1827 = vpop.f32.mrf.mxu0
    %1828 = vdwg.mxu0
    %v1829 = vld [vmem:[%s16] sm:$0x1]
    %v1830 = vlaneseq
    %v1831 = vshrl.u32 %v1830, 7
    %v1832 = vsub.s32 0, %v1831
    %v1833 = vrot.slane %v1829, %v1832
    %v1834 = vmul.f32 %v1833, %v1823
    %v1835 = vmul.f32 %v1833, %v1826
    %v1836 = vadd.f32 %v1071, %v1834
    %v1837 = vadd.f32 %v1072, %v1835
    %v1838 = vld [vmem:[%s3 + $0x1] sm:$0x1]
    %v1839 = vld [vmem:[%s4 + $0x1] sm:$0x1]
    %1840 = vadd.xlane.f32.xlu0 %v1836
    %v1841 = vpop.xlane.xlu0 %1840
    %1842 = vadd.xlane.f32.xlu0 %v1837
    %v1843 = vpop.xlane.xlu0 %1842
    %v1844 = vmul.f32 %v1841, %v293
    %v1845 = vmul.f32 %v1843, %v293
    %v1846 = vsub.f32 %v1836, %v1844
    %v1847 = vsub.f32 %v1837, %v1845
    %v1848 = vmul.f32 %v1846, %v1846
    %v1849 = vmul.f32 %v1847, %v1847
    %1850 = vadd.xlane.f32.xlu0 %v1848
    %v1851 = vpop.xlane.xlu0 %1850
    %1852 = vadd.xlane.f32.xlu0 %v1849
    %v1853 = vpop.xlane.xlu0 %1852
    %v1854 = vmul.f32 %v1851, %v293
    %v1855 = vmul.f32 %v1853, %v293
    %v1856 = vadd.f32 %v1854, 1e-06
    %v1857 = vadd.f32 %v1855, 1e-06
    %v1858 = vrsqrt.pop %v1856
    %v1859 = vrsqrt.pop %v1857
    %v1860 = vmul.f32 %v1846, %v1858
    %v1861 = vmul.f32 %v1847, %v1859
    %v1862 = vlaneseq
    %v1863 = vshrl.u32 %v1862, 7
    %v1864 = vsub.s32 0, %v1863
    %v1865 = vrot.slane %v1838, %v1864
    %v1866 = vmul.f32 %v1860, %v1865
    %v1867 = vmul.f32 %v1861, %v1865
    %v1868 = vlaneseq
    %v1869 = vshrl.u32 %v1868, 7
    %v1870 = vsub.s32 0, %v1869
    %v1871 = vrot.slane %v1839, %v1870
    %v1872 = vadd.f32 %v1866, %v1871
    %v1873 = vadd.f32 %v1867, %v1871
    %v1874 = vpack.c.bf16 %v1873, %v1872
    %s1875 = scalar_lea.vmem %s5, 192
    %v1876 = vld [vmem:[%s1875] sm:$0xff]
    %v1877 = vld [vmem:[%s1875 + $0x8] sm:$0xf]
    %v1878 = vld [vmem:[%s1875 + $0xc] sm:$0xff]
    %v1879 = vld [vmem:[%s1875 + $0x14] sm:$0xf]
    %v1880 = vld [vmem:[%s1875 + $0x18] sm:$0xff]
    %v1881 = vld [vmem:[%s1875 + $0x20] sm:$0xf]
    %v1882 = vld [vmem:[%s1875 + $0x24] sm:$0xff]
    %v1883 = vld [vmem:[%s1875 + $0x2c] sm:$0xf]
    %v1884 = vld [vmem:[%s1875 + $0x30] sm:$0xff]
    %v1885 = vld [vmem:[%s1875 + $0x38] sm:$0xf]
    %v1886 = vld [vmem:[%s1875 + $0x3c] sm:$0xff]
    %v1887 = vld [vmem:[%s1875 + $0x44] sm:$0xf]
    %v1888 = vld [vmem:[%s1875 + $0x48] sm:$0xff]
    %v1889 = vld [vmem:[%s1875 + $0x50] sm:$0xf]
    %v1890 = vld [vmem:[%s1875 + $0x54] sm:$0xff]
    %v1891 = vld [vmem:[%s1875 + $0x5c] sm:$0xf]
    %v1892 = vld [vmem:[%s1875 + $0x60] sm:$0xff]
    %v1893 = vld [vmem:[%s1875 + $0x68] sm:$0xf]
    %v1894 = vld [vmem:[%s1875 + $0x6c] sm:$0xff]
    %v1895 = vld [vmem:[%s1875 + $0x74] sm:$0xf]
    %v1896 = vld [vmem:[%s1875 + $0x78] sm:$0xff]
    %v1897 = vld [vmem:[%s1875 + $0x80] sm:$0xf]
    %v1898 = vld [vmem:[%s1875 + $0x84] sm:$0xff]
    %v1899 = vld [vmem:[%s1875 + $0x8c] sm:$0xf]
    %v1900 = vld [vmem:[%s1875 + $0x90] sm:$0xff]
    %v1901 = vld [vmem:[%s1875 + $0x98] sm:$0xf]
    %v1902 = vld [vmem:[%s1875 + $0x9c] sm:$0xff]
    %v1903 = vld [vmem:[%s1875 + $0xa4] sm:$0xf]
    %v1904 = vld [vmem:[%s1875 + $0xa8] sm:$0xff]
    %v1905 = vld [vmem:[%s1875 + $0xb0] sm:$0xf]
    %v1906 = vld [vmem:[%s1875 + $0xb4] sm:$0xff]
    %v1907 = vld [vmem:[%s1875 + $0xbc] sm:$0xf]
    %s1908 = scalar_lea.vmem %s6, 1
    %v1909 = vld [vmem:[%s1908] ss:$2 sm:$0x7]
    %v1911 = vlaneseq
    %v1912 = vshrl.u32 %v1911, 7
    %v1913 = vsub.s32 0, %v1912
    %v1914 = vrot.slane %v1909, %v1913
    %v1915 = vlaneseq
    %v1916 = vshrl.u32 %v1915, 7
    %v1917 = vsub.s32 1, %v1916
    %v1918 = vrot.slane %v1909, %v1917
    %v1919 = vlaneseq
    %v1920 = vshrl.u32 %v1919, 7
    %v1921 = vsub.s32 2, %v1920
    %v1922 = vrot.slane %v1909, %v1921
    %v1958 = vunpack.c.l.b16 %v1876
    %v1959 = vunpack.c.h.b16 %v1876
    %v1960 = vunpack.c.l.b16 %v1877
    %v1961 = vunpack.c.l.b16 %v1878
    %v1962 = vunpack.c.h.b16 %v1878
    %v1963 = vunpack.c.l.b16 %v1879
    %v1964 = vunpack.c.l.b16 %v1880
    %v1965 = vunpack.c.h.b16 %v1880
    %v1966 = vunpack.c.l.b16 %v1881
    %v1967 = vunpack.c.l.b16 %v1882
    %v1968 = vunpack.c.h.b16 %v1882
    %v1969 = vunpack.c.l.b16 %v1883
    %v1970 = vunpack.c.l.b16 %v1884
    %v1971 = vunpack.c.h.b16 %v1884
    %v1972 = vunpack.c.l.b16 %v1885
    %v1973 = vunpack.c.l.b16 %v1886
    %v1974 = vunpack.c.h.b16 %v1886
    %v1975 = vunpack.c.l.b16 %v1887
    %v1976 = vunpack.c.l.b16 %v1888
    %v1977 = vunpack.c.h.b16 %v1888
    %v1978 = vunpack.c.l.b16 %v1889
    %v1979 = vunpack.c.l.b16 %v1890
    %v1980 = vunpack.c.h.b16 %v1890
    %v1981 = vunpack.c.l.b16 %v1891
    %v1982 = vunpack.c.l.b16 %v1892
    %v1983 = vunpack.c.h.b16 %v1892
    %v1984 = vunpack.c.l.b16 %v1893
    %v1985 = vunpack.c.l.b16 %v1894
    %v1986 = vunpack.c.h.b16 %v1894
    %v1987 = vunpack.c.l.b16 %v1895
    %v1988 = vunpack.c.l.b16 %v1896
    %v1989 = vunpack.c.h.b16 %v1896
    %v1990 = vunpack.c.l.b16 %v1897
    %v1991 = vunpack.c.l.b16 %v1898
    %v1992 = vunpack.c.h.b16 %v1898
    %v1993 = vunpack.c.l.b16 %v1899
    %v1994 = vunpack.c.l.b16 %v1900
    %v1995 = vunpack.c.h.b16 %v1900
    %v1996 = vunpack.c.l.b16 %v1901
    %v1997 = vunpack.c.l.b16 %v1902
    %v1998 = vunpack.c.h.b16 %v1902
    %v1999 = vunpack.c.l.b16 %v1903
    %v2000 = vunpack.c.l.b16 %v1904
    %v2001 = vunpack.c.h.b16 %v1904
    %v2002 = vunpack.c.l.b16 %v1905
    %v2003 = vunpack.c.l.b16 %v1906
    %v2004 = vunpack.c.h.b16 %v1906
    %v2005 = vunpack.c.l.b16 %v1907
    %v2006 = vpack.c.b16 %v1961, %v1958
    %v2007 = vpack.c.b16 %v1962, %v1959
    %v2008 = vpack.c.b16 %v1963, %v1960
    %v2009 = vpack.c.b16 %v1967, %v1964
    %v2010 = vpack.c.b16 %v1968, %v1965
    %v2011 = vpack.c.b16 %v1969, %v1966
    %v2012 = vpack.c.b16 %v1973, %v1970
    %v2013 = vpack.c.b16 %v1974, %v1971
    %v2014 = vpack.c.b16 %v1975, %v1972
    %v2015 = vpack.c.b16 %v1979, %v1976
    %v2016 = vpack.c.b16 %v1980, %v1977
    %v2017 = vpack.c.b16 %v1981, %v1978
    %v2018 = vpack.c.b16 %v1985, %v1982
    %v2019 = vpack.c.b16 %v1986, %v1983
    %v2020 = vpack.c.b16 %v1987, %v1984
    %v2021 = vpack.c.b16 %v1991, %v1988
    %v2022 = vpack.c.b16 %v1992, %v1989
    %v2023 = vpack.c.b16 %v1993, %v1990
    %v2024 = vpack.c.b16 %v1997, %v1994
    %v2025 = vpack.c.b16 %v1998, %v1995
    %v2026 = vpack.c.b16 %v1999, %v1996
    %v2027 = vpack.c.b16 %v2003, %v2000
    %v2028 = vpack.c.b16 %v2004, %v2001
    %v2029 = vpack.c.b16 %v2005, %v2002
    %2054 = vmatprep.subr.bf16.mxu0 %v2028
    %2055 = vmatpush1.bf16.msra.mxu0 %v2027
    %2056 = vmatprep.subr.bf16.mxu0 %v2025
    %2057 = vmatpush1.bf16.msra.mxu0 %v2024
    %2058 = vmatprep.subr.bf16.mxu0 %v2022
    %2059 = vmatpush1.bf16.msra.mxu0 %v2021
    %2060 = vmatprep.subr.bf16.mxu0 %v2019
    %2061 = vmatpush1.bf16.msra.mxu0 %v2018
    %2062 = vmatprep.subr.bf16.mxu0 %v2016
    %2063 = vmatpush1.bf16.msra.mxu0 %v2015
    %2064 = vmatprep.subr.bf16.mxu0 %v2013
    %2065 = vmatpush1.bf16.msra.mxu0 %v2012
    %2066 = vmatprep.subr.bf16.mxu0 %v2010
    %2067 = vmatpush1.bf16.msra.mxu0 %v2009
    %2068 = vmatprep.subr.bf16.mxu0 %v2007
    %2069 = vmatpush1.bf16.msra.mxu0 %v2006
    %2070 = vmatprep.subr.bf16.mxu0 0
    %2071 = vmatpush2.bf16.msra.mxu0 0
    %2072 = vmatprep.subr.bf16.mxu0 0
    %2073 = vmatpush2.bf16.msra.mxu0 0
    %2074 = vmatprep.subr.bf16.mxu0 0
    %2075 = vmatpush2.bf16.msra.mxu0 0
    %2076 = vmatprep.subr.bf16.mxu0 0
    %2077 = vmatpush2.bf16.msra.mxu0 0
    %2078 = vmatprep.subr.bf16.mxu0 0
    %2079 = vmatpush2.bf16.msra.mxu0 0
    %2080 = vmatprep.subr.bf16.mxu0 0
    %2081 = vmatpush2.bf16.msra.mxu0 0
    %2082 = vmatprep.subr.bf16.mxu0 0
    %2083 = vmatpush2.bf16.msra.mxu0 0
    %2084 = vmatprep.subr.bf16.mxu0 0
    %2085 = vmatpush2.bf16.msra.mxu0 0
    %2086 = vmatprep.mubr.bf16.mxu0 0
    %2087 = vmatmul.mubr.bf16.gmra.mxu0 %v1874
    %v2088 = vpop.f32.mrf.mxu0
    %v2089 = vadd.f32 %v1914, %v2088
    %v2090 = vpop.f32.mrf.mxu0
    %v2091 = vadd.f32 %v1918, %v2090
    %v2092 = vpop.f32.mrf.mxu0
    %v2093 = vadd.f32 %v1914, %v2092
    %v2094 = vpop.f32.mrf.mxu0
    %v2095 = vadd.f32 %v1918, %v2094
    %2096 = vdwg.mxu0
    %2097 = vmatprep.subr.bf16.mxu0 0
    %2098 = vmatpush1.bf16.msra.mxu0 %v2029
    %2099 = vmatprep.subr.bf16.mxu0 0
    %2100 = vmatpush1.bf16.msra.mxu0 %v2026
    %2101 = vmatprep.subr.bf16.mxu0 0
    %2102 = vmatpush1.bf16.msra.mxu0 %v2023
    %2103 = vmatprep.subr.bf16.mxu0 0
    %2104 = vmatpush1.bf16.msra.mxu0 %v2020
    %2105 = vmatprep.subr.bf16.mxu0 0
    %2106 = vmatpush1.bf16.msra.mxu0 %v2017
    %2107 = vmatprep.subr.bf16.mxu0 0
    %2108 = vmatpush1.bf16.msra.mxu0 %v2014
    %2109 = vmatprep.subr.bf16.mxu0 0
    %2110 = vmatpush1.bf16.msra.mxu0 %v2011
    %2111 = vmatprep.subr.bf16.mxu0 0
    %2112 = vmatpush1.bf16.msra.mxu0 %v2008
    %2113 = vmatprep.subr.bf16.mxu0 0
    %2114 = vmatpush2.bf16.msra.mxu0 0
    %2115 = vmatprep.subr.bf16.mxu0 0
    %2116 = vmatpush2.bf16.msra.mxu0 0
    %2117 = vmatprep.subr.bf16.mxu0 0
    %2118 = vmatpush2.bf16.msra.mxu0 0
    %2119 = vmatprep.subr.bf16.mxu0 0
    %2120 = vmatpush2.bf16.msra.mxu0 0
    %2121 = vmatprep.subr.bf16.mxu0 0
    %2122 = vmatpush2.bf16.msra.mxu0 0
    %2123 = vmatprep.subr.bf16.mxu0 0
    %2124 = vmatpush2.bf16.msra.mxu0 0
    %2125 = vmatprep.subr.bf16.mxu0 0
    %2126 = vmatpush2.bf16.msra.mxu0 0
    %2127 = vmatprep.subr.bf16.mxu0 0
    %2128 = vmatpush2.bf16.msra.mxu0 0
    %2129 = vmatprep.mubr.bf16.mxu0 0
    %2130 = vmatmul.mubr.bf16.gmra.mxu0 %v1874
    %v2131 = vpop.f32.mrf.mxu0
    %v2132 = vadd.f32 %v1922, %v2131
    %v2133 = vpop.f32.mrf.mxu0
    %v2134 = vpop.f32.mrf.mxu0
    %v2135 = vadd.f32 %v1922, %v2134
    %v2136 = vpop.f32.mrf.mxu0
    %2137 = vdwg.mxu0
    %v2138 = vmul.f32 %v2089, 0.125
    %v2139 = vmul.f32 %v2093, 0.125
    %v2140 = vmul.f32 %v2138, %v155
    %v2141 = vmul.f32 %v2139, %v155
    %2142 = vmatprep.subr.mxu0 0.0
    %2143 = vmatpush1.xpose.msra.mxu0 0.0
    %2144 = vmatprep.subr.mxu0 0.0
    %2145 = vmatpush1.xpose.msra.mxu0 0.0
    %2146 = vmatprep.subr.mxu0 0.0
    %2147 = vmatpush1.xpose.msra.mxu0 0.0
    %2148 = vmatprep.subr.mxu0 0.0
    %2149 = vmatpush1.xpose.msra.mxu0 0.0
    %2150 = vmatprep.subr.mxu0 0.0
    %2151 = vmatpush1.xpose.msra.mxu0 0.0
    %2152 = vmatprep.subr.mxu0 0.0
    %2153 = vmatpush1.xpose.msra.mxu0 0.0
    %2154 = vmatprep.subr.mxu0 0.0
    %2155 = vmatpush1.xpose.msra.mxu0 0.0
    %2156 = vmatprep.subr.mxu0 0.0
    %2157 = vmatpush1.xpose.msra.mxu0 0.0
    %2158 = vmatprep.subr.mxu0 0.0
    %2159 = vmatpush1.xpose.msra.mxu0 0.0
    %2160 = vmatprep.subr.mxu0 0.0
    %2161 = vmatpush1.xpose.msra.mxu0 0.0
    %2162 = vmatprep.subr.mxu0 0.0
    %2163 = vmatpush1.xpose.msra.mxu0 0.0
    %2164 = vmatprep.subr.mxu0 0.0
    %2165 = vmatpush1.xpose.msra.mxu0 0.0
    %2166 = vmatprep.subr.mxu0 0.0
    %2167 = vmatpush1.xpose.msra.mxu0 0.0
    %2168 = vmatprep.subr.mxu0 0.0
    %2169 = vmatpush1.xpose.msra.mxu0 0.0
    %2170 = vmatprep.subr.mxu0 0.0
    %2171 = vmatpush1.xpose.msra.mxu0 %v2095
    %2172 = vmatprep.subr.mxu0 0.0
    %2173 = vmatpush1.xpose.msra.mxu0 %v2091
    %2174 = vmatprep.subr.mxu0 0.0
    %2175 = vmatpush2.xpose.msra.mxu0 0.0
    %2176 = vmatprep.subr.mxu0 0.0
    %2177 = vmatpush2.xpose.msra.mxu0 0.0
    %2178 = vmatprep.subr.mxu0 0.0
    %2179 = vmatpush2.xpose.msra.mxu0 0.0
    %2180 = vmatprep.subr.mxu0 0.0
    %2181 = vmatpush2.xpose.msra.mxu0 0.0
    %2182 = vmatprep.subr.mxu0 0.0
    %2183 = vmatpush2.xpose.msra.mxu0 0.0
    %2184 = vmatprep.subr.mxu0 0.0
    %2185 = vmatpush2.xpose.msra.mxu0 0.0
    %2186 = vmatprep.subr.mxu0 0.0
    %2187 = vmatpush2.xpose.msra.mxu0 0.0
    %2188 = vmatprep.subr.mxu0 0.0
    %2189 = vmatpush2.xpose.msra.mxu0 0.0
    %2190 = vmatprep.subr.mxu0 0.0
    %2191 = vmatpush2.xpose.msra.mxu0 0.0
    %2192 = vmatprep.subr.mxu0 0.0
    %2193 = vmatpush2.xpose.msra.mxu0 0.0
    %2194 = vmatprep.subr.mxu0 0.0
    %2195 = vmatpush2.xpose.msra.mxu0 0.0
    %2196 = vmatprep.subr.mxu0 0.0
    %2197 = vmatpush2.xpose.msra.mxu0 0.0
    %2198 = vmatprep.subr.mxu0 0.0
    %2199 = vmatpush2.xpose.msra.mxu0 0.0
    %2200 = vmatprep.subr.mxu0 0.0
    %2201 = vmatpush2.xpose.msra.mxu0 0.0
    %2202 = vmatprep.subr.mxu0 0.0
    %2203 = vmatpush2.xpose.msra.mxu0 0.0
    %2204 = vmatprep.subr.mxu0 0.0
    %2205 = vmatpush2.xpose.msra.mxu0 0.0
    %2206 = vmatprep.mubr.f32.mxu0 0.0
    %2207 = vmatmul.mubr.f32.gmra.mxu0 %v2140
    %v2208 = vpop.f32.mrf.mxu0
    %v2209 = vadd.f32 %v173, %v2208
    %v2210 = vpop.f32.mrf.mxu0
    %2211 = vmatprep.mubr.f32.mxu0 0.0
    %2212 = vmatmul.mubr.f32.gmra.mxu0 %v2141
    %v2213 = vpop.f32.mrf.mxu0
    %v2214 = vadd.f32 %v174, %v2213
    %v2215 = vpop.f32.mrf.mxu0
    %2216 = vdwg.mxu0
    %v2217 = vsel %vm665, %v2209, -inf
    %2218 = vmax.xlane.f32.xlu0 %v2217
    %v2219 = vpop.xlane.xlu0 %2218
    %v2220 = vsel %vm665, %v2214, -inf
    %2221 = vmax.xlane.f32.xlu0 %v2220
    %v2222 = vpop.xlane.xlu0 %2221
    %v2223 = vsub.f32 %v2209, %v2219
    %v2224 = vsub.f32 %v2214, %v2222
    %v2225 = vmul.f32 %v2223, 1.442695
    %v2226 = vpow.pop %v2225
    %v2227 = vmul.f32 %v2224, 1.442695
    %v2228 = vpow.pop %v2227
    %v2229 = vsel %vm665, %v2226, 0.0
    %2230 = vadd.xlane.f32.xlu0 %v2229
    %v2231 = vpop.xlane.xlu0 %2230
    %v2232 = vsel %vm665, %v2228, 0.0
    %2233 = vadd.xlane.f32.xlu0 %v2232
    %v2234 = vpop.xlane.xlu0 %2233
    %v2235 = vrcp.pop %v2231
    %v2236 = vrcp.pop %v2234
    %v2237 = vmul.f32 %v2226, %v2235
    %v2238 = vmul.f32 %v2228, %v2236
    %v2239 = vmul.f32 %v2132, %v155
    %v2240 = vmul.f32 %v2135, %v155
    %v2241 = vmul.f32 %v2138, %v160
    %v2242 = vmul.f32 %v2139, %v160
    %2243 = vmatprep.subr.mxu0 0.0
    %2244 = vmatpush1.xpose.msra.mxu0 0.0
    %2245 = vmatprep.subr.mxu0 0.0
    %2246 = vmatpush1.xpose.msra.mxu0 0.0
    %2247 = vmatprep.subr.mxu0 0.0
    %2248 = vmatpush1.xpose.msra.mxu0 0.0
    %2249 = vmatprep.subr.mxu0 0.0
    %2250 = vmatpush1.xpose.msra.mxu0 0.0
    %2251 = vmatprep.subr.mxu0 0.0
    %2252 = vmatpush1.xpose.msra.mxu0 0.0
    %2253 = vmatprep.subr.mxu0 0.0
    %2254 = vmatpush1.xpose.msra.mxu0 0.0
    %2255 = vmatprep.subr.mxu0 0.0
    %2256 = vmatpush1.xpose.msra.mxu0 0.0
    %2257 = vmatprep.subr.mxu0 0.0
    %2258 = vmatpush1.xpose.msra.mxu0 0.0
    %2259 = vmatprep.subr.mxu0 0.0
    %2260 = vmatpush1.xpose.msra.mxu0 0.0
    %2261 = vmatprep.subr.mxu0 0.0
    %2262 = vmatpush1.xpose.msra.mxu0 0.0
    %2263 = vmatprep.subr.mxu0 0.0
    %2264 = vmatpush1.xpose.msra.mxu0 0.0
    %2265 = vmatprep.subr.mxu0 0.0
    %2266 = vmatpush1.xpose.msra.mxu0 0.0
    %2267 = vmatprep.subr.mxu0 0.0
    %2268 = vmatpush1.xpose.msra.mxu0 0.0
    %2269 = vmatprep.subr.mxu0 0.0
    %2270 = vmatpush1.xpose.msra.mxu0 0.0
    %2271 = vmatprep.subr.mxu0 0.0
    %2272 = vmatpush1.xpose.msra.mxu0 %v2095
    %2273 = vmatprep.subr.mxu0 0.0
    %2274 = vmatpush1.xpose.msra.mxu0 %v2091
    %2275 = vmatprep.subr.mxu0 0.0
    %2276 = vmatpush2.xpose.msra.mxu0 0.0
    %2277 = vmatprep.subr.mxu0 0.0
    %2278 = vmatpush2.xpose.msra.mxu0 0.0
    %2279 = vmatprep.subr.mxu0 0.0
    %2280 = vmatpush2.xpose.msra.mxu0 0.0
    %2281 = vmatprep.subr.mxu0 0.0
    %2282 = vmatpush2.xpose.msra.mxu0 0.0
    %2283 = vmatprep.subr.mxu0 0.0
    %2284 = vmatpush2.xpose.msra.mxu0 0.0
    %2285 = vmatprep.subr.mxu0 0.0
    %2286 = vmatpush2.xpose.msra.mxu0 0.0
    %2287 = vmatprep.subr.mxu0 0.0
    %2288 = vmatpush2.xpose.msra.mxu0 0.0
    %2289 = vmatprep.subr.mxu0 0.0
    %2290 = vmatpush2.xpose.msra.mxu0 0.0
    %2291 = vmatprep.subr.mxu0 0.0
    %2292 = vmatpush2.xpose.msra.mxu0 0.0
    %2293 = vmatprep.subr.mxu0 0.0
    %2294 = vmatpush2.xpose.msra.mxu0 0.0
    %2295 = vmatprep.subr.mxu0 0.0
    %2296 = vmatpush2.xpose.msra.mxu0 0.0
    %2297 = vmatprep.subr.mxu0 0.0
    %2298 = vmatpush2.xpose.msra.mxu0 0.0
    %2299 = vmatprep.subr.mxu0 0.0
    %2300 = vmatpush2.xpose.msra.mxu0 0.0
    %2301 = vmatprep.subr.mxu0 0.0
    %2302 = vmatpush2.xpose.msra.mxu0 0.0
    %2303 = vmatprep.subr.mxu0 0.0
    %2304 = vmatpush2.xpose.msra.mxu0 0.0
    %2305 = vmatprep.subr.mxu0 0.0
    %2306 = vmatpush2.xpose.msra.mxu0 0.0
    %2307 = vmatprep.mubr.f32.mxu0 0.0
    %2308 = vmatmul.mubr.f32.gmra.mxu0 %v2241
    %v2309 = vpop.f32.mrf.mxu0
    %v2310 = vadd.f32 %v173, %v2309
    %v2311 = vpop.f32.mrf.mxu0
    %2312 = vmatprep.mubr.f32.mxu0 0.0
    %2313 = vmatmul.mubr.f32.gmra.mxu0 %v2242
    %v2314 = vpop.f32.mrf.mxu0
    %v2315 = vadd.f32 %v174, %v2314
    %v2316 = vpop.f32.mrf.mxu0
    %2317 = vdwg.mxu0
    %v2318 = vsel %vm665, %v2310, -inf
    %2319 = vmax.xlane.f32.xlu0 %v2318
    %v2320 = vpop.xlane.xlu0 %2319
    %v2321 = vsel %vm665, %v2315, -inf
    %2322 = vmax.xlane.f32.xlu0 %v2321
    %v2323 = vpop.xlane.xlu0 %2322
    %v2324 = vsub.f32 %v2310, %v2320
    %v2325 = vsub.f32 %v2315, %v2323
    %v2326 = vmul.f32 %v2324, 1.442695
    %v2327 = vpow.pop %v2326
    %v2328 = vmul.f32 %v2325, 1.442695
    %v2329 = vpow.pop %v2328
    %v2330 = vsel %vm665, %v2327, 0.0
    %2331 = vadd.xlane.f32.xlu0 %v2330
    %v2332 = vpop.xlane.xlu0 %2331
    %v2333 = vsel %vm665, %v2329, 0.0
    %2334 = vadd.xlane.f32.xlu0 %v2333
    %v2335 = vpop.xlane.xlu0 %2334
    %v2336 = vrcp.pop %v2332
    %v2337 = vrcp.pop %v2335
    %v2338 = vmul.f32 %v2327, %v2336
    %v2339 = vmul.f32 %v2329, %v2337
    %v2340 = vmul.f32 %v2132, %v160
    %v2341 = vmul.f32 %v2135, %v160
    %v2343 = vsel %vm665, %v2338, 0
    %v2346 = vsel %vm665, %v2339, 0
    %2348 = vmatprep.subr.mxu0 0.0
    %2349 = vmatpush1.msra.mxu0 0.0
    %2350 = vmatprep.subr.mxu0 0.0
    %2351 = vmatpush1.msra.mxu0 0.0
    %2352 = vmatprep.subr.mxu0 0.0
    %2353 = vmatpush1.msra.mxu0 0.0
    %2354 = vmatprep.subr.mxu0 0.0
    %2355 = vmatpush1.msra.mxu0 0.0
    %2356 = vmatprep.subr.mxu0 0.0
    %2357 = vmatpush1.msra.mxu0 0.0
    %2358 = vmatprep.subr.mxu0 0.0
    %2359 = vmatpush1.msra.mxu0 0.0
    %2360 = vmatprep.subr.mxu0 0.0
    %2361 = vmatpush1.msra.mxu0 0.0
    %2362 = vmatprep.subr.mxu0 0.0
    %2363 = vmatpush1.msra.mxu0 0.0
    %2364 = vmatprep.subr.mxu0 0.0
    %2365 = vmatpush1.msra.mxu0 0.0
    %2366 = vmatprep.subr.mxu0 0.0
    %2367 = vmatpush1.msra.mxu0 0.0
    %2368 = vmatprep.subr.mxu0 0.0
    %2369 = vmatpush1.msra.mxu0 0.0
    %2370 = vmatprep.subr.mxu0 0.0
    %2371 = vmatpush1.msra.mxu0 0.0
    %2372 = vmatprep.subr.mxu0 0.0
    %2373 = vmatpush1.msra.mxu0 0.0
    %2374 = vmatprep.subr.mxu0 0.0
    %2375 = vmatpush1.msra.mxu0 0.0
    %2376 = vmatprep.subr.mxu0 0.0
    %2377 = vmatpush1.msra.mxu0 %v2341
    %2378 = vmatprep.subr.mxu0 0.0
    %2379 = vmatpush1.msra.mxu0 %v2340
    %2380 = vmatprep.subr.mxu0 0.0
    %2381 = vmatpush2.msra.mxu0 0.0
    %2382 = vmatprep.subr.mxu0 0.0
    %2383 = vmatpush2.msra.mxu0 0.0
    %2384 = vmatprep.subr.mxu0 0.0
    %2385 = vmatpush2.msra.mxu0 0.0
    %2386 = vmatprep.subr.mxu0 0.0
    %2387 = vmatpush2.msra.mxu0 0.0
    %2388 = vmatprep.subr.mxu0 0.0
    %2389 = vmatpush2.msra.mxu0 0.0
    %2390 = vmatprep.subr.mxu0 0.0
    %2391 = vmatpush2.msra.mxu0 0.0
    %2392 = vmatprep.subr.mxu0 0.0
    %2393 = vmatpush2.msra.mxu0 0.0
    %2394 = vmatprep.subr.mxu0 0.0
    %2395 = vmatpush2.msra.mxu0 0.0
    %2396 = vmatprep.subr.mxu0 0.0
    %2397 = vmatpush2.msra.mxu0 0.0
    %2398 = vmatprep.subr.mxu0 0.0
    %2399 = vmatpush2.msra.mxu0 0.0
    %2400 = vmatprep.subr.mxu0 0.0
    %2401 = vmatpush2.msra.mxu0 0.0
    %2402 = vmatprep.subr.mxu0 0.0
    %2403 = vmatpush2.msra.mxu0 0.0
    %2404 = vmatprep.subr.mxu0 0.0
    %2405 = vmatpush2.msra.mxu0 0.0
    %2406 = vmatprep.subr.mxu0 0.0
    %2407 = vmatpush2.msra.mxu0 0.0
    %2408 = vmatprep.subr.mxu0 0.0
    %2409 = vmatpush2.msra.mxu0 0.0
    %2410 = vmatprep.subr.mxu0 0.0
    %2411 = vmatpush2.msra.mxu0 0.0
    %2412 = vmatprep.mubr.f32.mxu0 0.0
    %2413 = vmatmul.mubr.f32.gmra.mxu0 %v2343
    %v2414 = vpop.f32.mrf.mxu0
    %v2415 = vadd.f32 0.0, %v2414
    %v2416 = vpop.f32.mrf.mxu0
    %2417 = vmatprep.mubr.f32.mxu0 0.0
    %2418 = vmatmul.mubr.f32.gmra.mxu0 %v2346
    %v2419 = vpop.f32.mrf.mxu0
    %v2420 = vadd.f32 0.0, %v2419
    %v2421 = vpop.f32.mrf.mxu0
    %2422 = vdwg.mxu0
    %v2424 = vsel %vm665, %v2237, 0
    %v2427 = vsel %vm665, %v2238, 0
    %2429 = vmatprep.subr.mxu0 0.0
    %2430 = vmatpush1.msra.mxu0 0.0
    %2431 = vmatprep.subr.mxu0 0.0
    %2432 = vmatpush1.msra.mxu0 0.0
    %2433 = vmatprep.subr.mxu0 0.0
    %2434 = vmatpush1.msra.mxu0 0.0
    %2435 = vmatprep.subr.mxu0 0.0
    %2436 = vmatpush1.msra.mxu0 0.0
    %2437 = vmatprep.subr.mxu0 0.0
    %2438 = vmatpush1.msra.mxu0 0.0
    %2439 = vmatprep.subr.mxu0 0.0
    %2440 = vmatpush1.msra.mxu0 0.0
    %2441 = vmatprep.subr.mxu0 0.0
    %2442 = vmatpush1.msra.mxu0 0.0
    %2443 = vmatprep.subr.mxu0 0.0
    %2444 = vmatpush1.msra.mxu0 0.0
    %2445 = vmatprep.subr.mxu0 0.0
    %2446 = vmatpush1.msra.mxu0 0.0
    %2447 = vmatprep.subr.mxu0 0.0
    %2448 = vmatpush1.msra.mxu0 0.0
    %2449 = vmatprep.subr.mxu0 0.0
    %2450 = vmatpush1.msra.mxu0 0.0
    %2451 = vmatprep.subr.mxu0 0.0
    %2452 = vmatpush1.msra.mxu0 0.0
    %2453 = vmatprep.subr.mxu0 0.0
    %2454 = vmatpush1.msra.mxu0 0.0
    %2455 = vmatprep.subr.mxu0 0.0
    %2456 = vmatpush1.msra.mxu0 0.0
    %2457 = vmatprep.subr.mxu0 0.0
    %2458 = vmatpush1.msra.mxu0 %v2240
    %2459 = vmatprep.subr.mxu0 0.0
    %2460 = vmatpush1.msra.mxu0 %v2239
    %2461 = vmatprep.subr.mxu0 0.0
    %2462 = vmatpush2.msra.mxu0 0.0
    %2463 = vmatprep.subr.mxu0 0.0
    %2464 = vmatpush2.msra.mxu0 0.0
    %2465 = vmatprep.subr.mxu0 0.0
    %2466 = vmatpush2.msra.mxu0 0.0
    %2467 = vmatprep.subr.mxu0 0.0
    %2468 = vmatpush2.msra.mxu0 0.0
    %2469 = vmatprep.subr.mxu0 0.0
    %2470 = vmatpush2.msra.mxu0 0.0
    %2471 = vmatprep.subr.mxu0 0.0
    %2472 = vmatpush2.msra.mxu0 0.0
    %2473 = vmatprep.subr.mxu0 0.0
    %2474 = vmatpush2.msra.mxu0 0.0
    %2475 = vmatprep.subr.mxu0 0.0
    %2476 = vmatpush2.msra.mxu0 0.0
    %2477 = vmatprep.subr.mxu0 0.0
    %2478 = vmatpush2.msra.mxu0 0.0
    %2479 = vmatprep.subr.mxu0 0.0
    %2480 = vmatpush2.msra.mxu0 0.0
    %2481 = vmatprep.subr.mxu0 0.0
    %2482 = vmatpush2.msra.mxu0 0.0
    %2483 = vmatprep.subr.mxu0 0.0
    %2484 = vmatpush2.msra.mxu0 0.0
    %2485 = vmatprep.subr.mxu0 0.0
    %2486 = vmatpush2.msra.mxu0 0.0
    %2487 = vmatprep.subr.mxu0 0.0
    %2488 = vmatpush2.msra.mxu0 0.0
    %2489 = vmatprep.subr.mxu0 0.0
    %2490 = vmatpush2.msra.mxu0 0.0
    %2491 = vmatprep.subr.mxu0 0.0
    %2492 = vmatpush2.msra.mxu0 0.0
    %2493 = vmatprep.mubr.f32.mxu0 0.0
    %2494 = vmatmul.mubr.f32.gmra.mxu0 %v2424
    %v2495 = vpop.f32.mrf.mxu0
    %v2496 = vadd.f32 %v2415, %v2495
    %v2497 = vpop.f32.mrf.mxu0
    %2498 = vmatprep.mubr.f32.mxu0 0.0
    %2499 = vmatmul.mubr.f32.gmra.mxu0 %v2427
    %v2500 = vpop.f32.mrf.mxu0
    %v2501 = vadd.f32 %v2420, %v2500
    %v2502 = vpop.f32.mrf.mxu0
    %2503 = vdwg.mxu0
    %v2504 = vpack.c.bf16 %v2501, %v2496
    %s2505 = scalar_lea.vmem [#allocation4], 64
    %v2506 = vld [vmem:[%s2505] sm:$0xf]
    %v2507 = vld [vmem:[%s2505 + $0x4] sm:$0xf]
    %v2508 = vld [vmem:[%s2505 + $0x8] sm:$0xf]
    %v2509 = vld [vmem:[%s2505 + $0xc] sm:$0xf]
    %v2510 = vld [vmem:[%s2505 + $0x10] sm:$0xf]
    %v2511 = vld [vmem:[%s2505 + $0x14] sm:$0xf]
    %v2512 = vld [vmem:[%s2505 + $0x18] sm:$0xf]
    %v2513 = vld [vmem:[%s2505 + $0x1c] sm:$0xf]
    %v2514 = vld [vmem:[%s2505 + $0x20] sm:$0xf]
    %v2515 = vld [vmem:[%s2505 + $0x24] sm:$0xf]
    %v2516 = vld [vmem:[%s2505 + $0x28] sm:$0xf]
    %v2517 = vld [vmem:[%s2505 + $0x2c] sm:$0xf]
    %v2518 = vld [vmem:[%s2505 + $0x30] sm:$0xf]
    %v2519 = vld [vmem:[%s2505 + $0x34] sm:$0xf]
    %v2520 = vld [vmem:[%s2505 + $0x38] sm:$0xf]
    %v2521 = vld [vmem:[%s2505 + $0x3c] sm:$0xf]
    %v2522 = vld [vmem:[%s8 + $0x1] sm:$0x1]
    %v2523 = vlaneseq
    %v2524 = vshrl.u32 %v2523, 7
    %v2525 = vsub.s32 0, %v2524
    %v2526 = vrot.slane %v2522, %v2525
    %v2543 = vunpack.c.l.b16 %v2506
    %v2544 = vunpack.c.l.b16 %v2507
    %v2545 = vunpack.c.l.b16 %v2508
    %v2546 = vunpack.c.l.b16 %v2509
    %v2547 = vunpack.c.l.b16 %v2510
    %v2548 = vunpack.c.l.b16 %v2511
    %v2549 = vunpack.c.l.b16 %v2512
    %v2550 = vunpack.c.l.b16 %v2513
    %v2551 = vunpack.c.l.b16 %v2514
    %v2552 = vunpack.c.l.b16 %v2515
    %v2553 = vunpack.c.l.b16 %v2516
    %v2554 = vunpack.c.l.b16 %v2517
    %v2555 = vunpack.c.l.b16 %v2518
    %v2556 = vunpack.c.l.b16 %v2519
    %v2557 = vunpack.c.l.b16 %v2520
    %v2558 = vunpack.c.l.b16 %v2521
    %v2559 = vpack.c.b16 %v2544, %v2543
    %v2560 = vpack.c.b16 %v2546, %v2545
    %v2561 = vpack.c.b16 %v2548, %v2547
    %v2562 = vpack.c.b16 %v2550, %v2549
    %v2563 = vpack.c.b16 %v2552, %v2551
    %v2564 = vpack.c.b16 %v2554, %v2553
    %v2565 = vpack.c.b16 %v2556, %v2555
    %v2566 = vpack.c.b16 %v2558, %v2557
    %2575 = vmatprep.subr.bf16.mxu0 0
    %2576 = vmatpush1.bf16.msra.mxu0 %v2566
    %2577 = vmatprep.subr.bf16.mxu0 0
    %2578 = vmatpush1.bf16.msra.mxu0 %v2565
    %2579 = vmatprep.subr.bf16.mxu0 0
    %2580 = vmatpush1.bf16.msra.mxu0 %v2564
    %2581 = vmatprep.subr.bf16.mxu0 0
    %2582 = vmatpush1.bf16.msra.mxu0 %v2563
    %2583 = vmatprep.subr.bf16.mxu0 0
    %2584 = vmatpush1.bf16.msra.mxu0 %v2562
    %2585 = vmatprep.subr.bf16.mxu0 0
    %2586 = vmatpush1.bf16.msra.mxu0 %v2561
    %2587 = vmatprep.subr.bf16.mxu0 0
    %2588 = vmatpush1.bf16.msra.mxu0 %v2560
    %2589 = vmatprep.subr.bf16.mxu0 0
    %2590 = vmatpush1.bf16.msra.mxu0 %v2559
    %2591 = vmatprep.subr.bf16.mxu0 0
    %2592 = vmatpush2.bf16.msra.mxu0 0
    %2593 = vmatprep.subr.bf16.mxu0 0
    %2594 = vmatpush2.bf16.msra.mxu0 0
    %2595 = vmatprep.subr.bf16.mxu0 0
    %2596 = vmatpush2.bf16.msra.mxu0 0
    %2597 = vmatprep.subr.bf16.mxu0 0
    %2598 = vmatpush2.bf16.msra.mxu0 0
    %2599 = vmatprep.subr.bf16.mxu0 0
    %2600 = vmatpush2.bf16.msra.mxu0 0
    %2601 = vmatprep.subr.bf16.mxu0 0
    %2602 = vmatpush2.bf16.msra.mxu0 0
    %2603 = vmatprep.subr.bf16.mxu0 0
    %2604 = vmatpush2.bf16.msra.mxu0 0
    %2605 = vmatprep.subr.bf16.mxu0 0
    %2606 = vmatpush2.bf16.msra.mxu0 0
    %2607 = vmatprep.mubr.bf16.mxu0 0
    %2608 = vmatmul.mubr.bf16.gmra.mxu0 %v2504
    %v2609 = vpop.f32.mrf.mxu0
    %v2610 = vadd.f32 %v2526, %v2609
    %v2611 = vpop.f32.mrf.mxu0
    %v2612 = vpop.f32.mrf.mxu0
    %v2613 = vadd.f32 %v2526, %v2612
    %v2614 = vpop.f32.mrf.mxu0
    %2615 = vdwg.mxu0
    %v2616 = vld [vmem:[%s9 + $0x1] sm:$0x1]
    %v2617 = vlaneseq
    %v2618 = vshrl.u32 %v2617, 7
    %v2619 = vsub.s32 0, %v2618
    %v2620 = vrot.slane %v2616, %v2619
    %v2621 = vmul.f32 %v2620, %v2610
    %v2622 = vmul.f32 %v2620, %v2613
    %v2623 = vadd.f32 %v1836, %v2621
    %v2624 = vadd.f32 %v1837, %v2622
    %v2625 = vld [vmem:[%s10 + $0x1] sm:$0x1]
    %v2626 = vld [vmem:[%s11 + $0x1] sm:$0x1]
    %2627 = vadd.xlane.f32.xlu0 %v2623
    %v2628 = vpop.xlane.xlu0 %2627
    %2629 = vadd.xlane.f32.xlu0 %v2624
    %v2630 = vpop.xlane.xlu0 %2629
    %v2631 = vmul.f32 %v2628, %v293
    %v2632 = vmul.f32 %v2630, %v293
    %v2633 = vsub.f32 %v2623, %v2631
    %v2634 = vsub.f32 %v2624, %v2632
    %v2635 = vmul.f32 %v2633, %v2633
    %v2636 = vmul.f32 %v2634, %v2634
    %2637 = vadd.xlane.f32.xlu0 %v2635
    %v2638 = vpop.xlane.xlu0 %2637
    %2639 = vadd.xlane.f32.xlu0 %v2636
    %v2640 = vpop.xlane.xlu0 %2639
    %v2641 = vmul.f32 %v2638, %v293
    %v2642 = vmul.f32 %v2640, %v293
    %v2643 = vadd.f32 %v2641, 1e-06
    %v2644 = vadd.f32 %v2642, 1e-06
    %v2645 = vrsqrt.pop %v2643
    %v2646 = vrsqrt.pop %v2644
    %v2647 = vmul.f32 %v2633, %v2645
    %v2648 = vmul.f32 %v2634, %v2646
    %v2649 = vlaneseq
    %v2650 = vshrl.u32 %v2649, 7
    %v2651 = vsub.s32 0, %v2650
    %v2652 = vrot.slane %v2625, %v2651
    %v2653 = vmul.f32 %v2647, %v2652
    %v2654 = vmul.f32 %v2648, %v2652
    %v2655 = vlaneseq
    %v2656 = vshrl.u32 %v2655, 7
    %v2657 = vsub.s32 0, %v2656
    %v2658 = vrot.slane %v2626, %v2657
    %v2659 = vadd.f32 %v2653, %v2658
    %v2660 = vadd.f32 %v2654, %v2658
    %v2661 = vpack.c.bf16 %v2660, %v2659
    %s2662 = scalar_lea.vmem %s12, 256
    %v2663 = vld [vmem:[%s2662] sm:$0xff]
    %v2664 = vld [vmem:[%s2662 + $0x8] sm:$0xff]
    %v2665 = vld [vmem:[%s2662 + $0x10] sm:$0xff]
    %v2666 = vld [vmem:[%s2662 + $0x18] sm:$0xff]
    %v2667 = vld [vmem:[%s2662 + $0x20] sm:$0xff]
    %v2668 = vld [vmem:[%s2662 + $0x28] sm:$0xff]
    %v2669 = vld [vmem:[%s2662 + $0x30] sm:$0xff]
    %v2670 = vld [vmem:[%s2662 + $0x38] sm:$0xff]
    %v2671 = vld [vmem:[%s2662 + $0x40] sm:$0xff]
    %v2672 = vld [vmem:[%s2662 + $0x48] sm:$0xff]
    %v2673 = vld [vmem:[%s2662 + $0x50] sm:$0xff]
    %v2674 = vld [vmem:[%s2662 + $0x58] sm:$0xff]
    %v2675 = vld [vmem:[%s2662 + $0x60] sm:$0xff]
    %v2676 = vld [vmem:[%s2662 + $0x68] sm:$0xff]
    %v2677 = vld [vmem:[%s2662 + $0x70] sm:$0xff]
    %v2678 = vld [vmem:[%s2662 + $0x78] sm:$0xff]
    %v2679 = vld [vmem:[%s2662 + $0x80] sm:$0xff]
    %v2680 = vld [vmem:[%s2662 + $0x88] sm:$0xff]
    %v2681 = vld [vmem:[%s2662 + $0x90] sm:$0xff]
    %v2682 = vld [vmem:[%s2662 + $0x98] sm:$0xff]
    %v2683 = vld [vmem:[%s2662 + $0xa0] sm:$0xff]
    %v2684 = vld [vmem:[%s2662 + $0xa8] sm:$0xff]
    %v2685 = vld [vmem:[%s2662 + $0xb0] sm:$0xff]
    %v2686 = vld [vmem:[%s2662 + $0xb8] sm:$0xff]
    %v2687 = vld [vmem:[%s2662 + $0xc0] sm:$0xff]
    %v2688 = vld [vmem:[%s2662 + $0xc8] sm:$0xff]
    %v2689 = vld [vmem:[%s2662 + $0xd0] sm:$0xff]
    %v2690 = vld [vmem:[%s2662 + $0xd8] sm:$0xff]
    %v2691 = vld [vmem:[%s2662 + $0xe0] sm:$0xff]
    %v2692 = vld [vmem:[%s2662 + $0xe8] sm:$0xff]
    %v2693 = vld [vmem:[%s2662 + $0xf0] sm:$0xff]
    %v2694 = vld [vmem:[%s2662 + $0xf8] sm:$0xff]
    %s2695 = scalar_lea.vmem %s13, 1
    %v2696 = vld [vmem:[%s2695] ss:$2 sm:$0xf]
    %v2698 = vlaneseq
    %v2699 = vshrl.u32 %v2698, 7
    %v2700 = vsub.s32 0, %v2699
    %v2701 = vrot.slane %v2696, %v2700
    %v2702 = vlaneseq
    %v2703 = vshrl.u32 %v2702, 7
    %v2704 = vsub.s32 1, %v2703
    %v2705 = vrot.slane %v2696, %v2704
    %v2706 = vlaneseq
    %v2707 = vshrl.u32 %v2706, 7
    %v2708 = vsub.s32 2, %v2707
    %v2709 = vrot.slane %v2696, %v2708
    %v2710 = vlaneseq
    %v2711 = vshrl.u32 %v2710, 7
    %v2712 = vsub.s32 3, %v2711
    %v2713 = vrot.slane %v2696, %v2712
    %v2750 = vunpack.c.l.b16 %v2663
    %v2751 = vunpack.c.h.b16 %v2663
    %v2752 = vunpack.c.l.b16 %v2664
    %v2753 = vunpack.c.h.b16 %v2664
    %v2754 = vunpack.c.l.b16 %v2665
    %v2755 = vunpack.c.h.b16 %v2665
    %v2756 = vunpack.c.l.b16 %v2666
    %v2757 = vunpack.c.h.b16 %v2666
    %v2758 = vunpack.c.l.b16 %v2667
    %v2759 = vunpack.c.h.b16 %v2667
    %v2760 = vunpack.c.l.b16 %v2668
    %v2761 = vunpack.c.h.b16 %v2668
    %v2762 = vunpack.c.l.b16 %v2669
    %v2763 = vunpack.c.h.b16 %v2669
    %v2764 = vunpack.c.l.b16 %v2670
    %v2765 = vunpack.c.h.b16 %v2670
    %v2766 = vunpack.c.l.b16 %v2671
    %v2767 = vunpack.c.h.b16 %v2671
    %v2768 = vunpack.c.l.b16 %v2672
    %v2769 = vunpack.c.h.b16 %v2672
    %v2770 = vunpack.c.l.b16 %v2673
    %v2771 = vunpack.c.h.b16 %v2673
    %v2772 = vunpack.c.l.b16 %v2674
    %v2773 = vunpack.c.h.b16 %v2674
    %v2774 = vunpack.c.l.b16 %v2675
    %v2775 = vunpack.c.h.b16 %v2675
    %v2776 = vunpack.c.l.b16 %v2676
    %v2777 = vunpack.c.h.b16 %v2676
    %v2778 = vunpack.c.l.b16 %v2677
    %v2779 = vunpack.c.h.b16 %v2677
    %v2780 = vunpack.c.l.b16 %v2678
    %v2781 = vunpack.c.h.b16 %v2678
    %v2782 = vunpack.c.l.b16 %v2679
    %v2783 = vunpack.c.h.b16 %v2679
    %v2784 = vunpack.c.l.b16 %v2680
    %v2785 = vunpack.c.h.b16 %v2680
    %v2786 = vunpack.c.l.b16 %v2681
    %v2787 = vunpack.c.h.b16 %v2681
    %v2788 = vunpack.c.l.b16 %v2682
    %v2789 = vunpack.c.h.b16 %v2682
    %v2790 = vunpack.c.l.b16 %v2683
    %v2791 = vunpack.c.h.b16 %v2683
    %v2792 = vunpack.c.l.b16 %v2684
    %v2793 = vunpack.c.h.b16 %v2684
    %v2794 = vunpack.c.l.b16 %v2685
    %v2795 = vunpack.c.h.b16 %v2685
    %v2796 = vunpack.c.l.b16 %v2686
    %v2797 = vunpack.c.h.b16 %v2686
    %v2798 = vunpack.c.l.b16 %v2687
    %v2799 = vunpack.c.h.b16 %v2687
    %v2800 = vunpack.c.l.b16 %v2688
    %v2801 = vunpack.c.h.b16 %v2688
    %v2802 = vunpack.c.l.b16 %v2689
    %v2803 = vunpack.c.h.b16 %v2689
    %v2804 = vunpack.c.l.b16 %v2690
    %v2805 = vunpack.c.h.b16 %v2690
    %v2806 = vunpack.c.l.b16 %v2691
    %v2807 = vunpack.c.h.b16 %v2691
    %v2808 = vunpack.c.l.b16 %v2692
    %v2809 = vunpack.c.h.b16 %v2692
    %v2810 = vunpack.c.l.b16 %v2693
    %v2811 = vunpack.c.h.b16 %v2693
    %v2812 = vunpack.c.l.b16 %v2694
    %v2813 = vunpack.c.h.b16 %v2694
    %v2814 = vpack.c.b16 %v2754, %v2750
    %v2815 = vpack.c.b16 %v2755, %v2751
    %v2816 = vpack.c.b16 %v2756, %v2752
    %v2817 = vpack.c.b16 %v2757, %v2753
    %v2818 = vpack.c.b16 %v2762, %v2758
    %v2819 = vpack.c.b16 %v2763, %v2759
    %v2820 = vpack.c.b16 %v2764, %v2760
    %v2821 = vpack.c.b16 %v2765, %v2761
    %v2822 = vpack.c.b16 %v2770, %v2766
    %v2823 = vpack.c.b16 %v2771, %v2767
    %v2824 = vpack.c.b16 %v2772, %v2768
    %v2825 = vpack.c.b16 %v2773, %v2769
    %v2826 = vpack.c.b16 %v2778, %v2774
    %v2827 = vpack.c.b16 %v2779, %v2775
    %v2828 = vpack.c.b16 %v2780, %v2776
    %v2829 = vpack.c.b16 %v2781, %v2777
    %v2830 = vpack.c.b16 %v2786, %v2782
    %v2831 = vpack.c.b16 %v2787, %v2783
    %v2832 = vpack.c.b16 %v2788, %v2784
    %v2833 = vpack.c.b16 %v2789, %v2785
    %v2834 = vpack.c.b16 %v2794, %v2790
    %v2835 = vpack.c.b16 %v2795, %v2791
    %v2836 = vpack.c.b16 %v2796, %v2792
    %v2837 = vpack.c.b16 %v2797, %v2793
    %v2838 = vpack.c.b16 %v2802, %v2798
    %v2839 = vpack.c.b16 %v2803, %v2799
    %v2840 = vpack.c.b16 %v2804, %v2800
    %v2841 = vpack.c.b16 %v2805, %v2801
    %v2842 = vpack.c.b16 %v2810, %v2806
    %v2843 = vpack.c.b16 %v2811, %v2807
    %v2844 = vpack.c.b16 %v2812, %v2808
    %v2845 = vpack.c.b16 %v2813, %v2809
    %2878 = vmatprep.subr.bf16.mxu0 %v2843
    %2879 = vmatpush1.bf16.msra.mxu0 %v2842
    %2880 = vmatprep.subr.bf16.mxu0 %v2839
    %2881 = vmatpush1.bf16.msra.mxu0 %v2838
    %2882 = vmatprep.subr.bf16.mxu0 %v2835
    %2883 = vmatpush1.bf16.msra.mxu0 %v2834
    %2884 = vmatprep.subr.bf16.mxu0 %v2831
    %2885 = vmatpush1.bf16.msra.mxu0 %v2830
    %2886 = vmatprep.subr.bf16.mxu0 %v2827
    %2887 = vmatpush1.bf16.msra.mxu0 %v2826
    %2888 = vmatprep.subr.bf16.mxu0 %v2823
    %2889 = vmatpush1.bf16.msra.mxu0 %v2822
    %2890 = vmatprep.subr.bf16.mxu0 %v2819
    %2891 = vmatpush1.bf16.msra.mxu0 %v2818
    %2892 = vmatprep.subr.bf16.mxu0 %v2815
    %2893 = vmatpush1.bf16.msra.mxu0 %v2814
    %2894 = vmatprep.subr.bf16.mxu0 0
    %2895 = vmatpush2.bf16.msra.mxu0 0
    %2896 = vmatprep.subr.bf16.mxu0 0
    %2897 = vmatpush2.bf16.msra.mxu0 0
    %2898 = vmatprep.subr.bf16.mxu0 0
    %2899 = vmatpush2.bf16.msra.mxu0 0
    %2900 = vmatprep.subr.bf16.mxu0 0
    %2901 = vmatpush2.bf16.msra.mxu0 0
    %2902 = vmatprep.subr.bf16.mxu0 0
    %2903 = vmatpush2.bf16.msra.mxu0 0
    %2904 = vmatprep.subr.bf16.mxu0 0
    %2905 = vmatpush2.bf16.msra.mxu0 0
    %2906 = vmatprep.subr.bf16.mxu0 0
    %2907 = vmatpush2.bf16.msra.mxu0 0
    %2908 = vmatprep.subr.bf16.mxu0 0
    %2909 = vmatpush2.bf16.msra.mxu0 0
    %2910 = vmatprep.mubr.bf16.mxu0 0
    %2911 = vmatmul.mubr.bf16.gmra.mxu0 %v2661
    %v2912 = vpop.f32.mrf.mxu0
    %v2913 = vadd.f32 %v2701, %v2912
    %v2914 = vpop.f32.mrf.mxu0
    %v2915 = vadd.f32 %v2705, %v2914
    %v2916 = vpop.f32.mrf.mxu0
    %v2917 = vadd.f32 %v2701, %v2916
    %v2918 = vpop.f32.mrf.mxu0
    %v2919 = vadd.f32 %v2705, %v2918
    %2920 = vdwg.mxu0
    %2921 = vmatprep.subr.bf16.mxu0 %v2845
    %2922 = vmatpush1.bf16.msra.mxu0 %v2844
    %2923 = vmatprep.subr.bf16.mxu0 %v2841
    %2924 = vmatpush1.bf16.msra.mxu0 %v2840
    %2925 = vmatprep.subr.bf16.mxu0 %v2837
    %2926 = vmatpush1.bf16.msra.mxu0 %v2836
    %2927 = vmatprep.subr.bf16.mxu0 %v2833
    %2928 = vmatpush1.bf16.msra.mxu0 %v2832
    %2929 = vmatprep.subr.bf16.mxu0 %v2829
    %2930 = vmatpush1.bf16.msra.mxu0 %v2828
    %2931 = vmatprep.subr.bf16.mxu0 %v2825
    %2932 = vmatpush1.bf16.msra.mxu0 %v2824
    %2933 = vmatprep.subr.bf16.mxu0 %v2821
    %2934 = vmatpush1.bf16.msra.mxu0 %v2820
    %2935 = vmatprep.subr.bf16.mxu0 %v2817
    %2936 = vmatpush1.bf16.msra.mxu0 %v2816
    %2937 = vmatprep.subr.bf16.mxu0 0
    %2938 = vmatpush2.bf16.msra.mxu0 0
    %2939 = vmatprep.subr.bf16.mxu0 0
    %2940 = vmatpush2.bf16.msra.mxu0 0
    %2941 = vmatprep.subr.bf16.mxu0 0
    %2942 = vmatpush2.bf16.msra.mxu0 0
    %2943 = vmatprep.subr.bf16.mxu0 0
    %2944 = vmatpush2.bf16.msra.mxu0 0
    %2945 = vmatprep.subr.bf16.mxu0 0
    %2946 = vmatpush2.bf16.msra.mxu0 0
    %2947 = vmatprep.subr.bf16.mxu0 0
    %2948 = vmatpush2.bf16.msra.mxu0 0
    %2949 = vmatprep.subr.bf16.mxu0 0
    %2950 = vmatpush2.bf16.msra.mxu0 0
    %2951 = vmatprep.subr.bf16.mxu0 0
    %2952 = vmatpush2.bf16.msra.mxu0 0
    %2953 = vmatprep.mubr.bf16.mxu0 0
    %2954 = vmatmul.mubr.bf16.gmra.mxu0 %v2661
    %v2955 = vpop.f32.mrf.mxu0
    %v2956 = vadd.f32 %v2709, %v2955
    %v2957 = vpop.f32.mrf.mxu0
    %v2958 = vadd.f32 %v2713, %v2957
    %v2959 = vpop.f32.mrf.mxu0
    %v2960 = vadd.f32 %v2709, %v2959
    %v2961 = vpop.f32.mrf.mxu0
    %v2962 = vadd.f32 %v2713, %v2961
    %2963 = vdwg.mxu0
    %v2964 = vmul.f32 %v2913, %v2913
    %v2965 = vmul.f32 %v2915, %v2915
    %v2966 = vmul.f32 %v2956, %v2956
    %v2967 = vmul.f32 %v2958, %v2958
    %v2968 = vmul.f32 %v2917, %v2917
    %v2969 = vmul.f32 %v2919, %v2919
    %v2970 = vmul.f32 %v2960, %v2960
    %v2971 = vmul.f32 %v2962, %v2962
    %v2972 = vmul.f32 %v2913, %v2964
    %v2973 = vmul.f32 %v2915, %v2965
    %v2974 = vmul.f32 %v2956, %v2966
    %v2975 = vmul.f32 %v2958, %v2967
    %v2976 = vmul.f32 %v2917, %v2968
    %v2977 = vmul.f32 %v2919, %v2969
    %v2978 = vmul.f32 %v2960, %v2970
    %v2979 = vmul.f32 %v2962, %v2971
    %v2980 = vmul.f32 %v2972, 0.044715
    %v2981 = vmul.f32 %v2973, 0.044715
    %v2982 = vmul.f32 %v2974, 0.044715
    %v2983 = vmul.f32 %v2975, 0.044715
    %v2984 = vmul.f32 %v2976, 0.044715
    %v2985 = vmul.f32 %v2977, 0.044715
    %v2986 = vmul.f32 %v2978, 0.044715
    %v2987 = vmul.f32 %v2979, 0.044715
    %v2988 = vadd.f32 %v2913, %v2980
    %v2989 = vadd.f32 %v2915, %v2981
    %v2990 = vadd.f32 %v2956, %v2982
    %v2991 = vadd.f32 %v2958, %v2983
    %v2992 = vadd.f32 %v2917, %v2984
    %v2993 = vadd.f32 %v2919, %v2985
    %v2994 = vadd.f32 %v2960, %v2986
    %v2995 = vadd.f32 %v2962, %v2987
    %v2996 = vmul.f32 %v2988, 0.7978846
    %v2997 = vmul.f32 %v2989, 0.7978846
    %v2998 = vmul.f32 %v2990, 0.7978846
    %v2999 = vmul.f32 %v2991, 0.7978846
    %v3000 = vmul.f32 %v2992, 0.7978846
    %v3001 = vmul.f32 %v2993, 0.7978846
    %v3002 = vmul.f32 %v2994, 0.7978846
    %v3003 = vmul.f32 %v2995, 0.7978846
    %v3004 = vtanh.pop %v2996
    %v3005 = vtanh.pop %v2997
    %v3006 = vtanh.pop %v2998
    %v3007 = vtanh.pop %v2999
    %v3008 = vtanh.pop %v3000
    %v3009 = vtanh.pop %v3001
    %v3010 = vtanh.pop %v3002
    %v3011 = vtanh.pop %v3003
    %v3012 = vadd.f32 %v3004, 1.0
    %v3013 = vadd.f32 %v3005, 1.0
    %v3014 = vadd.f32 %v3006, 1.0
    %v3015 = vadd.f32 %v3007, 1.0
    %v3016 = vadd.f32 %v3008, 1.0
    %v3017 = vadd.f32 %v3009, 1.0
    %v3018 = vadd.f32 %v3010, 1.0
    %v3019 = vadd.f32 %v3011, 1.0
    %v3020 = vmul.f32 %v3012, 0.5
    %v3021 = vmul.f32 %v3013, 0.5
    %v3022 = vmul.f32 %v3014, 0.5
    %v3023 = vmul.f32 %v3015, 0.5
    %v3024 = vmul.f32 %v3016, 0.5
    %v3025 = vmul.f32 %v3017, 0.5
    %v3026 = vmul.f32 %v3018, 0.5
    %v3027 = vmul.f32 %v3019, 0.5
    %v3028 = vmul.f32 %v2913, %v3020
    %v3029 = vmul.f32 %v2915, %v3021
    %v3030 = vmul.f32 %v2956, %v3022
    %v3031 = vmul.f32 %v2958, %v3023
    %v3032 = vmul.f32 %v2917, %v3024
    %v3033 = vmul.f32 %v2919, %v3025
    %v3034 = vmul.f32 %v2960, %v3026
    %v3035 = vmul.f32 %v2962, %v3027
    %v3036 = vpack.c.bf16 %v3032, %v3028
    %v3037 = vpack.c.bf16 %v3033, %v3029
    %v3038 = vpack.c.bf16 %v3034, %v3030
    %v3039 = vpack.c.bf16 %v3035, %v3031
    %s3040 = scalar_lea.vmem [#allocation6], 256
    %v3041 = vld [vmem:[%s3040] sm:$0xf]
    %v3042 = vld [vmem:[%s3040 + $0x4] sm:$0xf]
    %v3043 = vld [vmem:[%s3040 + $0x8] sm:$0xf]
    %v3044 = vld [vmem:[%s3040 + $0xc] sm:$0xf]
    %v3045 = vld [vmem:[%s3040 + $0x10] sm:$0xf]
    %v3046 = vld [vmem:[%s3040 + $0x14] sm:$0xf]
    %v3047 = vld [vmem:[%s3040 + $0x18] sm:$0xf]
    %v3048 = vld [vmem:[%s3040 + $0x1c] sm:$0xf]
    %v3049 = vld [vmem:[%s3040 + $0x20] sm:$0xf]
    %v3050 = vld [vmem:[%s3040 + $0x24] sm:$0xf]
    %v3051 = vld [vmem:[%s3040 + $0x28] sm:$0xf]
    %v3052 = vld [vmem:[%s3040 + $0x2c] sm:$0xf]
    %v3053 = vld [vmem:[%s3040 + $0x30] sm:$0xf]
    %v3054 = vld [vmem:[%s3040 + $0x34] sm:$0xf]
    %v3055 = vld [vmem:[%s3040 + $0x38] sm:$0xf]
    %v3056 = vld [vmem:[%s3040 + $0x3c] sm:$0xf]
    %v3057 = vld [vmem:[%s3040 + $0x40] sm:$0xf]
    %v3058 = vld [vmem:[%s3040 + $0x44] sm:$0xf]
    %v3059 = vld [vmem:[%s3040 + $0x48] sm:$0xf]
    %v3060 = vld [vmem:[%s3040 + $0x4c] sm:$0xf]
    %v3061 = vld [vmem:[%s3040 + $0x50] sm:$0xf]
    %v3062 = vld [vmem:[%s3040 + $0x54] sm:$0xf]
    %v3063 = vld [vmem:[%s3040 + $0x58] sm:$0xf]
    %v3064 = vld [vmem:[%s3040 + $0x5c] sm:$0xf]
    %v3065 = vld [vmem:[%s3040 + $0x60] sm:$0xf]
    %v3066 = vld [vmem:[%s3040 + $0x64] sm:$0xf]
    %v3067 = vld [vmem:[%s3040 + $0x68] sm:$0xf]
    %v3068 = vld [vmem:[%s3040 + $0x6c] sm:$0xf]
    %v3069 = vld [vmem:[%s3040 + $0x70] sm:$0xf]
    %v3070 = vld [vmem:[%s3040 + $0x74] sm:$0xf]
    %v3071 = vld [vmem:[%s3040 + $0x78] sm:$0xf]
    %v3072 = vld [vmem:[%s3040 + $0x7c] sm:$0xf]
    %v3073 = vld [vmem:[%s3040 + $0x80] sm:$0xf]
    %v3074 = vld [vmem:[%s3040 + $0x84] sm:$0xf]
    %v3075 = vld [vmem:[%s3040 + $0x88] sm:$0xf]
    %v3076 = vld [vmem:[%s3040 + $0x8c] sm:$0xf]
    %v3077 = vld [vmem:[%s3040 + $0x90] sm:$0xf]
    %v3078 = vld [vmem:[%s3040 + $0x94] sm:$0xf]
    %v3079 = vld [vmem:[%s3040 + $0x98] sm:$0xf]
    %v3080 = vld [vmem:[%s3040 + $0x9c] sm:$0xf]
    %v3081 = vld [vmem:[%s3040 + $0xa0] sm:$0xf]
    %v3082 = vld [vmem:[%s3040 + $0xa4] sm:$0xf]
    %v3083 = vld [vmem:[%s3040 + $0xa8] sm:$0xf]
    %v3084 = vld [vmem:[%s3040 + $0xac] sm:$0xf]
    %v3085 = vld [vmem:[%s3040 + $0xb0] sm:$0xf]
    %v3086 = vld [vmem:[%s3040 + $0xb4] sm:$0xf]
    %v3087 = vld [vmem:[%s3040 + $0xb8] sm:$0xf]
    %v3088 = vld [vmem:[%s3040 + $0xbc] sm:$0xf]
    %v3089 = vld [vmem:[%s3040 + $0xc0] sm:$0xf]
    %v3090 = vld [vmem:[%s3040 + $0xc4] sm:$0xf]
    %v3091 = vld [vmem:[%s3040 + $0xc8] sm:$0xf]
    %v3092 = vld [vmem:[%s3040 + $0xcc] sm:$0xf]
    %v3093 = vld [vmem:[%s3040 + $0xd0] sm:$0xf]
    %v3094 = vld [vmem:[%s3040 + $0xd4] sm:$0xf]
    %v3095 = vld [vmem:[%s3040 + $0xd8] sm:$0xf]
    %v3096 = vld [vmem:[%s3040 + $0xdc] sm:$0xf]
    %v3097 = vld [vmem:[%s3040 + $0xe0] sm:$0xf]
    %v3098 = vld [vmem:[%s3040 + $0xe4] sm:$0xf]
    %v3099 = vld [vmem:[%s3040 + $0xe8] sm:$0xf]
    %v3100 = vld [vmem:[%s3040 + $0xec] sm:$0xf]
    %v3101 = vld [vmem:[%s3040 + $0xf0] sm:$0xf]
    %v3102 = vld [vmem:[%s3040 + $0xf4] sm:$0xf]
    %v3103 = vld [vmem:[%s3040 + $0xf8] sm:$0xf]
    %v3104 = vld [vmem:[%s3040 + $0xfc] sm:$0xf]
    %v3105 = vld [vmem:[%s15 + $0x1] sm:$0x1]
    %v3106 = vlaneseq
    %v3107 = vshrl.u32 %v3106, 7
    %v3108 = vsub.s32 0, %v3107
    %v3109 = vrot.slane %v3105, %v3108
    %v3174 = vunpack.c.l.b16 %v3041
    %v3175 = vunpack.c.l.b16 %v3042
    %v3176 = vunpack.c.l.b16 %v3043
    %v3177 = vunpack.c.l.b16 %v3044
    %v3178 = vunpack.c.l.b16 %v3045
    %v3179 = vunpack.c.l.b16 %v3046
    %v3180 = vunpack.c.l.b16 %v3047
    %v3181 = vunpack.c.l.b16 %v3048
    %v3182 = vunpack.c.l.b16 %v3049
    %v3183 = vunpack.c.l.b16 %v3050
    %v3184 = vunpack.c.l.b16 %v3051
    %v3185 = vunpack.c.l.b16 %v3052
    %v3186 = vunpack.c.l.b16 %v3053
    %v3187 = vunpack.c.l.b16 %v3054
    %v3188 = vunpack.c.l.b16 %v3055
    %v3189 = vunpack.c.l.b16 %v3056
    %v3190 = vunpack.c.l.b16 %v3057
    %v3191 = vunpack.c.l.b16 %v3058
    %v3192 = vunpack.c.l.b16 %v3059
    %v3193 = vunpack.c.l.b16 %v3060
    %v3194 = vunpack.c.l.b16 %v3061
    %v3195 = vunpack.c.l.b16 %v3062
    %v3196 = vunpack.c.l.b16 %v3063
    %v3197 = vunpack.c.l.b16 %v3064
    %v3198 = vunpack.c.l.b16 %v3065
    %v3199 = vunpack.c.l.b16 %v3066
    %v3200 = vunpack.c.l.b16 %v3067
    %v3201 = vunpack.c.l.b16 %v3068
    %v3202 = vunpack.c.l.b16 %v3069
    %v3203 = vunpack.c.l.b16 %v3070
    %v3204 = vunpack.c.l.b16 %v3071
    %v3205 = vunpack.c.l.b16 %v3072
    %v3206 = vunpack.c.l.b16 %v3073
    %v3207 = vunpack.c.l.b16 %v3074
    %v3208 = vunpack.c.l.b16 %v3075
    %v3209 = vunpack.c.l.b16 %v3076
    %v3210 = vunpack.c.l.b16 %v3077
    %v3211 = vunpack.c.l.b16 %v3078
    %v3212 = vunpack.c.l.b16 %v3079
    %v3213 = vunpack.c.l.b16 %v3080
    %v3214 = vunpack.c.l.b16 %v3081
    %v3215 = vunpack.c.l.b16 %v3082
    %v3216 = vunpack.c.l.b16 %v3083
    %v3217 = vunpack.c.l.b16 %v3084
    %v3218 = vunpack.c.l.b16 %v3085
    %v3219 = vunpack.c.l.b16 %v3086
    %v3220 = vunpack.c.l.b16 %v3087
    %v3221 = vunpack.c.l.b16 %v3088
    %v3222 = vunpack.c.l.b16 %v3089
    %v3223 = vunpack.c.l.b16 %v3090
    %v3224 = vunpack.c.l.b16 %v3091
    %v3225 = vunpack.c.l.b16 %v3092
    %v3226 = vunpack.c.l.b16 %v3093
    %v3227 = vunpack.c.l.b16 %v3094
    %v3228 = vunpack.c.l.b16 %v3095
    %v3229 = vunpack.c.l.b16 %v3096
    %v3230 = vunpack.c.l.b16 %v3097
    %v3231 = vunpack.c.l.b16 %v3098
    %v3232 = vunpack.c.l.b16 %v3099
    %v3233 = vunpack.c.l.b16 %v3100
    %v3234 = vunpack.c.l.b16 %v3101
    %v3235 = vunpack.c.l.b16 %v3102
    %v3236 = vunpack.c.l.b16 %v3103
    %v3237 = vunpack.c.l.b16 %v3104
    %v3238 = vpack.c.b16 %v3175, %v3174
    %v3239 = vpack.c.b16 %v3177, %v3176
    %v3240 = vpack.c.b16 %v3179, %v3178
    %v3241 = vpack.c.b16 %v3181, %v3180
    %v3242 = vpack.c.b16 %v3183, %v3182
    %v3243 = vpack.c.b16 %v3185, %v3184
    %v3244 = vpack.c.b16 %v3187, %v3186
    %v3245 = vpack.c.b16 %v3189, %v3188
    %v3246 = vpack.c.b16 %v3191, %v3190
    %v3247 = vpack.c.b16 %v3193, %v3192
    %v3248 = vpack.c.b16 %v3195, %v3194
    %v3249 = vpack.c.b16 %v3197, %v3196
    %v3250 = vpack.c.b16 %v3199, %v3198
    %v3251 = vpack.c.b16 %v3201, %v3200
    %v3252 = vpack.c.b16 %v3203, %v3202
    %v3253 = vpack.c.b16 %v3205, %v3204
    %v3254 = vpack.c.b16 %v3207, %v3206
    %v3255 = vpack.c.b16 %v3209, %v3208
    %v3256 = vpack.c.b16 %v3211, %v3210
    %v3257 = vpack.c.b16 %v3213, %v3212
    %v3258 = vpack.c.b16 %v3215, %v3214
    %v3259 = vpack.c.b16 %v3217, %v3216
    %v3260 = vpack.c.b16 %v3219, %v3218
    %v3261 = vpack.c.b16 %v3221, %v3220
    %v3262 = vpack.c.b16 %v3223, %v3222
    %v3263 = vpack.c.b16 %v3225, %v3224
    %v3264 = vpack.c.b16 %v3227, %v3226
    %v3265 = vpack.c.b16 %v3229, %v3228
    %v3266 = vpack.c.b16 %v3231, %v3230
    %v3267 = vpack.c.b16 %v3233, %v3232
    %v3268 = vpack.c.b16 %v3235, %v3234
    %v3269 = vpack.c.b16 %v3237, %v3236
    %3302 = vmatprep.subr.bf16.mxu0 0
    %3303 = vmatpush1.bf16.msra.mxu0 %v3245
    %3304 = vmatprep.subr.bf16.mxu0 0
    %3305 = vmatpush1.bf16.msra.mxu0 %v3244
    %3306 = vmatprep.subr.bf16.mxu0 0
    %3307 = vmatpush1.bf16.msra.mxu0 %v3243
    %3308 = vmatprep.subr.bf16.mxu0 0
    %3309 = vmatpush1.bf16.msra.mxu0 %v3242
    %3310 = vmatprep.subr.bf16.mxu0 0
    %3311 = vmatpush1.bf16.msra.mxu0 %v3241
    %3312 = vmatprep.subr.bf16.mxu0 0
    %3313 = vmatpush1.bf16.msra.mxu0 %v3240
    %3314 = vmatprep.subr.bf16.mxu0 0
    %3315 = vmatpush1.bf16.msra.mxu0 %v3239
    %3316 = vmatprep.subr.bf16.mxu0 0
    %3317 = vmatpush1.bf16.msra.mxu0 %v3238
    %3318 = vmatprep.subr.bf16.mxu0 0
    %3319 = vmatpush2.bf16.msra.mxu0 %v3253
    %3320 = vmatprep.subr.bf16.mxu0 0
    %3321 = vmatpush2.bf16.msra.mxu0 %v3252
    %3322 = vmatprep.subr.bf16.mxu0 0
    %3323 = vmatpush2.bf16.msra.mxu0 %v3251
    %3324 = vmatprep.subr.bf16.mxu0 0
    %3325 = vmatpush2.bf16.msra.mxu0 %v3250
    %3326 = vmatprep.subr.bf16.mxu0 0
    %3327 = vmatpush2.bf16.msra.mxu0 %v3249
    %3328 = vmatprep.subr.bf16.mxu0 0
    %3329 = vmatpush2.bf16.msra.mxu0 %v3248
    %3330 = vmatprep.subr.bf16.mxu0 0
    %3331 = vmatpush2.bf16.msra.mxu0 %v3247
    %3332 = vmatprep.subr.bf16.mxu0 0
    %3333 = vmatpush2.bf16.msra.mxu0 %v3246
    %3334 = vmatprep.mubr.bf16.mxu0 %v3037
    %3335 = vmatmul.mubr.bf16.gmra.mxu0 %v3036
    %v3336 = vpop.f32.mrf.mxu0
    %v3337 = vadd.f32 %v3109, %v3336
    %v3338 = vpop.f32.mrf.mxu0
    %v3339 = vpop.f32.mrf.mxu0
    %v3340 = vadd.f32 %v3109, %v3339
    %v3341 = vpop.f32.mrf.mxu0
    %3342 = vdwg.mxu0
    %3343 = vmatprep.subr.bf16.mxu0 0
    %3344 = vmatpush1.bf16.msra.mxu0 %v3261
    %3345 = vmatprep.subr.bf16.mxu0 0
    %3346 = vmatpush1.bf16.msra.mxu0 %v3260
    %3347 = vmatprep.subr.bf16.mxu0 0
    %3348 = vmatpush1.bf16.msra.mxu0 %v3259
    %3349 = vmatprep.subr.bf16.mxu0 0
    %3350 = vmatpush1.bf16.msra.mxu0 %v3258
    %3351 = vmatprep.subr.bf16.mxu0 0
    %3352 = vmatpush1.bf16.msra.mxu0 %v3257
    %3353 = vmatprep.subr.bf16.mxu0 0
    %3354 = vmatpush1.bf16.msra.mxu0 %v3256
    %3355 = vmatprep.subr.bf16.mxu0 0
    %3356 = vmatpush1.bf16.msra.mxu0 %v3255
    %3357 = vmatprep.subr.bf16.mxu0 0
    %3358 = vmatpush1.bf16.msra.mxu0 %v3254
    %3359 = vmatprep.subr.bf16.mxu0 0
    %3360 = vmatpush2.bf16.msra.mxu0 %v3269
    %3361 = vmatprep.subr.bf16.mxu0 0
    %3362 = vmatpush2.bf16.msra.mxu0 %v3268
    %3363 = vmatprep.subr.bf16.mxu0 0
    %3364 = vmatpush2.bf16.msra.mxu0 %v3267
    %3365 = vmatprep.subr.bf16.mxu0 0
    %3366 = vmatpush2.bf16.msra.mxu0 %v3266
    %3367 = vmatprep.subr.bf16.mxu0 0
    %3368 = vmatpush2.bf16.msra.mxu0 %v3265
    %3369 = vmatprep.subr.bf16.mxu0 0
    %3370 = vmatpush2.bf16.msra.mxu0 %v3264
    %3371 = vmatprep.subr.bf16.mxu0 0
    %3372 = vmatpush2.bf16.msra.mxu0 %v3263
    %3373 = vmatprep.subr.bf16.mxu0 0
    %3374 = vmatpush2.bf16.msra.mxu0 %v3262
    %3375 = vmatprep.mubr.bf16.mxu0 %v3039
    %3376 = vmatmul.mubr.bf16.gmra.mxu0 %v3038
    %v3377 = vpop.f32.mrf.mxu0
    %v3378 = vadd.f32 %v3337, %v3377
    %v3379 = vpop.f32.mrf.mxu0
    %v3380 = vpop.f32.mrf.mxu0
    %v3381 = vadd.f32 %v3340, %v3380
    %v3382 = vpop.f32.mrf.mxu0
    %3383 = vdwg.mxu0
    %v3384 = vld [vmem:[%s16 + $0x1] sm:$0x1]
    %v3385 = vlaneseq
    %v3386 = vshrl.u32 %v3385, 7
    %v3387 = vsub.s32 0, %v3386
    %v3388 = vrot.slane %v3384, %v3387
    %v3389 = vmul.f32 %v3388, %v3378
    %v3390 = vmul.f32 %v3388, %v3381
    %v3391 = vadd.f32 %v2623, %v3389
    %v3392 = vadd.f32 %v2624, %v3390
    %v3393 = vld [vmem:[%s17] sm:$0x1]
    %v3394 = vld [vmem:[%s18] sm:$0x1]
    %3395 = vadd.xlane.f32.xlu0 %v3391
    %v3396 = vpop.xlane.xlu0 %3395
    %3397 = vadd.xlane.f32.xlu0 %v3392
    %v3398 = vpop.xlane.xlu0 %3397
    %v3399 = vmul.f32 %v3396, %v293
    %v3400 = vmul.f32 %v3398, %v293
    %v3401 = vsub.f32 %v3391, %v3399
    %v3402 = vsub.f32 %v3392, %v3400
    %v3403 = vmul.f32 %v3401, %v3401
    %v3404 = vmul.f32 %v3402, %v3402
    %3405 = vadd.xlane.f32.xlu0 %v3403
    %v3406 = vpop.xlane.xlu0 %3405
    %3407 = vadd.xlane.f32.xlu0 %v3404
    %v3408 = vpop.xlane.xlu0 %3407
    %v3409 = vmul.f32 %v3406, %v293
    %v3410 = vmul.f32 %v3408, %v293
    %v3411 = vadd.f32 %v3409, 1e-06
    %v3412 = vadd.f32 %v3410, 1e-06
    %v3413 = vrsqrt.pop %v3411
    %v3414 = vrsqrt.pop %v3412
    %v3415 = vmul.f32 %v3401, %v3413
    %v3416 = vmul.f32 %v3402, %v3414
    %v3418 = vlaneseq
    %v3419 = vshrl.u32 %v3418, 7
    %v3420 = vsub.s32 0, %v3419
    %v3421 = vrot.slane %v3393, %v3420
    %v3423 = vmul.f32 %v3415, %v3421
    %v3424 = vmul.f32 %v3416, %v3421
    %v3426 = vlaneseq
    %v3427 = vshrl.u32 %v3426, 7
    %v3428 = vsub.s32 0, %v3427
    %v3429 = vrot.slane %v3394, %v3428
    %v3431 = vadd.f32 %v3423, %v3429
    %v3432 = vadd.f32 %v3424, %v3429
    %v3433 = vpack.c.bf16 %v3432, %v3431
    %v3434 = vld [vmem:[#allocation7] sm:$0xff]
    %v3435 = vld [vmem:[#allocation7 + $0x8] sm:$0xff]
    %v3436 = vld [vmem:[#allocation7 + $0x10] sm:$0xff]
    %v3437 = vld [vmem:[#allocation7 + $0x18] sm:$0xff]
    %v3438 = vld [vmem:[#allocation7 + $0x20] sm:$0xff]
    %v3439 = vld [vmem:[#allocation7 + $0x28] sm:$0xff]
    %v3440 = vld [vmem:[#allocation7 + $0x30] sm:$0xff]
    %v3441 = vld [vmem:[#allocation7 + $0x38] sm:$0xff]
    %v3442 = vld [vmem:[#allocation7 + $0x40] sm:$0xff]
    %v3443 = vld [vmem:[#allocation7 + $0x48] sm:$0xff]
    %v3444 = vld [vmem:[#allocation7 + $0x50] sm:$0xff]
    %v3445 = vld [vmem:[#allocation7 + $0x58] sm:$0xff]
    %v3446 = vld [vmem:[#allocation7 + $0x60] sm:$0xff]
    %v3447 = vld [vmem:[#allocation7 + $0x68] sm:$0xff]
    %v3448 = vld [vmem:[#allocation7 + $0x70] sm:$0xff]
    %v3449 = vld [vmem:[#allocation7 + $0x78] sm:$0xff]
    %v3450 = vld [vmem:[#allocation7 + $0x80] sm:$0xff]
    %v3451 = vld [vmem:[#allocation7 + $0x88] sm:$0xff]
    %v3452 = vld [vmem:[#allocation7 + $0x90] sm:$0xff]
    %v3453 = vld [vmem:[#allocation7 + $0x98] sm:$0xff]
    %v3454 = vld [vmem:[#allocation7 + $0xa0] sm:$0xff]
    %v3455 = vld [vmem:[#allocation7 + $0xa8] sm:$0xff]
    %v3456 = vld [vmem:[#allocation7 + $0xb0] sm:$0xff]
    %v3457 = vld [vmem:[#allocation7 + $0xb8] sm:$0xff]
    %v3458 = vld [vmem:[#allocation7 + $0xc0] sm:$0xff]
    %v3459 = vld [vmem:[#allocation7 + $0xc8] sm:$0xff]
    %v3460 = vld [vmem:[#allocation7 + $0xd0] sm:$0xff]
    %v3461 = vld [vmem:[#allocation7 + $0xd8] sm:$0xff]
    %v3462 = vld [vmem:[#allocation7 + $0xe0] sm:$0xff]
    %v3463 = vld [vmem:[#allocation7 + $0xe8] sm:$0xff]
    %v3464 = vld [vmem:[#allocation7 + $0xf0] sm:$0xff]
    %v3465 = vld [vmem:[#allocation7 + $0xf8] sm:$0xff]
    %v3466 = vld [vmem:[%s20] sm:$0xf]
    %v3468 = vlaneseq
    %v3469 = vshrl.u32 %v3468, 7
    %v3470 = vsub.s32 0, %v3469
    %v3471 = vrot.slane %v3466, %v3470
    %v3472 = vlaneseq
    %v3473 = vshrl.u32 %v3472, 7
    %v3474 = vsub.s32 1, %v3473
    %v3475 = vrot.slane %v3466, %v3474
    %v3476 = vlaneseq
    %v3477 = vshrl.u32 %v3476, 7
    %v3478 = vsub.s32 2, %v3477
    %v3479 = vrot.slane %v3466, %v3478
    %v3480 = vlaneseq
    %v3481 = vshrl.u32 %v3480, 7
    %v3482 = vsub.s32 3, %v3481
    %v3483 = vrot.slane %v3466, %v3482
    %v3520 = vunpack.c.l.b16 %v3434
    %v3521 = vunpack.c.h.b16 %v3434
    %v3522 = vunpack.c.l.b16 %v3435
    %v3523 = vunpack.c.h.b16 %v3435
    %v3524 = vunpack.c.l.b16 %v3436
    %v3525 = vunpack.c.h.b16 %v3436
    %v3526 = vunpack.c.l.b16 %v3437
    %v3527 = vunpack.c.h.b16 %v3437
    %v3528 = vunpack.c.l.b16 %v3438
    %v3529 = vunpack.c.h.b16 %v3438
    %v3530 = vunpack.c.l.b16 %v3439
    %v3531 = vunpack.c.h.b16 %v3439
    %v3532 = vunpack.c.l.b16 %v3440
    %v3533 = vunpack.c.h.b16 %v3440
    %v3534 = vunpack.c.l.b16 %v3441
    %v3535 = vunpack.c.h.b16 %v3441
    %v3536 = vunpack.c.l.b16 %v3442
    %v3537 = vunpack.c.h.b16 %v3442
    %v3538 = vunpack.c.l.b16 %v3443
    %v3539 = vunpack.c.h.b16 %v3443
    %v3540 = vunpack.c.l.b16 %v3444
    %v3541 = vunpack.c.h.b16 %v3444
    %v3542 = vunpack.c.l.b16 %v3445
    %v3543 = vunpack.c.h.b16 %v3445
    %v3544 = vunpack.c.l.b16 %v3446
    %v3545 = vunpack.c.h.b16 %v3446
    %v3546 = vunpack.c.l.b16 %v3447
    %v3547 = vunpack.c.h.b16 %v3447
    %v3548 = vunpack.c.l.b16 %v3448
    %v3549 = vunpack.c.h.b16 %v3448
    %v3550 = vunpack.c.l.b16 %v3449
    %v3551 = vunpack.c.h.b16 %v3449
    %v3552 = vunpack.c.l.b16 %v3450
    %v3553 = vunpack.c.h.b16 %v3450
    %v3554 = vunpack.c.l.b16 %v3451
    %v3555 = vunpack.c.h.b16 %v3451
    %v3556 = vunpack.c.l.b16 %v3452
    %v3557 = vunpack.c.h.b16 %v3452
    %v3558 = vunpack.c.l.b16 %v3453
    %v3559 = vunpack.c.h.b16 %v3453
    %v3560 = vunpack.c.l.b16 %v3454
    %v3561 = vunpack.c.h.b16 %v3454
    %v3562 = vunpack.c.l.b16 %v3455
    %v3563 = vunpack.c.h.b16 %v3455
    %v3564 = vunpack.c.l.b16 %v3456
    %v3565 = vunpack.c.h.b16 %v3456
    %v3566 = vunpack.c.l.b16 %v3457
    %v3567 = vunpack.c.h.b16 %v3457
    %v3568 = vunpack.c.l.b16 %v3458
    %v3569 = vunpack.c.h.b16 %v3458
    %v3570 = vunpack.c.l.b16 %v3459
    %v3571 = vunpack.c.h.b16 %v3459
    %v3572 = vunpack.c.l.b16 %v3460
    %v3573 = vunpack.c.h.b16 %v3460
    %v3574 = vunpack.c.l.b16 %v3461
    %v3575 = vunpack.c.h.b16 %v3461
    %v3576 = vunpack.c.l.b16 %v3462
    %v3577 = vunpack.c.h.b16 %v3462
    %v3578 = vunpack.c.l.b16 %v3463
    %v3579 = vunpack.c.h.b16 %v3463
    %v3580 = vunpack.c.l.b16 %v3464
    %v3581 = vunpack.c.h.b16 %v3464
    %v3582 = vunpack.c.l.b16 %v3465
    %v3583 = vunpack.c.h.b16 %v3465
    %v3584 = vpack.c.b16 %v3524, %v3520
    %v3585 = vpack.c.b16 %v3525, %v3521
    %v3586 = vpack.c.b16 %v3526, %v3522
    %v3587 = vpack.c.b16 %v3527, %v3523
    %v3588 = vpack.c.b16 %v3532, %v3528
    %v3589 = vpack.c.b16 %v3533, %v3529
    %v3590 = vpack.c.b16 %v3534, %v3530
    %v3591 = vpack.c.b16 %v3535, %v3531
    %v3592 = vpack.c.b16 %v3540, %v3536
    %v3593 = vpack.c.b16 %v3541, %v3537
    %v3594 = vpack.c.b16 %v3542, %v3538
    %v3595 = vpack.c.b16 %v3543, %v3539
    %v3596 = vpack.c.b16 %v3548, %v3544
    %v3597 = vpack.c.b16 %v3549, %v3545
    %v3598 = vpack.c.b16 %v3550, %v3546
    %v3599 = vpack.c.b16 %v3551, %v3547
    %v3600 = vpack.c.b16 %v3556, %v3552
    %v3601 = vpack.c.b16 %v3557, %v3553
    %v3602 = vpack.c.b16 %v3558, %v3554
    %v3603 = vpack.c.b16 %v3559, %v3555
    %v3604 = vpack.c.b16 %v3564, %v3560
    %v3605 = vpack.c.b16 %v3565, %v3561
    %v3606 = vpack.c.b16 %v3566, %v3562
    %v3607 = vpack.c.b16 %v3567, %v3563
    %v3608 = vpack.c.b16 %v3572, %v3568
    %v3609 = vpack.c.b16 %v3573, %v3569
    %v3610 = vpack.c.b16 %v3574, %v3570
    %v3611 = vpack.c.b16 %v3575, %v3571
    %v3612 = vpack.c.b16 %v3580, %v3576
    %v3613 = vpack.c.b16 %v3581, %v3577
    %v3614 = vpack.c.b16 %v3582, %v3578
    %v3615 = vpack.c.b16 %v3583, %v3579
    %3648 = vmatprep.subr.bf16.mxu0 %v3613
    %3649 = vmatpush1.bf16.msra.mxu0 %v3612
    %3650 = vmatprep.subr.bf16.mxu0 %v3609
    %3651 = vmatpush1.bf16.msra.mxu0 %v3608
    %3652 = vmatprep.subr.bf16.mxu0 %v3605
    %3653 = vmatpush1.bf16.msra.mxu0 %v3604
    %3654 = vmatprep.subr.bf16.mxu0 %v3601
    %3655 = vmatpush1.bf16.msra.mxu0 %v3600
    %3656 = vmatprep.subr.bf16.mxu0 %v3597
    %3657 = vmatpush1.bf16.msra.mxu0 %v3596
    %3658 = vmatprep.subr.bf16.mxu0 %v3593
    %3659 = vmatpush1.bf16.msra.mxu0 %v3592
    %3660 = vmatprep.subr.bf16.mxu0 %v3589
    %3661 = vmatpush1.bf16.msra.mxu0 %v3588
    %3662 = vmatprep.subr.bf16.mxu0 %v3585
    %3663 = vmatpush1.bf16.msra.mxu0 %v3584
    %3664 = vmatprep.subr.bf16.mxu0 0
    %3665 = vmatpush2.bf16.msra.mxu0 0
    %3666 = vmatprep.subr.bf16.mxu0 0
    %3667 = vmatpush2.bf16.msra.mxu0 0
    %3668 = vmatprep.subr.bf16.mxu0 0
    %3669 = vmatpush2.bf16.msra.mxu0 0
    %3670 = vmatprep.subr.bf16.mxu0 0
    %3671 = vmatpush2.bf16.msra.mxu0 0
    %3672 = vmatprep.subr.bf16.mxu0 0
    %3673 = vmatpush2.bf16.msra.mxu0 0
    %3674 = vmatprep.subr.bf16.mxu0 0
    %3675 = vmatpush2.bf16.msra.mxu0 0
    %3676 = vmatprep.subr.bf16.mxu0 0
    %3677 = vmatpush2.bf16.msra.mxu0 0
    %3678 = vmatprep.subr.bf16.mxu0 0
    %3679 = vmatpush2.bf16.msra.mxu0 0
    %3680 = vmatprep.mubr.bf16.mxu0 0
    %3681 = vmatmul.mubr.bf16.gmra.mxu0 %v3433
    %v3682 = vpop.f32.mrf.mxu0
    %v3683 = vadd.f32 %v3471, %v3682
    %v3684 = vpop.f32.mrf.mxu0
    %v3685 = vadd.f32 %v3475, %v3684
    %v3686 = vpop.f32.mrf.mxu0
    %v3687 = vadd.f32 %v3471, %v3686
    %v3688 = vpop.f32.mrf.mxu0
    %v3689 = vadd.f32 %v3475, %v3688
    %3690 = vdwg.mxu0
    %3691 = vmatprep.subr.bf16.mxu0 %v3615
    %3692 = vmatpush1.bf16.msra.mxu0 %v3614
    %3693 = vmatprep.subr.bf16.mxu0 %v3611
    %3694 = vmatpush1.bf16.msra.mxu0 %v3610
    %3695 = vmatprep.subr.bf16.mxu0 %v3607
    %3696 = vmatpush1.bf16.msra.mxu0 %v3606
    %3697 = vmatprep.subr.bf16.mxu0 %v3603
    %3698 = vmatpush1.bf16.msra.mxu0 %v3602
    %3699 = vmatprep.subr.bf16.mxu0 %v3599
    %3700 = vmatpush1.bf16.msra.mxu0 %v3598
    %3701 = vmatprep.subr.bf16.mxu0 %v3595
    %3702 = vmatpush1.bf16.msra.mxu0 %v3594
    %3703 = vmatprep.subr.bf16.mxu0 %v3591
    %3704 = vmatpush1.bf16.msra.mxu0 %v3590
    %3705 = vmatprep.subr.bf16.mxu0 %v3587
    %3706 = vmatpush1.bf16.msra.mxu0 %v3586
    %3707 = vmatprep.subr.bf16.mxu0 0
    %3708 = vmatpush2.bf16.msra.mxu0 0
    %3709 = vmatprep.subr.bf16.mxu0 0
    %3710 = vmatpush2.bf16.msra.mxu0 0
    %3711 = vmatprep.subr.bf16.mxu0 0
    %3712 = vmatpush2.bf16.msra.mxu0 0
    %3713 = vmatprep.subr.bf16.mxu0 0
    %3714 = vmatpush2.bf16.msra.mxu0 0
    %3715 = vmatprep.subr.bf16.mxu0 0
    %3716 = vmatpush2.bf16.msra.mxu0 0
    %3717 = vmatprep.subr.bf16.mxu0 0
    %3718 = vmatpush2.bf16.msra.mxu0 0
    %3719 = vmatprep.subr.bf16.mxu0 0
    %3720 = vmatpush2.bf16.msra.mxu0 0
    %3721 = vmatprep.subr.bf16.mxu0 0
    %3722 = vmatpush2.bf16.msra.mxu0 0
    %3723 = vmatprep.mubr.bf16.mxu0 0
    %3724 = vmatmul.mubr.bf16.gmra.mxu0 %v3433
    %v3725 = vpop.f32.mrf.mxu0
    %v3726 = vadd.f32 %v3479, %v3725
    %v3727 = vpop.f32.mrf.mxu0
    %v3728 = vadd.f32 %v3483, %v3727
    %v3729 = vpop.f32.mrf.mxu0
    %v3730 = vadd.f32 %v3479, %v3729
    %v3731 = vpop.f32.mrf.mxu0
    %v3732 = vadd.f32 %v3483, %v3731
    %3733 = vdwg.mxu0
    %v3734 = vmax.f32 %v3683, 0.0
    %v3735 = vmax.f32 %v3685, 0.0
    %v3736 = vmax.f32 %v3726, 0.0
    %v3737 = vmax.f32 %v3728, 0.0
    %v3738 = vmax.f32 %v3687, 0.0
    %v3739 = vmax.f32 %v3689, 0.0
    %v3740 = vmax.f32 %v3730, 0.0
    %v3741 = vmax.f32 %v3732, 0.0
    %v3742 = vpack.c.bf16 %v3738, %v3734
    %v3743 = vpack.c.bf16 %v3739, %v3735
    %v3744 = vpack.c.bf16 %v3740, %v3736
    %v3745 = vpack.c.bf16 %v3741, %v3737
    %v3746 = vld [vmem:[#allocation9] sm:$0xf]
    %v3747 = vld [vmem:[#allocation9 + $0x4] sm:$0xf]
    %v3748 = vld [vmem:[#allocation9 + $0x8] sm:$0xf]
    %v3749 = vld [vmem:[#allocation9 + $0xc] sm:$0xf]
    %v3750 = vld [vmem:[#allocation9 + $0x10] sm:$0xf]
    %v3751 = vld [vmem:[#allocation9 + $0x14] sm:$0xf]
    %v3752 = vld [vmem:[#allocation9 + $0x18] sm:$0xf]
    %v3753 = vld [vmem:[#allocation9 + $0x1c] sm:$0xf]
    %v3754 = vld [vmem:[#allocation9 + $0x20] sm:$0xf]
    %v3755 = vld [vmem:[#allocation9 + $0x24] sm:$0xf]
    %v3756 = vld [vmem:[#allocation9 + $0x28] sm:$0xf]
    %v3757 = vld [vmem:[#allocation9 + $0x2c] sm:$0xf]
    %v3758 = vld [vmem:[#allocation9 + $0x30] sm:$0xf]
    %v3759 = vld [vmem:[#allocation9 + $0x34] sm:$0xf]
    %v3760 = vld [vmem:[#allocation9 + $0x38] sm:$0xf]
    %v3761 = vld [vmem:[#allocation9 + $0x3c] sm:$0xf]
    %v3762 = vld [vmem:[#allocation9 + $0x40] sm:$0xf]
    %v3763 = vld [vmem:[#allocation9 + $0x44] sm:$0xf]
    %v3764 = vld [vmem:[#allocation9 + $0x48] sm:$0xf]
    %v3765 = vld [vmem:[#allocation9 + $0x4c] sm:$0xf]
    %v3766 = vld [vmem:[#allocation9 + $0x50] sm:$0xf]
    %v3767 = vld [vmem:[#allocation9 + $0x54] sm:$0xf]
    %v3768 = vld [vmem:[#allocation9 + $0x58] sm:$0xf]
    %v3769 = vld [vmem:[#allocation9 + $0x5c] sm:$0xf]
    %v3770 = vld [vmem:[#allocation9 + $0x60] sm:$0xf]
    %v3771 = vld [vmem:[#allocation9 + $0x64] sm:$0xf]
    %v3772 = vld [vmem:[#allocation9 + $0x68] sm:$0xf]
    %v3773 = vld [vmem:[#allocation9 + $0x6c] sm:$0xf]
    %v3774 = vld [vmem:[#allocation9 + $0x70] sm:$0xf]
    %v3775 = vld [vmem:[#allocation9 + $0x74] sm:$0xf]
    %v3776 = vld [vmem:[#allocation9 + $0x78] sm:$0xf]
    %v3777 = vld [vmem:[#allocation9 + $0x7c] sm:$0xf]
    %v3778 = vld [vmem:[#allocation9 + $0x80] sm:$0xf]
    %v3779 = vld [vmem:[#allocation9 + $0x84] sm:$0xf]
    %v3780 = vld [vmem:[#allocation9 + $0x88] sm:$0xf]
    %v3781 = vld [vmem:[#allocation9 + $0x8c] sm:$0xf]
    %v3782 = vld [vmem:[#allocation9 + $0x90] sm:$0xf]
    %v3783 = vld [vmem:[#allocation9 + $0x94] sm:$0xf]
    %v3784 = vld [vmem:[#allocation9 + $0x98] sm:$0xf]
    %v3785 = vld [vmem:[#allocation9 + $0x9c] sm:$0xf]
    %v3786 = vld [vmem:[#allocation9 + $0xa0] sm:$0xf]
    %v3787 = vld [vmem:[#allocation9 + $0xa4] sm:$0xf]
    %v3788 = vld [vmem:[#allocation9 + $0xa8] sm:$0xf]
    %v3789 = vld [vmem:[#allocation9 + $0xac] sm:$0xf]
    %v3790 = vld [vmem:[#allocation9 + $0xb0] sm:$0xf]
    %v3791 = vld [vmem:[#allocation9 + $0xb4] sm:$0xf]
    %v3792 = vld [vmem:[#allocation9 + $0xb8] sm:$0xf]
    %v3793 = vld [vmem:[#allocation9 + $0xbc] sm:$0xf]
    %v3794 = vld [vmem:[#allocation9 + $0xc0] sm:$0xf]
    %v3795 = vld [vmem:[#allocation9 + $0xc4] sm:$0xf]
    %v3796 = vld [vmem:[#allocation9 + $0xc8] sm:$0xf]
    %v3797 = vld [vmem:[#allocation9 + $0xcc] sm:$0xf]
    %v3798 = vld [vmem:[#allocation9 + $0xd0] sm:$0xf]
    %v3799 = vld [vmem:[#allocation9 + $0xd4] sm:$0xf]
    %v3800 = vld [vmem:[#allocation9 + $0xd8] sm:$0xf]
    %v3801 = vld [vmem:[#allocation9 + $0xdc] sm:$0xf]
    %v3802 = vld [vmem:[#allocation9 + $0xe0] sm:$0xf]
    %v3803 = vld [vmem:[#allocation9 + $0xe4] sm:$0xf]
    %v3804 = vld [vmem:[#allocation9 + $0xe8] sm:$0xf]
    %v3805 = vld [vmem:[#allocation9 + $0xec] sm:$0xf]
    %v3806 = vld [vmem:[#allocation9 + $0xf0] sm:$0xf]
    %v3807 = vld [vmem:[#allocation9 + $0xf4] sm:$0xf]
    %v3808 = vld [vmem:[#allocation9 + $0xf8] sm:$0xf]
    %v3809 = vld [vmem:[#allocation9 + $0xfc] sm:$0xf]
    %v3810 = vld [vmem:[%s22] sm:$0x1]
    %v3812 = vlaneseq
    %v3813 = vshrl.u32 %v3812, 7
    %v3814 = vsub.s32 0, %v3813
    %v3815 = vrot.slane %v3810, %v3814
    %v3881 = vunpack.c.l.b16 %v3746
    %v3882 = vunpack.c.l.b16 %v3747
    %v3883 = vunpack.c.l.b16 %v3748
    %v3884 = vunpack.c.l.b16 %v3749
    %v3885 = vunpack.c.l.b16 %v3750
    %v3886 = vunpack.c.l.b16 %v3751
    %v3887 = vunpack.c.l.b16 %v3752
    %v3888 = vunpack.c.l.b16 %v3753
    %v3889 = vunpack.c.l.b16 %v3754
    %v3890 = vunpack.c.l.b16 %v3755
    %v3891 = vunpack.c.l.b16 %v3756
    %v3892 = vunpack.c.l.b16 %v3757
    %v3893 = vunpack.c.l.b16 %v3758
    %v3894 = vunpack.c.l.b16 %v3759
    %v3895 = vunpack.c.l.b16 %v3760
    %v3896 = vunpack.c.l.b16 %v3761
    %v3897 = vunpack.c.l.b16 %v3762
    %v3898 = vunpack.c.l.b16 %v3763
    %v3899 = vunpack.c.l.b16 %v3764
    %v3900 = vunpack.c.l.b16 %v3765
    %v3901 = vunpack.c.l.b16 %v3766
    %v3902 = vunpack.c.l.b16 %v3767
    %v3903 = vunpack.c.l.b16 %v3768
    %v3904 = vunpack.c.l.b16 %v3769
    %v3905 = vunpack.c.l.b16 %v3770
    %v3906 = vunpack.c.l.b16 %v3771
    %v3907 = vunpack.c.l.b16 %v3772
    %v3908 = vunpack.c.l.b16 %v3773
    %v3909 = vunpack.c.l.b16 %v3774
    %v3910 = vunpack.c.l.b16 %v3775
    %v3911 = vunpack.c.l.b16 %v3776
    %v3912 = vunpack.c.l.b16 %v3777
    %v3913 = vunpack.c.l.b16 %v3778
    %v3914 = vunpack.c.l.b16 %v3779
    %v3915 = vunpack.c.l.b16 %v3780
    %v3916 = vunpack.c.l.b16 %v3781
    %v3917 = vunpack.c.l.b16 %v3782
    %v3918 = vunpack.c.l.b16 %v3783
    %v3919 = vunpack.c.l.b16 %v3784
    %v3920 = vunpack.c.l.b16 %v3785
    %v3921 = vunpack.c.l.b16 %v3786
    %v3922 = vunpack.c.l.b16 %v3787
    %v3923 = vunpack.c.l.b16 %v3788
    %v3924 = vunpack.c.l.b16 %v3789
    %v3925 = vunpack.c.l.b16 %v3790
    %v3926 = vunpack.c.l.b16 %v3791
    %v3927 = vunpack.c.l.b16 %v3792
    %v3928 = vunpack.c.l.b16 %v3793
    %v3929 = vunpack.c.l.b16 %v3794
    %v3930 = vunpack.c.l.b16 %v3795
    %v3931 = vunpack.c.l.b16 %v3796
    %v3932 = vunpack.c.l.b16 %v3797
    %v3933 = vunpack.c.l.b16 %v3798
    %v3934 = vunpack.c.l.b16 %v3799
    %v3935 = vunpack.c.l.b16 %v3800
    %v3936 = vunpack.c.l.b16 %v3801
    %v3937 = vunpack.c.l.b16 %v3802
    %v3938 = vunpack.c.l.b16 %v3803
    %v3939 = vunpack.c.l.b16 %v3804
    %v3940 = vunpack.c.l.b16 %v3805
    %v3941 = vunpack.c.l.b16 %v3806
    %v3942 = vunpack.c.l.b16 %v3807
    %v3943 = vunpack.c.l.b16 %v3808
    %v3944 = vunpack.c.l.b16 %v3809
    %v3945 = vpack.c.b16 %v3882, %v3881
    %v3946 = vpack.c.b16 %v3884, %v3883
    %v3947 = vpack.c.b16 %v3886, %v3885
    %v3948 = vpack.c.b16 %v3888, %v3887
    %v3949 = vpack.c.b16 %v3890, %v3889
    %v3950 = vpack.c.b16 %v3892, %v3891
    %v3951 = vpack.c.b16 %v3894, %v3893
    %v3952 = vpack.c.b16 %v3896, %v3895
    %v3953 = vpack.c.b16 %v3898, %v3897
    %v3954 = vpack.c.b16 %v3900, %v3899
    %v3955 = vpack.c.b16 %v3902, %v3901
    %v3956 = vpack.c.b16 %v3904, %v3903
    %v3957 = vpack.c.b16 %v3906, %v3905
    %v3958 = vpack.c.b16 %v3908, %v3907
    %v3959 = vpack.c.b16 %v3910, %v3909
    %v3960 = vpack.c.b16 %v3912, %v3911
    %v3961 = vpack.c.b16 %v3914, %v3913
    %v3962 = vpack.c.b16 %v3916, %v3915
    %v3963 = vpack.c.b16 %v3918, %v3917
    %v3964 = vpack.c.b16 %v3920, %v3919
    %v3965 = vpack.c.b16 %v3922, %v3921
    %v3966 = vpack.c.b16 %v3924, %v3923
    %v3967 = vpack.c.b16 %v3926, %v3925
    %v3968 = vpack.c.b16 %v3928, %v3927
    %v3969 = vpack.c.b16 %v3930, %v3929
    %v3970 = vpack.c.b16 %v3932, %v3931
    %v3971 = vpack.c.b16 %v3934, %v3933
    %v3972 = vpack.c.b16 %v3936, %v3935
    %v3973 = vpack.c.b16 %v3938, %v3937
    %v3974 = vpack.c.b16 %v3940, %v3939
    %v3975 = vpack.c.b16 %v3942, %v3941
    %v3976 = vpack.c.b16 %v3944, %v3943
    %4009 = vmatprep.subr.bf16.mxu0 0
    %4010 = vmatpush1.bf16.msra.mxu0 %v3952
    %4011 = vmatprep.subr.bf16.mxu0 0
    %4012 = vmatpush1.bf16.msra.mxu0 %v3951
    %4013 = vmatprep.subr.bf16.mxu0 0
    %4014 = vmatpush1.bf16.msra.mxu0 %v3950
    %4015 = vmatprep.subr.bf16.mxu0 0
    %4016 = vmatpush1.bf16.msra.mxu0 %v3949
    %4017 = vmatprep.subr.bf16.mxu0 0
    %4018 = vmatpush1.bf16.msra.mxu0 %v3948
    %4019 = vmatprep.subr.bf16.mxu0 0
    %4020 = vmatpush1.bf16.msra.mxu0 %v3947
    %4021 = vmatprep.subr.bf16.mxu0 0
    %4022 = vmatpush1.bf16.msra.mxu0 %v3946
    %4023 = vmatprep.subr.bf16.mxu0 0
    %4024 = vmatpush1.bf16.msra.mxu0 %v3945
    %4025 = vmatprep.subr.bf16.mxu0 0
    %4026 = vmatpush2.bf16.msra.mxu0 %v3960
    %4027 = vmatprep.subr.bf16.mxu0 0
    %4028 = vmatpush2.bf16.msra.mxu0 %v3959
    %4029 = vmatprep.subr.bf16.mxu0 0
    %4030 = vmatpush2.bf16.msra.mxu0 %v3958
    %4031 = vmatprep.subr.bf16.mxu0 0
    %4032 = vmatpush2.bf16.msra.mxu0 %v3957
    %4033 = vmatprep.subr.bf16.mxu0 0
    %4034 = vmatpush2.bf16.msra.mxu0 %v3956
    %4035 = vmatprep.subr.bf16.mxu0 0
    %4036 = vmatpush2.bf16.msra.mxu0 %v3955
    %4037 = vmatprep.subr.bf16.mxu0 0
    %4038 = vmatpush2.bf16.msra.mxu0 %v3954
    %4039 = vmatprep.subr.bf16.mxu0 0
    %4040 = vmatpush2.bf16.msra.mxu0 %v3953
    %4041 = vmatprep.mubr.bf16.mxu0 %v3743
    %4042 = vmatmul.mubr.bf16.gmra.mxu0 %v3742
    %v4043 = vpop.f32.mrf.mxu0
    %v4044 = vadd.f32 %v3815, %v4043
    %v4045 = vpop.f32.mrf.mxu0
    %v4046 = vpop.f32.mrf.mxu0
    %v4047 = vadd.f32 %v3815, %v4046
    %v4048 = vpop.f32.mrf.mxu0
    %4049 = vdwg.mxu0
    %4050 = vmatprep.subr.bf16.mxu0 0
    %4051 = vmatpush1.bf16.msra.mxu0 %v3968
    %4052 = vmatprep.subr.bf16.mxu0 0
    %4053 = vmatpush1.bf16.msra.mxu0 %v3967
    %4054 = vmatprep.subr.bf16.mxu0 0
    %4055 = vmatpush1.bf16.msra.mxu0 %v3966
    %4056 = vmatprep.subr.bf16.mxu0 0
    %4057 = vmatpush1.bf16.msra.mxu0 %v3965
    %4058 = vmatprep.subr.bf16.mxu0 0
    %4059 = vmatpush1.bf16.msra.mxu0 %v3964
    %4060 = vmatprep.subr.bf16.mxu0 0
    %4061 = vmatpush1.bf16.msra.mxu0 %v3963
    %4062 = vmatprep.subr.bf16.mxu0 0
    %4063 = vmatpush1.bf16.msra.mxu0 %v3962
    %4064 = vmatprep.subr.bf16.mxu0 0
    %4065 = vmatpush1.bf16.msra.mxu0 %v3961
    %4066 = vmatprep.subr.bf16.mxu0 0
    %4067 = vmatpush2.bf16.msra.mxu0 %v3976
    %4068 = vmatprep.subr.bf16.mxu0 0
    %4069 = vmatpush2.bf16.msra.mxu0 %v3975
    %4070 = vmatprep.subr.bf16.mxu0 0
    %4071 = vmatpush2.bf16.msra.mxu0 %v3974
    %4072 = vmatprep.subr.bf16.mxu0 0
    %4073 = vmatpush2.bf16.msra.mxu0 %v3973
    %4074 = vmatprep.subr.bf16.mxu0 0
    %4075 = vmatpush2.bf16.msra.mxu0 %v3972
    %4076 = vmatprep.subr.bf16.mxu0 0
    %4077 = vmatpush2.bf16.msra.mxu0 %v3971
    %4078 = vmatprep.subr.bf16.mxu0 0
    %4079 = vmatpush2.bf16.msra.mxu0 %v3970
    %4080 = vmatprep.subr.bf16.mxu0 0
    %4081 = vmatpush2.bf16.msra.mxu0 %v3969
    %4082 = vmatprep.mubr.bf16.mxu0 %v3745
    %4083 = vmatmul.mubr.bf16.gmra.mxu0 %v3744
    %v4084 = vpop.f32.mrf.mxu0
    %v4085 = vadd.f32 %v4044, %v4084
    %v4086 = vpop.f32.mrf.mxu0
    %v4087 = vpop.f32.mrf.mxu0
    %v4088 = vadd.f32 %v4047, %v4087
    %v4089 = vpop.f32.mrf.mxu0
    %4090 = vdwg.mxu0
    %v4091 = vld [vmem:[%s23] sm:$0x1]
    %v4092 = vld [vmem:[%s24] sm:$0x1]
    %4093 = vadd.xlane.f32.xlu0 %v4085
    %v4094 = vpop.xlane.xlu0 %4093
    %4095 = vadd.xlane.f32.xlu0 %v4088
    %v4096 = vpop.xlane.xlu0 %4095
    %v4097 = vmul.f32 %v4094, %v293
    %v4098 = vmul.f32 %v4096, %v293
    %v4099 = vsub.f32 %v4085, %v4097
    %v4100 = vsub.f32 %v4088, %v4098
    %v4101 = vmul.f32 %v4099, %v4099
    %v4102 = vmul.f32 %v4100, %v4100
    %4103 = vadd.xlane.f32.xlu0 %v4101
    %v4104 = vpop.xlane.xlu0 %4103
    %4105 = vadd.xlane.f32.xlu0 %v4102
    %v4106 = vpop.xlane.xlu0 %4105
    %v4107 = vmul.f32 %v4104, %v293
    %v4108 = vmul.f32 %v4106, %v293
    %v4109 = vadd.f32 %v4107, 1e-05
    %v4110 = vadd.f32 %v4108, 1e-05
    %v4111 = vrsqrt.pop %v4109
    %v4112 = vrsqrt.pop %v4110
    %v4113 = vmul.f32 %v4099, %v4111
    %v4114 = vmul.f32 %v4100, %v4112
    %v4116 = vlaneseq
    %v4117 = vshrl.u32 %v4116, 7
    %v4118 = vsub.s32 0, %v4117
    %v4119 = vrot.slane %v4091, %v4118
    %v4121 = vmul.f32 %v4113, %v4119
    %v4122 = vmul.f32 %v4114, %v4119
    %v4124 = vlaneseq
    %v4125 = vshrl.u32 %v4124, 7
    %v4126 = vsub.s32 0, %v4125
    %v4127 = vrot.slane %v4092, %v4126
    %v4129 = vadd.f32 %v4121, %v4127
    %v4130 = vadd.f32 %v4122, %v4127
    %4131 = vst [vmem:[%s25] sm:$0xff] %v4129
    %4132 = vst [vmem:[%s25 + $0x8] sm:$0xff] %v4130
    // Predicated region
    $region122: #{dinov2_forward.1} parent=1 // pred_check
      _
    $region123: #{dinov2_forward.1} parent=1 // pred_check_branch
      %4134 = sbr.rel (0) target = $region125
    $region124: #{dinov2_forward.1} parent=1 // pred_region
      _
    $region125: #{dinov2_forward.1} parent=1 // pred_fallthru
      _
    // Predicated region
    $region126: #{dinov2_forward.1} parent=1 // pred_check
      _
    $region127: #{dinov2_forward.1} parent=1 // pred_check_branch
      %4136 = sbr.rel (0) target = $region129
    $region128: #{dinov2_forward.1} parent=1 // pred_region
      _
    $region129: #{dinov2_forward.1} parent=1 // pred_fallthru
      _
    %4137 = vsyncpa [#allocation3], 1
    %4138 = vsyncpa [#allocation5], 1
    %4139 = vsyncpa [#allocation8], 1

</llo_original>
